<compile_context>
chip_gen: v6e
topology: v6e:2x2x1
jax: 0.10.0
libtpu: 0.0.40
codegen_flags: <defaults>
</compile_context>

<pallas_src>
import math
import functools

import jax
import jax.numpy as jnp
from jax import lax
from jax.experimental import pallas as pl
from jax.experimental.pallas import tpu as pltpu

# ----------------------------- config (small) -------------------------------
B = 2              # batch
C = 4              # audio channels
L = 256            # sequence length (HALF = 128 keeps every slice lane-aligned)
HALF = L // 2
R = B * C          # flattened rows (sublane axis inside the kernel)
HID = 256          # hidden width of the synthetic denoiser

NUM_SPANS = 3      # SpanBySpanComposer(num_spans=3)
NUM_STEPS = 3      # DiffusionInpainter(num_steps=3)
NUM_RESAMPLES = 2  # DiffusionInpainter(num_resamples=2)

SIGMA_DATA = 0.5   # KDiffusion sigma_data
SIGMA_MIN = 1e-3   # KarrasSchedule
SIGMA_MAX = 3.0
KARRAS_RHO = 7.0
ADPM2_RHO = 1.0    # ADPM2Sampler rho


# --------------------- static schedule / preconditioning --------------------
def _karras_sigmas(num_steps, sigma_min, sigma_max, rho):
    rho_inv = 1.0 / rho
    sig = []
    for i in range(num_steps):
        t = i / (num_steps - 1)
        s = (sigma_max ** rho_inv + t * (sigma_min ** rho_inv - sigma_max ** rho_inv)) ** rho
        sig.append(float(s))
    # F.pad(sigmas, (0, 1), value=0.0); the appended 0 is never consumed by the
    # inpaint loop (range(num_steps - 1)) -- this matches the reference exactly.
    sig.append(0.0)
    return sig


SIGMAS = _karras_sigmas(NUM_STEPS, SIGMA_MIN, SIGMA_MAX, KARRAS_RHO)


def _adpm2_sigmas(sigma, sigma_next):
    sigma_up = math.sqrt(sigma_next ** 2 * (sigma ** 2 - sigma_next ** 2) / (sigma ** 2))
    sigma_down = math.sqrt(max(sigma_next ** 2 - sigma_up ** 2, 0.0))
    sigma_mid = ((sigma ** (1.0 / ADPM2_RHO)
                  + sigma_down ** (1.0 / ADPM2_RHO)) / 2.0) ** ADPM2_RHO
    return sigma_up, sigma_down, sigma_mid


def _kdiff_consts(sigma):
    s2 = sigma * sigma + SIGMA_DATA * SIGMA_DATA
    c_skip = (SIGMA_DATA * SIGMA_DATA) / s2
    c_out = sigma * SIGMA_DATA / math.sqrt(s2)
    c_in = 1.0 / math.sqrt(s2)
    c_noise = math.log(sigma) * 0.25
    return c_skip, c_out, c_in, c_noise


# Distinct sigmas at which the denoiser is evaluated (4 values here).  Their
# KDiffusion scale factors are static Python floats and their c_noise * emb
# bias rows are precomputed host side (JAX does not CSE broadcast_in_dim, so
# doing scalar*emb inside every net() call would put 48 broadcasts on the
# serial chain).
_DENOISE_SIGMAS = []
for _i in range(NUM_STEPS - 1):
    _, _, _mid = _adpm2_sigmas(SIGMAS[_i], SIGMAS[_i + 1])
    for _s in (SIGMAS[_i], _mid):
        if _s not in _DENOISE_SIGMAS:
            _DENOISE_SIGMAS.append(_s)
SIGMA_TO_IDX = {s: j for j, s in enumerate(_DENOISE_SIGMAS)}
KDIFF_SCALES = [_kdiff_consts(s)[:3] for s in _DENOISE_SIGMAS]   # (c_skip, c_out, c_in)
C_NOISE = [_kdiff_consts(s)[3] for s in _DENOISE_SIGMAS]
N_SIG = len(_DENOISE_SIGMAS)


def _noise_count():
    # exact number of randn_like draws the ADPM2 inpaint loop consumes
    n = 0
    for _ in range(NUM_SPANS):
        n += 1                                   # x = sigmas[0] * randn
        for _ in range(NUM_STEPS - 1):
            n += 1                               # source_noisy
            for r in range(NUM_RESAMPLES):
                n += 1                           # step noise (sigma_up)
                if r < NUM_RESAMPLES - 1:
                    n += 1                       # renoise between resamples
    return n


N_NOISE = _noise_count()


# ------------------------------ Pallas kernel --------------------------------
def composer_kernel(start_ref, noise_ref, w1_ref, w2_ref, bias_ref, out_ref):
    """Full SpanBySpanComposer forward for the whole (flattened) batch."""
    lane = lax.broadcasted_iota(jnp.int32, (R, L), 1)
    keep_mask = lane < HALF                      # sequential_mask: True on first half
    zeros_half = jnp.zeros((R, HALF), jnp.float32)

    counter = [0]

    def next_noise():
        n = noise_ref[counter[0]]
        counter[0] += 1
        return n

    # TODO(synk): the real denoiser is a pretrained UNet1d; replaced by a small
    # sigma-conditioned dense net (length-mixing MLP) so the composer /
    # inpainting math stays exact while the network is a stand-in.
    # TODO(synk): a weight-stationary MXU scheme (pltpu.matmul_push_rhs /
    # matmul_acc_lhs / matmul_pop holding w1/w2 resident) would cut weight
    # re-streaming further on v6e/v7x; kept on jnp.dot for portability.
    def net(x_f32, sig_idx):
        # bf16 operands, f32 accumulation; weights sourced from VMEM refs at the
        # dot site (no kernel-long 32+ vreg live ranges).
        xb = x_f32.astype(jnp.bfloat16)
        h = jnp.dot(xb, w1_ref[...], preferred_element_type=jnp.float32)
        h = jnp.tanh(h + bias_ref[pl.ds(sig_idx, 1), :])
        return jnp.dot(h.astype(jnp.bfloat16), w2_ref[...],
                       preferred_element_type=jnp.float32)

    def denoise(x, sigma):
        # KDiffusion preconditioning; all scale factors are static Python floats.
        j = SIGMA_TO_IDX[sigma]
        c_skip, c_out, c_in = KDIFF_SCALES[j]
        x_pred = net(c_in * x, j)
        # TODO(synk): clamp mirrors KDiffusion's clip(dynamic_threshold=0.0)
        # default; drop it if the reference configuration disables clamping.
        return jnp.clip(c_skip * x + c_out * x_pred, -1.0, 1.0)

    def adpm2_step(x, sigma, sigma_next, noise):
        # ADPM2Sampler.step -- sigma math is static host scalars.
        sigma_up, sigma_down, sigma_mid = _adpm2_sigmas(sigma, sigma_next)
        d = (x - denoise(x, sigma)) * (1.0 / sigma)
        x_mid = x + d * (sigma_mid - sigma)
        d_mid = (x_mid - denoise(x_mid, sigma_mid)) * (1.0 / sigma_mid)
        x_new = x + d_mid * (sigma_down - sigma)
        return x_new + noise * sigma_up

    # initial inpaint buffer, built in-kernel: [start second half | zeros]
    start2d = start_ref[...]
    src = jnp.concatenate([start2d[:, HALF:], zeros_half], axis=1)   # (R, L), vreg-resident

    for span_i in range(NUM_SPANS):
        # ------------------ ADPM2Sampler.inpaint ------------------
        x = SIGMAS[0] * next_noise()
        for i in range(NUM_STEPS - 1):
            source_noisy = src + SIGMAS[i] * next_noise()
            for r in range(NUM_RESAMPLES):
                # x = source_noisy * mask + x * ~mask
                x = jnp.where(keep_mask, source_noisy, x)
                x = adpm2_step(x, SIGMAS[i], SIGMAS[i + 1], next_noise())
                if r < NUM_RESAMPLES - 1:
                    renoise = math.sqrt(SIGMAS[i] ** 2 - SIGMAS[i + 1] ** 2)
                    x = x + renoise * next_noise()
        # span = x * ~mask + source * mask  ->  span[:, half:] == x[:, half:]
        second_half = x[:, HALF:]                                    # (R, HALF)
        out_ref[:, span_i * HALF:(span_i + 1) * HALF] = second_half
        # next inpaint buffer: [second_half | zeros], kept in registers
        src = jnp.concatenate([second_half, zeros_half], axis=1)


# ------------------------------ host wrapper ---------------------------------
@functools.partial(jax.jit, static_argnames=("keep_start",))
def span_by_span_composer(start, noise, w1_bf16, w2_bf16, bias_tbl, keep_start=False):
    b, c, l = start.shape
    half = l // 2
    vmem = pl.BlockSpec(memory_space=pltpu.MemorySpace.VMEM)

    out2d = pl.pallas_call(
        composer_kernel,
        out_shape=jax.ShapeDtypeStruct((b * c, NUM_SPANS * half), jnp.float32),
        in_specs=[vmem] * 5,
        out_specs=vmem,
    )(start.reshape(b * c, l).astype(jnp.float32),
      noise, w1_bf16, w2_bf16, bias_tbl)

    spans = out2d.reshape(b, c, NUM_SPANS * half)
    if keep_start:
        spans = jnp.concatenate(
            [start[..., :half], start[..., half:], spans], axis=-1)
    return spans


# --------------------------- pure-JAX reference -------------------------------
@jax.jit
def _reference(start, noise, w1_bf16, w2_bf16, bias_tbl):
    """Same math as the kernel (incl. bf16 casts), written in plain jnp."""
    start2d = start.reshape(R, L).astype(jnp.float32)
    keep_mask = jnp.broadcast_to(jnp.arange(L)[None, :] < HALF, (R, L))
    zeros_half = jnp.zeros((R, HALF), jnp.float32)

    cnt = [0]

    def nxt():
        v = noise[cnt[0]]
        cnt[0] += 1
        return v

    def net(x, j):
        h = jnp.dot(x.astype(jnp.bfloat16), w1_bf16, preferred_element_type=jnp.float32)
        h = jnp.tanh(h + bias_tbl[j:j + 1, :])
        return jnp.dot(h.astype(jnp.bfloat16), w2_bf16, preferred_element_type=jnp.float32)

    def denoise(x, sigma):
        j = SIGMA_TO_IDX[sigma]
        c_skip, c_out, c_in = KDIFF_SCALES[j]
        return jnp.clip(c_skip * x + c_out * net(c_in * x, j), -1.0, 1.0)

    def step(x, sigma, sigma_next, nz):
        su, sd, sm = _adpm2_sigmas(sigma, sigma_next)
        d = (x - denoise(x, sigma)) * (1.0 / sigma)
        x_mid = x + d * (sm - sigma)
        d_mid = (x_mid - denoise(x_mid, sm)) * (1.0 / sm)
        return x + d_mid * (sd - sigma) + nz * su

    src = jnp.concatenate([start2d[:, HALF:], zeros_half], axis=1)
    outs = []
    for _ in range(NUM_SPANS):
        x = SIGMAS[0] * nxt()
        for i in range(NUM_STEPS - 1):
            source_noisy = src + SIGMAS[i] * nxt()
            for r in range(NUM_RESAMPLES):
                x = jnp.where(keep_mask, source_noisy, x)
                x = step(x, SIGMAS[i], SIGMAS[i + 1], nxt())
                if r < NUM_RESAMPLES - 1:
                    x = x + math.sqrt(SIGMAS[i] ** 2 - SIGMAS[i + 1] ** 2) * nxt()
        sh = x[:, HALF:]
        outs.append(sh)
        src = jnp.concatenate([sh, zeros_half], axis=1)
    return jnp.concatenate(outs, axis=1).reshape(B, C, NUM_SPANS * HALF)


# ----------------------------------- main ------------------------------------
if __name__ == "__main__":
    key = jax.random.PRNGKey(0)
    k_start, k_noise, k_w1, k_w2, k_emb = jax.random.split(key, 5)

    start = jax.random.normal(k_start, (B, C, L), dtype=jnp.float32)
    # torch.randn_like draws inside the sampler, precomputed for determinism
    noise = jax.random.normal(k_noise, (N_NOISE, R, L), dtype=jnp.float32)
    # synthetic denoiser parameters (weights shipped as bf16 for the MXU)
    w1 = (jax.random.normal(k_w1, (L, HID), dtype=jnp.float32) * 0.05).astype(jnp.bfloat16)
    w2 = (jax.random.normal(k_w2, (HID, L), dtype=jnp.float32) * 0.05).astype(jnp.bfloat16)
    emb = jax.random.normal(k_emb, (1, HID), dtype=jnp.float32) * 0.5
    # precomputed sigma-conditioning bias rows: c_noise(sigma_j) * emb
    bias_tbl = jnp.asarray(C_NOISE, jnp.float32)[:, None] * emb      # (N_SIG, HID)

    out = span_by_span_composer(start, noise, w1, w2, bias_tbl, keep_start=False)
    out = jax.block_until_ready(out)

    assert out.shape == (B, C, NUM_SPANS * HALF), out.shape
    assert out.dtype == jnp.float32
    assert bool(jnp.all(jnp.isfinite(out)))

    ref = jax.block_until_ready(_reference(start, noise, w1, w2, bias_tbl))
    max_err = float(jnp.max(jnp.abs(out - ref)))
    assert max_err < 5e-2, f"max |kernel - reference| = {max_err}"

    print("KERNEL_OK")
</pallas_src>

<mosaic_0001>
module attributes {stable_mosaic.version = 11 : i64} {
  func.func @composer_kernel(%arg0: memref<8x256xf32, #tpu.memory_space<vmem>>, %arg1: memref<27x8x256xf32, #tpu.memory_space<vmem>>, %arg2: memref<256x256xbf16, #tpu.memory_space<vmem>>, %arg3: memref<256x256xbf16, #tpu.memory_space<vmem>>, %arg4: memref<4x256xf32, #tpu.memory_space<vmem>>, %arg5: memref<8x384xf32, #tpu.memory_space<vmem>>) attributes {dimension_semantics = [], scalar_prefetch = 0 : i64, scratch_operands = 0 : i64, tpu.core_type = #tpu.core_type<tc>} {
    %0 = tpu.iota {dimensions = array<i32: 1>} : vector<8x256xi32>
    %c128_i32 = arith.constant 128 : i32
    %1 = vector.broadcast %c128_i32 : i32 to vector<8x256xi32>
    %2 = arith.cmpi slt, %0, %1 : vector<8x256xi32>
    %cst = arith.constant 0.000000e+00 : f32
    %3 = vector.broadcast %cst : f32 to vector<8x128xf32>
    %c0 = arith.constant 0 : index
    %c0_0 = arith.constant 0 : index
    %4 = vector.load %arg0[%c0, %c0_0] : memref<8x256xf32, #tpu.memory_space<vmem>>, vector<8x256xf32>
    %5 = vector.extract_strided_slice %4 {offsets = [0, 128], sizes = [8, 128], strides = [1, 1]} : vector<8x256xf32> to vector<8x128xf32>
    %6 = tpu.concatenate %5, %3 in 1 : vector<8x128xf32>, vector<8x128xf32> -> vector<8x256xf32>
    %c0_1 = arith.constant 0 : index
    %c0_2 = arith.constant 0 : index
    %c0_3 = arith.constant 0 : index
    %7 = vector.load %arg1[%c0_1, %c0_2, %c0_3] : memref<27x8x256xf32, #tpu.memory_space<vmem>>, vector<1x8x256xf32>
    %8 = vector.shape_cast %7 : vector<1x8x256xf32> to vector<8x256xf32>
    %cst_4 = arith.constant 3.000000e+00 : f32
    %9 = vector.broadcast %cst_4 : f32 to vector<8x256xf32>
    %10 = arith.mulf %9, %8 : vector<8x256xf32>
    %c1 = arith.constant 1 : index
    %c0_5 = arith.constant 0 : index
    %c0_6 = arith.constant 0 : index
    %11 = vector.load %arg1[%c1, %c0_5, %c0_6] : memref<27x8x256xf32, #tpu.memory_space<vmem>>, vector<1x8x256xf32>
    %12 = vector.shape_cast %11 : vector<1x8x256xf32> to vector<8x256xf32>
    %cst_7 = arith.constant 3.000000e+00 : f32
    %13 = vector.broadcast %cst_7 : f32 to vector<8x256xf32>
    %14 = arith.mulf %13, %12 : vector<8x256xf32>
    %15 = arith.addf %6, %14 : vector<8x256xf32>
    %16 = arith.select %2, %15, %10 : vector<8x256xi1>, vector<8x256xf32>
    %c2 = arith.constant 2 : index
    %c0_8 = arith.constant 0 : index
    %c0_9 = arith.constant 0 : index
    %17 = vector.load %arg1[%c2, %c0_8, %c0_9] : memref<27x8x256xf32, #tpu.memory_space<vmem>>, vector<1x8x256xf32>
    %18 = vector.shape_cast %17 : vector<1x8x256xf32> to vector<8x256xf32>
    %cst_10 = arith.constant 0.328797966 : f32
    %19 = vector.broadcast %cst_10 : f32 to vector<8x256xf32>
    %20 = arith.mulf %19, %16 : vector<8x256xf32>
    %21 = arith.truncf %20 : vector<8x256xf32> to vector<8x256xbf16>
    %c0_11 = arith.constant 0 : index
    %c0_12 = arith.constant 0 : index
    %22 = vector.load %arg2[%c0_11, %c0_12] : memref<256x256xbf16, #tpu.memory_space<vmem>>, vector<256x256xbf16>
    %cst_13 = arith.constant dense<0.000000e+00> : vector<8x256xf32>
    %23 = tpu.matmul %21, %22, %cst_13 {dimension_numbers = #tpu.dot_dimension_numbers<[1], [0], [0], [1], [0, 0, 1, 1], [], []>} : vector<8x256xbf16>, vector<256x256xbf16>, vector<8x256xf32> -> vector<8x256xf32>
    %c0_14 = arith.constant 0 : index
    %c0_15 = arith.constant 0 : index
    %24 = vector.load %arg4[%c0_14, %c0_15] : memref<4x256xf32, #tpu.memory_space<vmem>>, vector<1x256xf32>
    %25 = vector.broadcast %24 : vector<1x256xf32> to vector<8x256xf32>
    %26 = arith.addf %23, %25 : vector<8x256xf32>
    %27 = math.tanh %26 : vector<8x256xf32>
    %28 = arith.truncf %27 : vector<8x256xf32> to vector<8x256xbf16>
    %c0_16 = arith.constant 0 : index
    %c0_17 = arith.constant 0 : index
    %29 = vector.load %arg3[%c0_16, %c0_17] : memref<256x256xbf16, #tpu.memory_space<vmem>>, vector<256x256xbf16>
    %cst_18 = arith.constant dense<0.000000e+00> : vector<8x256xf32>
    %30 = tpu.matmul %28, %29, %cst_18 {dimension_numbers = #tpu.dot_dimension_numbers<[1], [0], [0], [1], [0, 0, 1, 1], [], []>} : vector<8x256xbf16>, vector<256x256xbf16>, vector<8x256xf32> -> vector<8x256xf32>
    %cst_19 = arith.constant 0.0270270277 : f32
    %31 = vector.broadcast %cst_19 : f32 to vector<8x256xf32>
    %32 = arith.mulf %31, %16 : vector<8x256xf32>
    %cst_20 = arith.constant 0.493196964 : f32
    %33 = vector.broadcast %cst_20 : f32 to vector<8x256xf32>
    %34 = arith.mulf %33, %30 : vector<8x256xf32>
    %35 = arith.addf %32, %34 : vector<8x256xf32>
    %cst_21 = arith.constant -1.000000e+00 : f32
    %cst_22 = arith.constant 1.000000e+00 : f32
    %36 = vector.broadcast %cst_21 : f32 to vector<8x256xf32>
    %37 = arith.maximumf %36, %35 : vector<8x256xf32>
    %38 = vector.broadcast %cst_22 : f32 to vector<8x256xf32>
    %39 = arith.minimumf %38, %37 : vector<8x256xf32>
    %40 = arith.subf %16, %39 : vector<8x256xf32>
    %cst_23 = arith.constant 0.333333343 : f32
    %41 = vector.broadcast %cst_23 : f32 to vector<8x256xf32>
    %42 = arith.mulf %40, %41 : vector<8x256xf32>
    %cst_24 = arith.constant -1.49560118 : f32
    %43 = vector.broadcast %cst_24 : f32 to vector<8x256xf32>
    %44 = arith.mulf %42, %43 : vector<8x256xf32>
    %45 = arith.addf %16, %44 : vector<8x256xf32>
    %cst_25 = arith.constant 0.630790472 : f32
    %46 = vector.broadcast %cst_25 : f32 to vector<8x256xf32>
    %47 = arith.mulf %46, %45 : vector<8x256xf32>
    %48 = arith.truncf %47 : vector<8x256xf32> to vector<8x256xbf16>
    %c0_26 = arith.constant 0 : index
    %c0_27 = arith.constant 0 : index
    %49 = vector.load %arg2[%c0_26, %c0_27] : memref<256x256xbf16, #tpu.memory_space<vmem>>, vector<256x256xbf16>
    %cst_28 = arith.constant dense<0.000000e+00> : vector<8x256xf32>
    %50 = tpu.matmul %48, %49, %cst_28 {dimension_numbers = #tpu.dot_dimension_numbers<[1], [0], [0], [1], [0, 0, 1, 1], [], []>} : vector<8x256xbf16>, vector<256x256xbf16>, vector<8x256xf32> -> vector<8x256xf32>
    %c1_29 = arith.constant 1 : index
    %c0_30 = arith.constant 0 : index
    %51 = vector.load %arg4[%c1_29, %c0_30] : memref<4x256xf32, #tpu.memory_space<vmem>>, vector<1x256xf32>
    %52 = vector.broadcast %51 : vector<1x256xf32> to vector<8x256xf32>
    %53 = arith.addf %50, %52 : vector<8x256xf32>
    %54 = math.tanh %53 : vector<8x256xf32>
    %55 = arith.truncf %54 : vector<8x256xf32> to vector<8x256xbf16>
    %c0_31 = arith.constant 0 : index
    %c0_32 = arith.constant 0 : index
    %56 = vector.load %arg3[%c0_31, %c0_32] : memref<256x256xbf16, #tpu.memory_space<vmem>>, vector<256x256xbf16>
    %cst_33 = arith.constant dense<0.000000e+00> : vector<8x256xf32>
    %57 = tpu.matmul %55, %56, %cst_33 {dimension_numbers = #tpu.dot_dimension_numbers<[1], [0], [0], [1], [0, 0, 1, 1], [], []>} : vector<8x256xbf16>, vector<256x256xbf16>, vector<8x256xf32> -> vector<8x256xf32>
    %cst_34 = arith.constant 0.0994741544 : f32
    %58 = vector.broadcast %cst_34 : f32 to vector<8x256xf32>
    %59 = arith.mulf %58, %45 : vector<8x256xf32>
    %cst_35 = arith.constant 0.474480212 : f32
    %60 = vector.broadcast %cst_35 : f32 to vector<8x256xf32>
    %61 = arith.mulf %60, %57 : vector<8x256xf32>
    %62 = arith.addf %59, %61 : vector<8x256xf32>
    %cst_36 = arith.constant -1.000000e+00 : f32
    %cst_37 = arith.constant 1.000000e+00 : f32
    %63 = vector.broadcast %cst_36 : f32 to vector<8x256xf32>
    %64 = arith.maximumf %63, %62 : vector<8x256xf32>
    %65 = vector.broadcast %cst_37 : f32 to vector<8x256xf32>
    %66 = arith.minimumf %65, %64 : vector<8x256xf32>
    %67 = arith.subf %45, %66 : vector<8x256xf32>
    %cst_38 = arith.constant 0.664717376 : f32
    %68 = vector.broadcast %cst_38 : f32 to vector<8x256xf32>
    %69 = arith.mulf %67, %68 : vector<8x256xf32>
    %cst_39 = arith.constant -2.99120235 : f32
    %70 = vector.broadcast %cst_39 : f32 to vector<8x256xf32>
    %71 = arith.mulf %69, %70 : vector<8x256xf32>
    %72 = arith.addf %16, %71 : vector<8x256xf32>
    %cst_40 = arith.constant 0.162219599 : f32
    %73 = vector.broadcast %cst_40 : f32 to vector<8x256xf32>
    %74 = arith.mulf %18, %73 : vector<8x256xf32>
    %75 = arith.addf %72, %74 : vector<8x256xf32>
    %c3 = arith.constant 3 : index
    %c0_41 = arith.constant 0 : index
    %c0_42 = arith.constant 0 : index
    %76 = vector.load %arg1[%c3, %c0_41, %c0_42] : memref<27x8x256xf32, #tpu.memory_space<vmem>>, vector<1x8x256xf32>
    %77 = vector.shape_cast %76 : vector<1x8x256xf32> to vector<8x256xf32>
    %cst_43 = arith.constant 2.99559808 : f32
    %78 = vector.broadcast %cst_43 : f32 to vector<8x256xf32>
    %79 = arith.mulf %78, %77 : vector<8x256xf32>
    %80 = arith.addf %75, %79 : vector<8x256xf32>
    %81 = arith.select %2, %15, %80 : vector<8x256xi1>, vector<8x256xf32>
    %c4 = arith.constant 4 : index
    %c0_44 = arith.constant 0 : index
    %c0_45 = arith.constant 0 : index
    %82 = vector.load %arg1[%c4, %c0_44, %c0_45] : memref<27x8x256xf32, #tpu.memory_space<vmem>>, vector<1x8x256xf32>
    %83 = vector.shape_cast %82 : vector<1x8x256xf32> to vector<8x256xf32>
    %cst_46 = arith.constant 0.328797966 : f32
    %84 = vector.broadcast %cst_46 : f32 to vector<8x256xf32>
    %85 = arith.mulf %84, %81 : vector<8x256xf32>
    %86 = arith.truncf %85 : vector<8x256xf32> to vector<8x256xbf16>
    %c0_47 = arith.constant 0 : index
    %c0_48 = arith.constant 0 : index
    %87 = vector.load %arg2[%c0_47, %c0_48] : memref<256x256xbf16, #tpu.memory_space<vmem>>, vector<256x256xbf16>
    %cst_49 = arith.constant dense<0.000000e+00> : vector<8x256xf32>
    %88 = tpu.matmul %86, %87, %cst_49 {dimension_numbers = #tpu.dot_dimension_numbers<[1], [0], [0], [1], [0, 0, 1, 1], [], []>} : vector<8x256xbf16>, vector<256x256xbf16>, vector<8x256xf32> -> vector<8x256xf32>
    %c0_50 = arith.constant 0 : index
    %c0_51 = arith.constant 0 : index
    %89 = vector.load %arg4[%c0_50, %c0_51] : memref<4x256xf32, #tpu.memory_space<vmem>>, vector<1x256xf32>
    %90 = vector.broadcast %89 : vector<1x256xf32> to vector<8x256xf32>
    %91 = arith.addf %88, %90 : vector<8x256xf32>
    %92 = math.tanh %91 : vector<8x256xf32>
    %93 = arith.truncf %92 : vector<8x256xf32> to vector<8x256xbf16>
    %c0_52 = arith.constant 0 : index
    %c0_53 = arith.constant 0 : index
    %94 = vector.load %arg3[%c0_52, %c0_53] : memref<256x256xbf16, #tpu.memory_space<vmem>>, vector<256x256xbf16>
    %cst_54 = arith.constant dense<0.000000e+00> : vector<8x256xf32>
    %95 = tpu.matmul %93, %94, %cst_54 {dimension_numbers = #tpu.dot_dimension_numbers<[1], [0], [0], [1], [0, 0, 1, 1], [], []>} : vector<8x256xbf16>, vector<256x256xbf16>, vector<8x256xf32> -> vector<8x256xf32>
    %cst_55 = arith.constant 0.0270270277 : f32
    %96 = vector.broadcast %cst_55 : f32 to vector<8x256xf32>
    %97 = arith.mulf %96, %81 : vector<8x256xf32>
    %cst_56 = arith.constant 0.493196964 : f32
    %98 = vector.broadcast %cst_56 : f32 to vector<8x256xf32>
    %99 = arith.mulf %98, %95 : vector<8x256xf32>
    %100 = arith.addf %97, %99 : vector<8x256xf32>
    %cst_57 = arith.constant -1.000000e+00 : f32
    %cst_58 = arith.constant 1.000000e+00 : f32
    %101 = vector.broadcast %cst_57 : f32 to vector<8x256xf32>
    %102 = arith.maximumf %101, %100 : vector<8x256xf32>
    %103 = vector.broadcast %cst_58 : f32 to vector<8x256xf32>
    %104 = arith.minimumf %103, %102 : vector<8x256xf32>
    %105 = arith.subf %81, %104 : vector<8x256xf32>
    %cst_59 = arith.constant 0.333333343 : f32
    %106 = vector.broadcast %cst_59 : f32 to vector<8x256xf32>
    %107 = arith.mulf %105, %106 : vector<8x256xf32>
    %cst_60 = arith.constant -1.49560118 : f32
    %108 = vector.broadcast %cst_60 : f32 to vector<8x256xf32>
    %109 = arith.mulf %107, %108 : vector<8x256xf32>
    %110 = arith.addf %81, %109 : vector<8x256xf32>
    %cst_61 = arith.constant 0.630790472 : f32
    %111 = vector.broadcast %cst_61 : f32 to vector<8x256xf32>
    %112 = arith.mulf %111, %110 : vector<8x256xf32>
    %113 = arith.truncf %112 : vector<8x256xf32> to vector<8x256xbf16>
    %c0_62 = arith.constant 0 : index
    %c0_63 = arith.constant 0 : index
    %114 = vector.load %arg2[%c0_62, %c0_63] : memref<256x256xbf16, #tpu.memory_space<vmem>>, vector<256x256xbf16>
    %cst_64 = arith.constant dense<0.000000e+00> : vector<8x256xf32>
    %115 = tpu.matmul %113, %114, %cst_64 {dimension_numbers = #tpu.dot_dimension_numbers<[1], [0], [0], [1], [0, 0, 1, 1], [], []>} : vector<8x256xbf16>, vector<256x256xbf16>, vector<8x256xf32> -> vector<8x256xf32>
    %c1_65 = arith.constant 1 : index
    %c0_66 = arith.constant 0 : index
    %116 = vector.load %arg4[%c1_65, %c0_66] : memref<4x256xf32, #tpu.memory_space<vmem>>, vector<1x256xf32>
    %117 = vector.broadcast %116 : vector<1x256xf32> to vector<8x256xf32>
    %118 = arith.addf %115, %117 : vector<8x256xf32>
    %119 = math.tanh %118 : vector<8x256xf32>
    %120 = arith.truncf %119 : vector<8x256xf32> to vector<8x256xbf16>
    %c0_67 = arith.constant 0 : index
    %c0_68 = arith.constant 0 : index
    %121 = vector.load %arg3[%c0_67, %c0_68] : memref<256x256xbf16, #tpu.memory_space<vmem>>, vector<256x256xbf16>
    %cst_69 = arith.constant dense<0.000000e+00> : vector<8x256xf32>
    %122 = tpu.matmul %120, %121, %cst_69 {dimension_numbers = #tpu.dot_dimension_numbers<[1], [0], [0], [1], [0, 0, 1, 1], [], []>} : vector<8x256xbf16>, vector<256x256xbf16>, vector<8x256xf32> -> vector<8x256xf32>
    %cst_70 = arith.constant 0.0994741544 : f32
    %123 = vector.broadcast %cst_70 : f32 to vector<8x256xf32>
    %124 = arith.mulf %123, %110 : vector<8x256xf32>
    %cst_71 = arith.constant 0.474480212 : f32
    %125 = vector.broadcast %cst_71 : f32 to vector<8x256xf32>
    %126 = arith.mulf %125, %122 : vector<8x256xf32>
    %127 = arith.addf %124, %126 : vector<8x256xf32>
    %cst_72 = arith.constant -1.000000e+00 : f32
    %cst_73 = arith.constant 1.000000e+00 : f32
    %128 = vector.broadcast %cst_72 : f32 to vector<8x256xf32>
    %129 = arith.maximumf %128, %127 : vector<8x256xf32>
    %130 = vector.broadcast %cst_73 : f32 to vector<8x256xf32>
    %131 = arith.minimumf %130, %129 : vector<8x256xf32>
    %132 = arith.subf %110, %131 : vector<8x256xf32>
    %cst_74 = arith.constant 0.664717376 : f32
    %133 = vector.broadcast %cst_74 : f32 to vector<8x256xf32>
    %134 = arith.mulf %132, %133 : vector<8x256xf32>
    %cst_75 = arith.constant -2.99120235 : f32
    %135 = vector.broadcast %cst_75 : f32 to vector<8x256xf32>
    %136 = arith.mulf %134, %135 : vector<8x256xf32>
    %137 = arith.addf %81, %136 : vector<8x256xf32>
    %cst_76 = arith.constant 0.162219599 : f32
    %138 = vector.broadcast %cst_76 : f32 to vector<8x256xf32>
    %139 = arith.mulf %83, %138 : vector<8x256xf32>
    %140 = arith.addf %137, %139 : vector<8x256xf32>
    %c5 = arith.constant 5 : index
    %c0_77 = arith.constant 0 : index
    %c0_78 = arith.constant 0 : index
    %141 = vector.load %arg1[%c5, %c0_77, %c0_78] : memref<27x8x256xf32, #tpu.memory_space<vmem>>, vector<1x8x256xf32>
    %142 = vector.shape_cast %141 : vector<1x8x256xf32> to vector<8x256xf32>
    %cst_79 = arith.constant 0.162457973 : f32
    %143 = vector.broadcast %cst_79 : f32 to vector<8x256xf32>
    %144 = arith.mulf %143, %142 : vector<8x256xf32>
    %145 = arith.addf %6, %144 : vector<8x256xf32>
    %146 = arith.select %2, %145, %140 : vector<8x256xi1>, vector<8x256xf32>
    %c6 = arith.constant 6 : index
    %c0_80 = arith.constant 0 : index
    %c0_81 = arith.constant 0 : index
    %147 = vector.load %arg1[%c6, %c0_80, %c0_81] : memref<27x8x256xf32, #tpu.memory_space<vmem>>, vector<1x8x256xf32>
    %148 = vector.shape_cast %147 : vector<1x8x256xf32> to vector<8x256xf32>
    %cst_82 = arith.constant 1.90211511 : f32
    %149 = vector.broadcast %cst_82 : f32 to vector<8x256xf32>
    %150 = arith.mulf %149, %146 : vector<8x256xf32>
    %151 = arith.truncf %150 : vector<8x256xf32> to vector<8x256xbf16>
    %c0_83 = arith.constant 0 : index
    %c0_84 = arith.constant 0 : index
    %152 = vector.load %arg2[%c0_83, %c0_84] : memref<256x256xbf16, #tpu.memory_space<vmem>>, vector<256x256xbf16>
    %cst_85 = arith.constant dense<0.000000e+00> : vector<8x256xf32>
    %153 = tpu.matmul %151, %152, %cst_85 {dimension_numbers = #tpu.dot_dimension_numbers<[1], [0], [0], [1], [0, 0, 1, 1], [], []>} : vector<8x256xbf16>, vector<256x256xbf16>, vector<8x256xf32> -> vector<8x256xf32>
    %c2_86 = arith.constant 2 : index
    %c0_87 = arith.constant 0 : index
    %154 = vector.load %arg4[%c2_86, %c0_87] : memref<4x256xf32, #tpu.memory_space<vmem>>, vector<1x256xf32>
    %155 = vector.broadcast %154 : vector<1x256xf32> to vector<8x256xf32>
    %156 = arith.addf %153, %155 : vector<8x256xf32>
    %157 = math.tanh %156 : vector<8x256xf32>
    %158 = arith.truncf %157 : vector<8x256xf32> to vector<8x256xbf16>
    %c0_88 = arith.constant 0 : index
    %c0_89 = arith.constant 0 : index
    %159 = vector.load %arg3[%c0_88, %c0_89] : memref<256x256xbf16, #tpu.memory_space<vmem>>, vector<256x256xbf16>
    %cst_90 = arith.constant dense<0.000000e+00> : vector<8x256xf32>
    %160 = tpu.matmul %158, %159, %cst_90 {dimension_numbers = #tpu.dot_dimension_numbers<[1], [0], [0], [1], [0, 0, 1, 1], [], []>} : vector<8x256xbf16>, vector<256x256xbf16>, vector<8x256xf32> -> vector<8x256xf32>
    %cst_91 = arith.constant 0.904510498 : f32
    %161 = vector.broadcast %cst_91 : f32 to vector<8x256xf32>
    %162 = arith.mulf %161, %146 : vector<8x256xf32>
    %cst_92 = arith.constant 0.154506892 : f32
    %163 = vector.broadcast %cst_92 : f32 to vector<8x256xf32>
    %164 = arith.mulf %163, %160 : vector<8x256xf32>
    %165 = arith.addf %162, %164 : vector<8x256xf32>
    %cst_93 = arith.constant -1.000000e+00 : f32
    %cst_94 = arith.constant 1.000000e+00 : f32
    %166 = vector.broadcast %cst_93 : f32 to vector<8x256xf32>
    %167 = arith.maximumf %166, %165 : vector<8x256xf32>
    %168 = vector.broadcast %cst_94 : f32 to vector<8x256xf32>
    %169 = arith.minimumf %168, %167 : vector<8x256xf32>
    %170 = arith.subf %146, %169 : vector<8x256xf32>
    %cst_95 = arith.constant 6.15543795 : f32
    %171 = vector.broadcast %cst_95 : f32 to vector<8x256xf32>
    %172 = arith.mulf %170, %171 : vector<8x256xf32>
    %cst_96 = arith.constant -0.0812259092 : f32
    %173 = vector.broadcast %cst_96 : f32 to vector<8x256xf32>
    %174 = arith.mulf %172, %173 : vector<8x256xf32>
    %175 = arith.addf %146, %174 : vector<8x256xf32>
    %cst_97 = arith.constant 1.97411668 : f32
    %176 = vector.broadcast %cst_97 : f32 to vector<8x256xf32>
    %177 = arith.mulf %176, %175 : vector<8x256xf32>
    %178 = arith.truncf %177 : vector<8x256xf32> to vector<8x256xbf16>
    %c0_98 = arith.constant 0 : index
    %c0_99 = arith.constant 0 : index
    %179 = vector.load %arg2[%c0_98, %c0_99] : memref<256x256xbf16, #tpu.memory_space<vmem>>, vector<256x256xbf16>
    %cst_100 = arith.constant dense<0.000000e+00> : vector<8x256xf32>
    %180 = tpu.matmul %178, %179, %cst_100 {dimension_numbers = #tpu.dot_dimension_numbers<[1], [0], [0], [1], [0, 0, 1, 1], [], []>} : vector<8x256xbf16>, vector<256x256xbf16>, vector<8x256xf32> -> vector<8x256xf32>
    %c3_101 = arith.constant 3 : index
    %c0_102 = arith.constant 0 : index
    %181 = vector.load %arg4[%c3_101, %c0_102] : memref<4x256xf32, #tpu.memory_space<vmem>>, vector<1x256xf32>
    %182 = vector.broadcast %181 : vector<1x256xf32> to vector<8x256xf32>
    %183 = arith.addf %180, %182 : vector<8x256xf32>
    %184 = math.tanh %183 : vector<8x256xf32>
    %185 = arith.truncf %184 : vector<8x256xf32> to vector<8x256xbf16>
    %c0_103 = arith.constant 0 : index
    %c0_104 = arith.constant 0 : index
    %186 = vector.load %arg3[%c0_103, %c0_104] : memref<256x256xbf16, #tpu.memory_space<vmem>>, vector<256x256xbf16>
    %cst_105 = arith.constant dense<0.000000e+00> : vector<8x256xf32>
    %187 = tpu.matmul %185, %186, %cst_105 {dimension_numbers = #tpu.dot_dimension_numbers<[1], [0], [0], [1], [0, 0, 1, 1], [], []>} : vector<8x256xbf16>, vector<256x256xbf16>, vector<8x256xf32> -> vector<8x256xf32>
    %cst_106 = arith.constant 0.974284172 : f32
    %188 = vector.broadcast %cst_106 : f32 to vector<8x256xf32>
    %189 = arith.mulf %188, %175 : vector<8x256xf32>
    %cst_107 = arith.constant 0.0801807865 : f32
    %190 = vector.broadcast %cst_107 : f32 to vector<8x256xf32>
    %191 = arith.mulf %190, %187 : vector<8x256xf32>
    %192 = arith.addf %189, %191 : vector<8x256xf32>
    %cst_108 = arith.constant -1.000000e+00 : f32
    %cst_109 = arith.constant 1.000000e+00 : f32
    %193 = vector.broadcast %cst_108 : f32 to vector<8x256xf32>
    %194 = arith.maximumf %193, %192 : vector<8x256xf32>
    %195 = vector.broadcast %cst_109 : f32 to vector<8x256xf32>
    %196 = arith.minimumf %195, %194 : vector<8x256xf32>
    %197 = arith.subf %175, %196 : vector<8x256xf32>
    %cst_110 = arith.constant 12.3104095 : f32
    %198 = vector.broadcast %cst_110 : f32 to vector<8x256xf32>
    %199 = arith.mulf %197, %198 : vector<8x256xf32>
    %cst_111 = arith.constant -0.162451819 : f32
    %200 = vector.broadcast %cst_111 : f32 to vector<8x256xf32>
    %201 = arith.mulf %199, %200 : vector<8x256xf32>
    %202 = arith.addf %146, %201 : vector<8x256xf32>
    %cst_112 = arith.constant 9.99981071E-4 : f32
    %203 = vector.broadcast %cst_112 : f32 to vector<8x256xf32>
    %204 = arith.mulf %148, %203 : vector<8x256xf32>
    %205 = arith.addf %202, %204 : vector<8x256xf32>
    %c7 = arith.constant 7 : index
    %c0_113 = arith.constant 0 : index
    %c0_114 = arith.constant 0 : index
    %206 = vector.load %arg1[%c7, %c0_113, %c0_114] : memref<27x8x256xf32, #tpu.memory_space<vmem>>, vector<1x8x256xf32>
    %207 = vector.shape_cast %206 : vector<1x8x256xf32> to vector<8x256xf32>
    %cst_115 = arith.constant 0.162454903 : f32
    %208 = vector.broadcast %cst_115 : f32 to vector<8x256xf32>
    %209 = arith.mulf %208, %207 : vector<8x256xf32>
    %210 = arith.addf %205, %209 : vector<8x256xf32>
    %211 = arith.select %2, %145, %210 : vector<8x256xi1>, vector<8x256xf32>
    %c8 = arith.constant 8 : index
    %c0_116 = arith.constant 0 : index
    %c0_117 = arith.constant 0 : index
    %212 = vector.load %arg1[%c8, %c0_116, %c0_117] : memref<27x8x256xf32, #tpu.memory_space<vmem>>, vector<1x8x256xf32>
    %213 = vector.shape_cast %212 : vector<1x8x256xf32> to vector<8x256xf32>
    %cst_118 = arith.constant 1.90211511 : f32
    %214 = vector.broadcast %cst_118 : f32 to vector<8x256xf32>
    %215 = arith.mulf %214, %211 : vector<8x256xf32>
    %216 = arith.truncf %215 : vector<8x256xf32> to vector<8x256xbf16>
    %c0_119 = arith.constant 0 : index
    %c0_120 = arith.constant 0 : index
    %217 = vector.load %arg2[%c0_119, %c0_120] : memref<256x256xbf16, #tpu.memory_space<vmem>>, vector<256x256xbf16>
    %cst_121 = arith.constant dense<0.000000e+00> : vector<8x256xf32>
    %218 = tpu.matmul %216, %217, %cst_121 {dimension_numbers = #tpu.dot_dimension_numbers<[1], [0], [0], [1], [0, 0, 1, 1], [], []>} : vector<8x256xbf16>, vector<256x256xbf16>, vector<8x256xf32> -> vector<8x256xf32>
    %c2_122 = arith.constant 2 : index
    %c0_123 = arith.constant 0 : index
    %219 = vector.load %arg4[%c2_122, %c0_123] : memref<4x256xf32, #tpu.memory_space<vmem>>, vector<1x256xf32>
    %220 = vector.broadcast %219 : vector<1x256xf32> to vector<8x256xf32>
    %221 = arith.addf %218, %220 : vector<8x256xf32>
    %222 = math.tanh %221 : vector<8x256xf32>
    %223 = arith.truncf %222 : vector<8x256xf32> to vector<8x256xbf16>
    %c0_124 = arith.constant 0 : index
    %c0_125 = arith.constant 0 : index
    %224 = vector.load %arg3[%c0_124, %c0_125] : memref<256x256xbf16, #tpu.memory_space<vmem>>, vector<256x256xbf16>
    %cst_126 = arith.constant dense<0.000000e+00> : vector<8x256xf32>
    %225 = tpu.matmul %223, %224, %cst_126 {dimension_numbers = #tpu.dot_dimension_numbers<[1], [0], [0], [1], [0, 0, 1, 1], [], []>} : vector<8x256xbf16>, vector<256x256xbf16>, vector<8x256xf32> -> vector<8x256xf32>
    %cst_127 = arith.constant 0.904510498 : f32
    %226 = vector.broadcast %cst_127 : f32 to vector<8x256xf32>
    %227 = arith.mulf %226, %211 : vector<8x256xf32>
    %cst_128 = arith.constant 0.154506892 : f32
    %228 = vector.broadcast %cst_128 : f32 to vector<8x256xf32>
    %229 = arith.mulf %228, %225 : vector<8x256xf32>
    %230 = arith.addf %227, %229 : vector<8x256xf32>
    %cst_129 = arith.constant -1.000000e+00 : f32
    %cst_130 = arith.constant 1.000000e+00 : f32
    %231 = vector.broadcast %cst_129 : f32 to vector<8x256xf32>
    %232 = arith.maximumf %231, %230 : vector<8x256xf32>
    %233 = vector.broadcast %cst_130 : f32 to vector<8x256xf32>
    %234 = arith.minimumf %233, %232 : vector<8x256xf32>
    %235 = arith.subf %211, %234 : vector<8x256xf32>
    %cst_131 = arith.constant 6.15543795 : f32
    %236 = vector.broadcast %cst_131 : f32 to vector<8x256xf32>
    %237 = arith.mulf %235, %236 : vector<8x256xf32>
    %cst_132 = arith.constant -0.0812259092 : f32
    %238 = vector.broadcast %cst_132 : f32 to vector<8x256xf32>
    %239 = arith.mulf %237, %238 : vector<8x256xf32>
    %240 = arith.addf %211, %239 : vector<8x256xf32>
    %cst_133 = arith.constant 1.97411668 : f32
    %241 = vector.broadcast %cst_133 : f32 to vector<8x256xf32>
    %242 = arith.mulf %241, %240 : vector<8x256xf32>
    %243 = arith.truncf %242 : vector<8x256xf32> to vector<8x256xbf16>
    %c0_134 = arith.constant 0 : index
    %c0_135 = arith.constant 0 : index
    %244 = vector.load %arg2[%c0_134, %c0_135] : memref<256x256xbf16, #tpu.memory_space<vmem>>, vector<256x256xbf16>
    %cst_136 = arith.constant dense<0.000000e+00> : vector<8x256xf32>
    %245 = tpu.matmul %243, %244, %cst_136 {dimension_numbers = #tpu.dot_dimension_numbers<[1], [0], [0], [1], [0, 0, 1, 1], [], []>} : vector<8x256xbf16>, vector<256x256xbf16>, vector<8x256xf32> -> vector<8x256xf32>
    %c3_137 = arith.constant 3 : index
    %c0_138 = arith.constant 0 : index
    %246 = vector.load %arg4[%c3_137, %c0_138] : memref<4x256xf32, #tpu.memory_space<vmem>>, vector<1x256xf32>
    %247 = vector.broadcast %246 : vector<1x256xf32> to vector<8x256xf32>
    %248 = arith.addf %245, %247 : vector<8x256xf32>
    %249 = math.tanh %248 : vector<8x256xf32>
    %250 = arith.truncf %249 : vector<8x256xf32> to vector<8x256xbf16>
    %c0_139 = arith.constant 0 : index
    %c0_140 = arith.constant 0 : index
    %251 = vector.load %arg3[%c0_139, %c0_140] : memref<256x256xbf16, #tpu.memory_space<vmem>>, vector<256x256xbf16>
    %cst_141 = arith.constant dense<0.000000e+00> : vector<8x256xf32>
    %252 = tpu.matmul %250, %251, %cst_141 {dimension_numbers = #tpu.dot_dimension_numbers<[1], [0], [0], [1], [0, 0, 1, 1], [], []>} : vector<8x256xbf16>, vector<256x256xbf16>, vector<8x256xf32> -> vector<8x256xf32>
    %cst_142 = arith.constant 0.974284172 : f32
    %253 = vector.broadcast %cst_142 : f32 to vector<8x256xf32>
    %254 = arith.mulf %253, %240 : vector<8x256xf32>
    %cst_143 = arith.constant 0.0801807865 : f32
    %255 = vector.broadcast %cst_143 : f32 to vector<8x256xf32>
    %256 = arith.mulf %255, %252 : vector<8x256xf32>
    %257 = arith.addf %254, %256 : vector<8x256xf32>
    %cst_144 = arith.constant -1.000000e+00 : f32
    %cst_145 = arith.constant 1.000000e+00 : f32
    %258 = vector.broadcast %cst_144 : f32 to vector<8x256xf32>
    %259 = arith.maximumf %258, %257 : vector<8x256xf32>
    %260 = vector.broadcast %cst_145 : f32 to vector<8x256xf32>
    %261 = arith.minimumf %260, %259 : vector<8x256xf32>
    %262 = arith.subf %240, %261 : vector<8x256xf32>
    %cst_146 = arith.constant 12.3104095 : f32
    %263 = vector.broadcast %cst_146 : f32 to vector<8x256xf32>
    %264 = arith.mulf %262, %263 : vector<8x256xf32>
    %cst_147 = arith.constant -0.162451819 : f32
    %265 = vector.broadcast %cst_147 : f32 to vector<8x256xf32>
    %266 = arith.mulf %264, %265 : vector<8x256xf32>
    %267 = arith.addf %211, %266 : vector<8x256xf32>
    %cst_148 = arith.constant 9.99981071E-4 : f32
    %268 = vector.broadcast %cst_148 : f32 to vector<8x256xf32>
    %269 = arith.mulf %213, %268 : vector<8x256xf32>
    %270 = arith.addf %267, %269 : vector<8x256xf32>
    %271 = vector.extract_strided_slice %270 {offsets = [0, 128], sizes = [8, 128], strides = [1, 1]} : vector<8x256xf32> to vector<8x128xf32>
    %c0_149 = arith.constant 0 : index
    %c0_150 = arith.constant 0 : index
    %272 = vector.load %arg5[%c0_149, %c0_150] : memref<8x384xf32, #tpu.memory_space<vmem>>, vector<8x128xf32>
    tpu.vector_store %arg5[%c0_149, %c0_150], %271 {strides = array<i32>} : memref<8x384xf32, #tpu.memory_space<vmem>>, vector<8x128xf32>,
    %273 = tpu.concatenate %271, %3 in 1 : vector<8x128xf32>, vector<8x128xf32> -> vector<8x256xf32>
    %c9 = arith.constant 9 : index
    %c0_151 = arith.constant 0 : index
    %c0_152 = arith.constant 0 : index
    %274 = vector.load %arg1[%c9, %c0_151, %c0_152] : memref<27x8x256xf32, #tpu.memory_space<vmem>>, vector<1x8x256xf32>
    %275 = vector.shape_cast %274 : vector<1x8x256xf32> to vector<8x256xf32>
    %cst_153 = arith.constant 3.000000e+00 : f32
    %276 = vector.broadcast %cst_153 : f32 to vector<8x256xf32>
    %277 = arith.mulf %276, %275 : vector<8x256xf32>
    %c10 = arith.constant 10 : index
    %c0_154 = arith.constant 0 : index
    %c0_155 = arith.constant 0 : index
    %278 = vector.load %arg1[%c10, %c0_154, %c0_155] : memref<27x8x256xf32, #tpu.memory_space<vmem>>, vector<1x8x256xf32>
    %279 = vector.shape_cast %278 : vector<1x8x256xf32> to vector<8x256xf32>
    %cst_156 = arith.constant 3.000000e+00 : f32
    %280 = vector.broadcast %cst_156 : f32 to vector<8x256xf32>
    %281 = arith.mulf %280, %279 : vector<8x256xf32>
    %282 = arith.addf %273, %281 : vector<8x256xf32>
    %283 = arith.select %2, %282, %277 : vector<8x256xi1>, vector<8x256xf32>
    %c11 = arith.constant 11 : index
    %c0_157 = arith.constant 0 : index
    %c0_158 = arith.constant 0 : index
    %284 = vector.load %arg1[%c11, %c0_157, %c0_158] : memref<27x8x256xf32, #tpu.memory_space<vmem>>, vector<1x8x256xf32>
    %285 = vector.shape_cast %284 : vector<1x8x256xf32> to vector<8x256xf32>
    %cst_159 = arith.constant 0.328797966 : f32
    %286 = vector.broadcast %cst_159 : f32 to vector<8x256xf32>
    %287 = arith.mulf %286, %283 : vector<8x256xf32>
    %288 = arith.truncf %287 : vector<8x256xf32> to vector<8x256xbf16>
    %c0_160 = arith.constant 0 : index
    %c0_161 = arith.constant 0 : index
    %289 = vector.load %arg2[%c0_160, %c0_161] : memref<256x256xbf16, #tpu.memory_space<vmem>>, vector<256x256xbf16>
    %cst_162 = arith.constant dense<0.000000e+00> : vector<8x256xf32>
    %290 = tpu.matmul %288, %289, %cst_162 {dimension_numbers = #tpu.dot_dimension_numbers<[1], [0], [0], [1], [0, 0, 1, 1], [], []>} : vector<8x256xbf16>, vector<256x256xbf16>, vector<8x256xf32> -> vector<8x256xf32>
    %c0_163 = arith.constant 0 : index
    %c0_164 = arith.constant 0 : index
    %291 = vector.load %arg4[%c0_163, %c0_164] : memref<4x256xf32, #tpu.memory_space<vmem>>, vector<1x256xf32>
    %292 = vector.broadcast %291 : vector<1x256xf32> to vector<8x256xf32>
    %293 = arith.addf %290, %292 : vector<8x256xf32>
    %294 = math.tanh %293 : vector<8x256xf32>
    %295 = arith.truncf %294 : vector<8x256xf32> to vector<8x256xbf16>
    %c0_165 = arith.constant 0 : index
    %c0_166 = arith.constant 0 : index
    %296 = vector.load %arg3[%c0_165, %c0_166] : memref<256x256xbf16, #tpu.memory_space<vmem>>, vector<256x256xbf16>
    %cst_167 = arith.constant dense<0.000000e+00> : vector<8x256xf32>
    %297 = tpu.matmul %295, %296, %cst_167 {dimension_numbers = #tpu.dot_dimension_numbers<[1], [0], [0], [1], [0, 0, 1, 1], [], []>} : vector<8x256xbf16>, vector<256x256xbf16>, vector<8x256xf32> -> vector<8x256xf32>
    %cst_168 = arith.constant 0.0270270277 : f32
    %298 = vector.broadcast %cst_168 : f32 to vector<8x256xf32>
    %299 = arith.mulf %298, %283 : vector<8x256xf32>
    %cst_169 = arith.constant 0.493196964 : f32
    %300 = vector.broadcast %cst_169 : f32 to vector<8x256xf32>
    %301 = arith.mulf %300, %297 : vector<8x256xf32>
    %302 = arith.addf %299, %301 : vector<8x256xf32>
    %cst_170 = arith.constant -1.000000e+00 : f32
    %cst_171 = arith.constant 1.000000e+00 : f32
    %303 = vector.broadcast %cst_170 : f32 to vector<8x256xf32>
    %304 = arith.maximumf %303, %302 : vector<8x256xf32>
    %305 = vector.broadcast %cst_171 : f32 to vector<8x256xf32>
    %306 = arith.minimumf %305, %304 : vector<8x256xf32>
    %307 = arith.subf %283, %306 : vector<8x256xf32>
    %cst_172 = arith.constant 0.333333343 : f32
    %308 = vector.broadcast %cst_172 : f32 to vector<8x256xf32>
    %309 = arith.mulf %307, %308 : vector<8x256xf32>
    %cst_173 = arith.constant -1.49560118 : f32
    %310 = vector.broadcast %cst_173 : f32 to vector<8x256xf32>
    %311 = arith.mulf %309, %310 : vector<8x256xf32>
    %312 = arith.addf %283, %311 : vector<8x256xf32>
    %cst_174 = arith.constant 0.630790472 : f32
    %313 = vector.broadcast %cst_174 : f32 to vector<8x256xf32>
    %314 = arith.mulf %313, %312 : vector<8x256xf32>
    %315 = arith.truncf %314 : vector<8x256xf32> to vector<8x256xbf16>
    %c0_175 = arith.constant 0 : index
    %c0_176 = arith.constant 0 : index
    %316 = vector.load %arg2[%c0_175, %c0_176] : memref<256x256xbf16, #tpu.memory_space<vmem>>, vector<256x256xbf16>
    %cst_177 = arith.constant dense<0.000000e+00> : vector<8x256xf32>
    %317 = tpu.matmul %315, %316, %cst_177 {dimension_numbers = #tpu.dot_dimension_numbers<[1], [0], [0], [1], [0, 0, 1, 1], [], []>} : vector<8x256xbf16>, vector<256x256xbf16>, vector<8x256xf32> -> vector<8x256xf32>
    %c1_178 = arith.constant 1 : index
    %c0_179 = arith.constant 0 : index
    %318 = vector.load %arg4[%c1_178, %c0_179] : memref<4x256xf32, #tpu.memory_space<vmem>>, vector<1x256xf32>
    %319 = vector.broadcast %318 : vector<1x256xf32> to vector<8x256xf32>
    %320 = arith.addf %317, %319 : vector<8x256xf32>
    %321 = math.tanh %320 : vector<8x256xf32>
    %322 = arith.truncf %321 : vector<8x256xf32> to vector<8x256xbf16>
    %c0_180 = arith.constant 0 : index
    %c0_181 = arith.constant 0 : index
    %323 = vector.load %arg3[%c0_180, %c0_181] : memref<256x256xbf16, #tpu.memory_space<vmem>>, vector<256x256xbf16>
    %cst_182 = arith.constant dense<0.000000e+00> : vector<8x256xf32>
    %324 = tpu.matmul %322, %323, %cst_182 {dimension_numbers = #tpu.dot_dimension_numbers<[1], [0], [0], [1], [0, 0, 1, 1], [], []>} : vector<8x256xbf16>, vector<256x256xbf16>, vector<8x256xf32> -> vector<8x256xf32>
    %cst_183 = arith.constant 0.0994741544 : f32
    %325 = vector.broadcast %cst_183 : f32 to vector<8x256xf32>
    %326 = arith.mulf %325, %312 : vector<8x256xf32>
    %cst_184 = arith.constant 0.474480212 : f32
    %327 = vector.broadcast %cst_184 : f32 to vector<8x256xf32>
    %328 = arith.mulf %327, %324 : vector<8x256xf32>
    %329 = arith.addf %326, %328 : vector<8x256xf32>
    %cst_185 = arith.constant -1.000000e+00 : f32
    %cst_186 = arith.constant 1.000000e+00 : f32
    %330 = vector.broadcast %cst_185 : f32 to vector<8x256xf32>
    %331 = arith.maximumf %330, %329 : vector<8x256xf32>
    %332 = vector.broadcast %cst_186 : f32 to vector<8x256xf32>
    %333 = arith.minimumf %332, %331 : vector<8x256xf32>
    %334 = arith.subf %312, %333 : vector<8x256xf32>
    %cst_187 = arith.constant 0.664717376 : f32
    %335 = vector.broadcast %cst_187 : f32 to vector<8x256xf32>
    %336 = arith.mulf %334, %335 : vector<8x256xf32>
    %cst_188 = arith.constant -2.99120235 : f32
    %337 = vector.broadcast %cst_188 : f32 to vector<8x256xf32>
    %338 = arith.mulf %336, %337 : vector<8x256xf32>
    %339 = arith.addf %283, %338 : vector<8x256xf32>
    %cst_189 = arith.constant 0.162219599 : f32
    %340 = vector.broadcast %cst_189 : f32 to vector<8x256xf32>
    %341 = arith.mulf %285, %340 : vector<8x256xf32>
    %342 = arith.addf %339, %341 : vector<8x256xf32>
    %c12 = arith.constant 12 : index
    %c0_190 = arith.constant 0 : index
    %c0_191 = arith.constant 0 : index
    %343 = vector.load %arg1[%c12, %c0_190, %c0_191] : memref<27x8x256xf32, #tpu.memory_space<vmem>>, vector<1x8x256xf32>
    %344 = vector.shape_cast %343 : vector<1x8x256xf32> to vector<8x256xf32>
    %cst_192 = arith.constant 2.99559808 : f32
    %345 = vector.broadcast %cst_192 : f32 to vector<8x256xf32>
    %346 = arith.mulf %345, %344 : vector<8x256xf32>
    %347 = arith.addf %342, %346 : vector<8x256xf32>
    %348 = arith.select %2, %282, %347 : vector<8x256xi1>, vector<8x256xf32>
    %c13 = arith.constant 13 : index
    %c0_193 = arith.constant 0 : index
    %c0_194 = arith.constant 0 : index
    %349 = vector.load %arg1[%c13, %c0_193, %c0_194] : memref<27x8x256xf32, #tpu.memory_space<vmem>>, vector<1x8x256xf32>
    %350 = vector.shape_cast %349 : vector<1x8x256xf32> to vector<8x256xf32>
    %cst_195 = arith.constant 0.328797966 : f32
    %351 = vector.broadcast %cst_195 : f32 to vector<8x256xf32>
    %352 = arith.mulf %351, %348 : vector<8x256xf32>
    %353 = arith.truncf %352 : vector<8x256xf32> to vector<8x256xbf16>
    %c0_196 = arith.constant 0 : index
    %c0_197 = arith.constant 0 : index
    %354 = vector.load %arg2[%c0_196, %c0_197] : memref<256x256xbf16, #tpu.memory_space<vmem>>, vector<256x256xbf16>
    %cst_198 = arith.constant dense<0.000000e+00> : vector<8x256xf32>
    %355 = tpu.matmul %353, %354, %cst_198 {dimension_numbers = #tpu.dot_dimension_numbers<[1], [0], [0], [1], [0, 0, 1, 1], [], []>} : vector<8x256xbf16>, vector<256x256xbf16>, vector<8x256xf32> -> vector<8x256xf32>
    %c0_199 = arith.constant 0 : index
    %c0_200 = arith.constant 0 : index
    %356 = vector.load %arg4[%c0_199, %c0_200] : memref<4x256xf32, #tpu.memory_space<vmem>>, vector<1x256xf32>
    %357 = vector.broadcast %356 : vector<1x256xf32> to vector<8x256xf32>
    %358 = arith.addf %355, %357 : vector<8x256xf32>
    %359 = math.tanh %358 : vector<8x256xf32>
    %360 = arith.truncf %359 : vector<8x256xf32> to vector<8x256xbf16>
    %c0_201 = arith.constant 0 : index
    %c0_202 = arith.constant 0 : index
    %361 = vector.load %arg3[%c0_201, %c0_202] : memref<256x256xbf16, #tpu.memory_space<vmem>>, vector<256x256xbf16>
    %cst_203 = arith.constant dense<0.000000e+00> : vector<8x256xf32>
    %362 = tpu.matmul %360, %361, %cst_203 {dimension_numbers = #tpu.dot_dimension_numbers<[1], [0], [0], [1], [0, 0, 1, 1], [], []>} : vector<8x256xbf16>, vector<256x256xbf16>, vector<8x256xf32> -> vector<8x256xf32>
    %cst_204 = arith.constant 0.0270270277 : f32
    %363 = vector.broadcast %cst_204 : f32 to vector<8x256xf32>
    %364 = arith.mulf %363, %348 : vector<8x256xf32>
    %cst_205 = arith.constant 0.493196964 : f32
    %365 = vector.broadcast %cst_205 : f32 to vector<8x256xf32>
    %366 = arith.mulf %365, %362 : vector<8x256xf32>
    %367 = arith.addf %364, %366 : vector<8x256xf32>
    %cst_206 = arith.constant -1.000000e+00 : f32
    %cst_207 = arith.constant 1.000000e+00 : f32
    %368 = vector.broadcast %cst_206 : f32 to vector<8x256xf32>
    %369 = arith.maximumf %368, %367 : vector<8x256xf32>
    %370 = vector.broadcast %cst_207 : f32 to vector<8x256xf32>
    %371 = arith.minimumf %370, %369 : vector<8x256xf32>
    %372 = arith.subf %348, %371 : vector<8x256xf32>
    %cst_208 = arith.constant 0.333333343 : f32
    %373 = vector.broadcast %cst_208 : f32 to vector<8x256xf32>
    %374 = arith.mulf %372, %373 : vector<8x256xf32>
    %cst_209 = arith.constant -1.49560118 : f32
    %375 = vector.broadcast %cst_209 : f32 to vector<8x256xf32>
    %376 = arith.mulf %374, %375 : vector<8x256xf32>
    %377 = arith.addf %348, %376 : vector<8x256xf32>
    %cst_210 = arith.constant 0.630790472 : f32
    %378 = vector.broadcast %cst_210 : f32 to vector<8x256xf32>
    %379 = arith.mulf %378, %377 : vector<8x256xf32>
    %380 = arith.truncf %379 : vector<8x256xf32> to vector<8x256xbf16>
    %c0_211 = arith.constant 0 : index
    %c0_212 = arith.constant 0 : index
    %381 = vector.load %arg2[%c0_211, %c0_212] : memref<256x256xbf16, #tpu.memory_space<vmem>>, vector<256x256xbf16>
    %cst_213 = arith.constant dense<0.000000e+00> : vector<8x256xf32>
    %382 = tpu.matmul %380, %381, %cst_213 {dimension_numbers = #tpu.dot_dimension_numbers<[1], [0], [0], [1], [0, 0, 1, 1], [], []>} : vector<8x256xbf16>, vector<256x256xbf16>, vector<8x256xf32> -> vector<8x256xf32>
    %c1_214 = arith.constant 1 : index
    %c0_215 = arith.constant 0 : index
    %383 = vector.load %arg4[%c1_214, %c0_215] : memref<4x256xf32, #tpu.memory_space<vmem>>, vector<1x256xf32>
    %384 = vector.broadcast %383 : vector<1x256xf32> to vector<8x256xf32>
    %385 = arith.addf %382, %384 : vector<8x256xf32>
    %386 = math.tanh %385 : vector<8x256xf32>
    %387 = arith.truncf %386 : vector<8x256xf32> to vector<8x256xbf16>
    %c0_216 = arith.constant 0 : index
    %c0_217 = arith.constant 0 : index
    %388 = vector.load %arg3[%c0_216, %c0_217] : memref<256x256xbf16, #tpu.memory_space<vmem>>, vector<256x256xbf16>
    %cst_218 = arith.constant dense<0.000000e+00> : vector<8x256xf32>
    %389 = tpu.matmul %387, %388, %cst_218 {dimension_numbers = #tpu.dot_dimension_numbers<[1], [0], [0], [1], [0, 0, 1, 1], [], []>} : vector<8x256xbf16>, vector<256x256xbf16>, vector<8x256xf32> -> vector<8x256xf32>
    %cst_219 = arith.constant 0.0994741544 : f32
    %390 = vector.broadcast %cst_219 : f32 to vector<8x256xf32>
    %391 = arith.mulf %390, %377 : vector<8x256xf32>
    %cst_220 = arith.constant 0.474480212 : f32
    %392 = vector.broadcast %cst_220 : f32 to vector<8x256xf32>
    %393 = arith.mulf %392, %389 : vector<8x256xf32>
    %394 = arith.addf %391, %393 : vector<8x256xf32>
    %cst_221 = arith.constant -1.000000e+00 : f32
    %cst_222 = arith.constant 1.000000e+00 : f32
    %395 = vector.broadcast %cst_221 : f32 to vector<8x256xf32>
    %396 = arith.maximumf %395, %394 : vector<8x256xf32>
    %397 = vector.broadcast %cst_222 : f32 to vector<8x256xf32>
    %398 = arith.minimumf %397, %396 : vector<8x256xf32>
    %399 = arith.subf %377, %398 : vector<8x256xf32>
    %cst_223 = arith.constant 0.664717376 : f32
    %400 = vector.broadcast %cst_223 : f32 to vector<8x256xf32>
    %401 = arith.mulf %399, %400 : vector<8x256xf32>
    %cst_224 = arith.constant -2.99120235 : f32
    %402 = vector.broadcast %cst_224 : f32 to vector<8x256xf32>
    %403 = arith.mulf %401, %402 : vector<8x256xf32>
    %404 = arith.addf %348, %403 : vector<8x256xf32>
    %cst_225 = arith.constant 0.162219599 : f32
    %405 = vector.broadcast %cst_225 : f32 to vector<8x256xf32>
    %406 = arith.mulf %350, %405 : vector<8x256xf32>
    %407 = arith.addf %404, %406 : vector<8x256xf32>
    %c14 = arith.constant 14 : index
    %c0_226 = arith.constant 0 : index
    %c0_227 = arith.constant 0 : index
    %408 = vector.load %arg1[%c14, %c0_226, %c0_227] : memref<27x8x256xf32, #tpu.memory_space<vmem>>, vector<1x8x256xf32>
    %409 = vector.shape_cast %408 : vector<1x8x256xf32> to vector<8x256xf32>
    %cst_228 = arith.constant 0.162457973 : f32
    %410 = vector.broadcast %cst_228 : f32 to vector<8x256xf32>
    %411 = arith.mulf %410, %409 : vector<8x256xf32>
    %412 = arith.addf %273, %411 : vector<8x256xf32>
    %413 = arith.select %2, %412, %407 : vector<8x256xi1>, vector<8x256xf32>
    %c15 = arith.constant 15 : index
    %c0_229 = arith.constant 0 : index
    %c0_230 = arith.constant 0 : index
    %414 = vector.load %arg1[%c15, %c0_229, %c0_230] : memref<27x8x256xf32, #tpu.memory_space<vmem>>, vector<1x8x256xf32>
    %415 = vector.shape_cast %414 : vector<1x8x256xf32> to vector<8x256xf32>
    %cst_231 = arith.constant 1.90211511 : f32
    %416 = vector.broadcast %cst_231 : f32 to vector<8x256xf32>
    %417 = arith.mulf %416, %413 : vector<8x256xf32>
    %418 = arith.truncf %417 : vector<8x256xf32> to vector<8x256xbf16>
    %c0_232 = arith.constant 0 : index
    %c0_233 = arith.constant 0 : index
    %419 = vector.load %arg2[%c0_232, %c0_233] : memref<256x256xbf16, #tpu.memory_space<vmem>>, vector<256x256xbf16>
    %cst_234 = arith.constant dense<0.000000e+00> : vector<8x256xf32>
    %420 = tpu.matmul %418, %419, %cst_234 {dimension_numbers = #tpu.dot_dimension_numbers<[1], [0], [0], [1], [0, 0, 1, 1], [], []>} : vector<8x256xbf16>, vector<256x256xbf16>, vector<8x256xf32> -> vector<8x256xf32>
    %c2_235 = arith.constant 2 : index
    %c0_236 = arith.constant 0 : index
    %421 = vector.load %arg4[%c2_235, %c0_236] : memref<4x256xf32, #tpu.memory_space<vmem>>, vector<1x256xf32>
    %422 = vector.broadcast %421 : vector<1x256xf32> to vector<8x256xf32>
    %423 = arith.addf %420, %422 : vector<8x256xf32>
    %424 = math.tanh %423 : vector<8x256xf32>
    %425 = arith.truncf %424 : vector<8x256xf32> to vector<8x256xbf16>
    %c0_237 = arith.constant 0 : index
    %c0_238 = arith.constant 0 : index
    %426 = vector.load %arg3[%c0_237, %c0_238] : memref<256x256xbf16, #tpu.memory_space<vmem>>, vector<256x256xbf16>
    %cst_239 = arith.constant dense<0.000000e+00> : vector<8x256xf32>
    %427 = tpu.matmul %425, %426, %cst_239 {dimension_numbers = #tpu.dot_dimension_numbers<[1], [0], [0], [1], [0, 0, 1, 1], [], []>} : vector<8x256xbf16>, vector<256x256xbf16>, vector<8x256xf32> -> vector<8x256xf32>
    %cst_240 = arith.constant 0.904510498 : f32
    %428 = vector.broadcast %cst_240 : f32 to vector<8x256xf32>
    %429 = arith.mulf %428, %413 : vector<8x256xf32>
    %cst_241 = arith.constant 0.154506892 : f32
    %430 = vector.broadcast %cst_241 : f32 to vector<8x256xf32>
    %431 = arith.mulf %430, %427 : vector<8x256xf32>
    %432 = arith.addf %429, %431 : vector<8x256xf32>
    %cst_242 = arith.constant -1.000000e+00 : f32
    %cst_243 = arith.constant 1.000000e+00 : f32
    %433 = vector.broadcast %cst_242 : f32 to vector<8x256xf32>
    %434 = arith.maximumf %433, %432 : vector<8x256xf32>
    %435 = vector.broadcast %cst_243 : f32 to vector<8x256xf32>
    %436 = arith.minimumf %435, %434 : vector<8x256xf32>
    %437 = arith.subf %413, %436 : vector<8x256xf32>
    %cst_244 = arith.constant 6.15543795 : f32
    %438 = vector.broadcast %cst_244 : f32 to vector<8x256xf32>
    %439 = arith.mulf %437, %438 : vector<8x256xf32>
    %cst_245 = arith.constant -0.0812259092 : f32
    %440 = vector.broadcast %cst_245 : f32 to vector<8x256xf32>
    %441 = arith.mulf %439, %440 : vector<8x256xf32>
    %442 = arith.addf %413, %441 : vector<8x256xf32>
    %cst_246 = arith.constant 1.97411668 : f32
    %443 = vector.broadcast %cst_246 : f32 to vector<8x256xf32>
    %444 = arith.mulf %443, %442 : vector<8x256xf32>
    %445 = arith.truncf %444 : vector<8x256xf32> to vector<8x256xbf16>
    %c0_247 = arith.constant 0 : index
    %c0_248 = arith.constant 0 : index
    %446 = vector.load %arg2[%c0_247, %c0_248] : memref<256x256xbf16, #tpu.memory_space<vmem>>, vector<256x256xbf16>
    %cst_249 = arith.constant dense<0.000000e+00> : vector<8x256xf32>
    %447 = tpu.matmul %445, %446, %cst_249 {dimension_numbers = #tpu.dot_dimension_numbers<[1], [0], [0], [1], [0, 0, 1, 1], [], []>} : vector<8x256xbf16>, vector<256x256xbf16>, vector<8x256xf32> -> vector<8x256xf32>
    %c3_250 = arith.constant 3 : index
    %c0_251 = arith.constant 0 : index
    %448 = vector.load %arg4[%c3_250, %c0_251] : memref<4x256xf32, #tpu.memory_space<vmem>>, vector<1x256xf32>
    %449 = vector.broadcast %448 : vector<1x256xf32> to vector<8x256xf32>
    %450 = arith.addf %447, %449 : vector<8x256xf32>
    %451 = math.tanh %450 : vector<8x256xf32>
    %452 = arith.truncf %451 : vector<8x256xf32> to vector<8x256xbf16>
    %c0_252 = arith.constant 0 : index
    %c0_253 = arith.constant 0 : index
    %453 = vector.load %arg3[%c0_252, %c0_253] : memref<256x256xbf16, #tpu.memory_space<vmem>>, vector<256x256xbf16>
    %cst_254 = arith.constant dense<0.000000e+00> : vector<8x256xf32>
    %454 = tpu.matmul %452, %453, %cst_254 {dimension_numbers = #tpu.dot_dimension_numbers<[1], [0], [0], [1], [0, 0, 1, 1], [], []>} : vector<8x256xbf16>, vector<256x256xbf16>, vector<8x256xf32> -> vector<8x256xf32>
    %cst_255 = arith.constant 0.974284172 : f32
    %455 = vector.broadcast %cst_255 : f32 to vector<8x256xf32>
    %456 = arith.mulf %455, %442 : vector<8x256xf32>
    %cst_256 = arith.constant 0.0801807865 : f32
    %457 = vector.broadcast %cst_256 : f32 to vector<8x256xf32>
    %458 = arith.mulf %457, %454 : vector<8x256xf32>
    %459 = arith.addf %456, %458 : vector<8x256xf32>
    %cst_257 = arith.constant -1.000000e+00 : f32
    %cst_258 = arith.constant 1.000000e+00 : f32
    %460 = vector.broadcast %cst_257 : f32 to vector<8x256xf32>
    %461 = arith.maximumf %460, %459 : vector<8x256xf32>
    %462 = vector.broadcast %cst_258 : f32 to vector<8x256xf32>
    %463 = arith.minimumf %462, %461 : vector<8x256xf32>
    %464 = arith.subf %442, %463 : vector<8x256xf32>
    %cst_259 = arith.constant 12.3104095 : f32
    %465 = vector.broadcast %cst_259 : f32 to vector<8x256xf32>
    %466 = arith.mulf %464, %465 : vector<8x256xf32>
    %cst_260 = arith.constant -0.162451819 : f32
    %467 = vector.broadcast %cst_260 : f32 to vector<8x256xf32>
    %468 = arith.mulf %466, %467 : vector<8x256xf32>
    %469 = arith.addf %413, %468 : vector<8x256xf32>
    %cst_261 = arith.constant 9.99981071E-4 : f32
    %470 = vector.broadcast %cst_261 : f32 to vector<8x256xf32>
    %471 = arith.mulf %415, %470 : vector<8x256xf32>
    %472 = arith.addf %469, %471 : vector<8x256xf32>
    %c16 = arith.constant 16 : index
    %c0_262 = arith.constant 0 : index
    %c0_263 = arith.constant 0 : index
    %473 = vector.load %arg1[%c16, %c0_262, %c0_263] : memref<27x8x256xf32, #tpu.memory_space<vmem>>, vector<1x8x256xf32>
    %474 = vector.shape_cast %473 : vector<1x8x256xf32> to vector<8x256xf32>
    %cst_264 = arith.constant 0.162454903 : f32
    %475 = vector.broadcast %cst_264 : f32 to vector<8x256xf32>
    %476 = arith.mulf %475, %474 : vector<8x256xf32>
    %477 = arith.addf %472, %476 : vector<8x256xf32>
    %478 = arith.select %2, %412, %477 : vector<8x256xi1>, vector<8x256xf32>
    %c17 = arith.constant 17 : index
    %c0_265 = arith.constant 0 : index
    %c0_266 = arith.constant 0 : index
    %479 = vector.load %arg1[%c17, %c0_265, %c0_266] : memref<27x8x256xf32, #tpu.memory_space<vmem>>, vector<1x8x256xf32>
    %480 = vector.shape_cast %479 : vector<1x8x256xf32> to vector<8x256xf32>
    %cst_267 = arith.constant 1.90211511 : f32
    %481 = vector.broadcast %cst_267 : f32 to vector<8x256xf32>
    %482 = arith.mulf %481, %478 : vector<8x256xf32>
    %483 = arith.truncf %482 : vector<8x256xf32> to vector<8x256xbf16>
    %c0_268 = arith.constant 0 : index
    %c0_269 = arith.constant 0 : index
    %484 = vector.load %arg2[%c0_268, %c0_269] : memref<256x256xbf16, #tpu.memory_space<vmem>>, vector<256x256xbf16>
    %cst_270 = arith.constant dense<0.000000e+00> : vector<8x256xf32>
    %485 = tpu.matmul %483, %484, %cst_270 {dimension_numbers = #tpu.dot_dimension_numbers<[1], [0], [0], [1], [0, 0, 1, 1], [], []>} : vector<8x256xbf16>, vector<256x256xbf16>, vector<8x256xf32> -> vector<8x256xf32>
    %c2_271 = arith.constant 2 : index
    %c0_272 = arith.constant 0 : index
    %486 = vector.load %arg4[%c2_271, %c0_272] : memref<4x256xf32, #tpu.memory_space<vmem>>, vector<1x256xf32>
    %487 = vector.broadcast %486 : vector<1x256xf32> to vector<8x256xf32>
    %488 = arith.addf %485, %487 : vector<8x256xf32>
    %489 = math.tanh %488 : vector<8x256xf32>
    %490 = arith.truncf %489 : vector<8x256xf32> to vector<8x256xbf16>
    %c0_273 = arith.constant 0 : index
    %c0_274 = arith.constant 0 : index
    %491 = vector.load %arg3[%c0_273, %c0_274] : memref<256x256xbf16, #tpu.memory_space<vmem>>, vector<256x256xbf16>
    %cst_275 = arith.constant dense<0.000000e+00> : vector<8x256xf32>
    %492 = tpu.matmul %490, %491, %cst_275 {dimension_numbers = #tpu.dot_dimension_numbers<[1], [0], [0], [1], [0, 0, 1, 1], [], []>} : vector<8x256xbf16>, vector<256x256xbf16>, vector<8x256xf32> -> vector<8x256xf32>
    %cst_276 = arith.constant 0.904510498 : f32
    %493 = vector.broadcast %cst_276 : f32 to vector<8x256xf32>
    %494 = arith.mulf %493, %478 : vector<8x256xf32>
    %cst_277 = arith.constant 0.154506892 : f32
    %495 = vector.broadcast %cst_277 : f32 to vector<8x256xf32>
    %496 = arith.mulf %495, %492 : vector<8x256xf32>
    %497 = arith.addf %494, %496 : vector<8x256xf32>
    %cst_278 = arith.constant -1.000000e+00 : f32
    %cst_279 = arith.constant 1.000000e+00 : f32
    %498 = vector.broadcast %cst_278 : f32 to vector<8x256xf32>
    %499 = arith.maximumf %498, %497 : vector<8x256xf32>
    %500 = vector.broadcast %cst_279 : f32 to vector<8x256xf32>
    %501 = arith.minimumf %500, %499 : vector<8x256xf32>
    %502 = arith.subf %478, %501 : vector<8x256xf32>
    %cst_280 = arith.constant 6.15543795 : f32
    %503 = vector.broadcast %cst_280 : f32 to vector<8x256xf32>
    %504 = arith.mulf %502, %503 : vector<8x256xf32>
    %cst_281 = arith.constant -0.0812259092 : f32
    %505 = vector.broadcast %cst_281 : f32 to vector<8x256xf32>
    %506 = arith.mulf %504, %505 : vector<8x256xf32>
    %507 = arith.addf %478, %506 : vector<8x256xf32>
    %cst_282 = arith.constant 1.97411668 : f32
    %508 = vector.broadcast %cst_282 : f32 to vector<8x256xf32>
    %509 = arith.mulf %508, %507 : vector<8x256xf32>
    %510 = arith.truncf %509 : vector<8x256xf32> to vector<8x256xbf16>
    %c0_283 = arith.constant 0 : index
    %c0_284 = arith.constant 0 : index
    %511 = vector.load %arg2[%c0_283, %c0_284] : memref<256x256xbf16, #tpu.memory_space<vmem>>, vector<256x256xbf16>
    %cst_285 = arith.constant dense<0.000000e+00> : vector<8x256xf32>
    %512 = tpu.matmul %510, %511, %cst_285 {dimension_numbers = #tpu.dot_dimension_numbers<[1], [0], [0], [1], [0, 0, 1, 1], [], []>} : vector<8x256xbf16>, vector<256x256xbf16>, vector<8x256xf32> -> vector<8x256xf32>
    %c3_286 = arith.constant 3 : index
    %c0_287 = arith.constant 0 : index
    %513 = vector.load %arg4[%c3_286, %c0_287] : memref<4x256xf32, #tpu.memory_space<vmem>>, vector<1x256xf32>
    %514 = vector.broadcast %513 : vector<1x256xf32> to vector<8x256xf32>
    %515 = arith.addf %512, %514 : vector<8x256xf32>
    %516 = math.tanh %515 : vector<8x256xf32>
    %517 = arith.truncf %516 : vector<8x256xf32> to vector<8x256xbf16>
    %c0_288 = arith.constant 0 : index
    %c0_289 = arith.constant 0 : index
    %518 = vector.load %arg3[%c0_288, %c0_289] : memref<256x256xbf16, #tpu.memory_space<vmem>>, vector<256x256xbf16>
    %cst_290 = arith.constant dense<0.000000e+00> : vector<8x256xf32>
    %519 = tpu.matmul %517, %518, %cst_290 {dimension_numbers = #tpu.dot_dimension_numbers<[1], [0], [0], [1], [0, 0, 1, 1], [], []>} : vector<8x256xbf16>, vector<256x256xbf16>, vector<8x256xf32> -> vector<8x256xf32>
    %cst_291 = arith.constant 0.974284172 : f32
    %520 = vector.broadcast %cst_291 : f32 to vector<8x256xf32>
    %521 = arith.mulf %520, %507 : vector<8x256xf32>
    %cst_292 = arith.constant 0.0801807865 : f32
    %522 = vector.broadcast %cst_292 : f32 to vector<8x256xf32>
    %523 = arith.mulf %522, %519 : vector<8x256xf32>
    %524 = arith.addf %521, %523 : vector<8x256xf32>
    %cst_293 = arith.constant -1.000000e+00 : f32
    %cst_294 = arith.constant 1.000000e+00 : f32
    %525 = vector.broadcast %cst_293 : f32 to vector<8x256xf32>
    %526 = arith.maximumf %525, %524 : vector<8x256xf32>
    %527 = vector.broadcast %cst_294 : f32 to vector<8x256xf32>
    %528 = arith.minimumf %527, %526 : vector<8x256xf32>
    %529 = arith.subf %507, %528 : vector<8x256xf32>
    %cst_295 = arith.constant 12.3104095 : f32
    %530 = vector.broadcast %cst_295 : f32 to vector<8x256xf32>
    %531 = arith.mulf %529, %530 : vector<8x256xf32>
    %cst_296 = arith.constant -0.162451819 : f32
    %532 = vector.broadcast %cst_296 : f32 to vector<8x256xf32>
    %533 = arith.mulf %531, %532 : vector<8x256xf32>
    %534 = arith.addf %478, %533 : vector<8x256xf32>
    %cst_297 = arith.constant 9.99981071E-4 : f32
    %535 = vector.broadcast %cst_297 : f32 to vector<8x256xf32>
    %536 = arith.mulf %480, %535 : vector<8x256xf32>
    %537 = arith.addf %534, %536 : vector<8x256xf32>
    %538 = vector.extract_strided_slice %537 {offsets = [0, 128], sizes = [8, 128], strides = [1, 1]} : vector<8x256xf32> to vector<8x128xf32>
    %c0_298 = arith.constant 0 : index
    %c128 = arith.constant 128 : index
    %539 = vector.load %arg5[%c0_298, %c128] : memref<8x384xf32, #tpu.memory_space<vmem>>, vector<8x128xf32>
    tpu.vector_store %arg5[%c0_298, %c128], %538 {strides = array<i32>} : memref<8x384xf32, #tpu.memory_space<vmem>>, vector<8x128xf32>,
    %540 = tpu.concatenate %538, %3 in 1 : vector<8x128xf32>, vector<8x128xf32> -> vector<8x256xf32>
    %c18 = arith.constant 18 : index
    %c0_299 = arith.constant 0 : index
    %c0_300 = arith.constant 0 : index
    %541 = vector.load %arg1[%c18, %c0_299, %c0_300] : memref<27x8x256xf32, #tpu.memory_space<vmem>>, vector<1x8x256xf32>
    %542 = vector.shape_cast %541 : vector<1x8x256xf32> to vector<8x256xf32>
    %cst_301 = arith.constant 3.000000e+00 : f32
    %543 = vector.broadcast %cst_301 : f32 to vector<8x256xf32>
    %544 = arith.mulf %543, %542 : vector<8x256xf32>
    %c19 = arith.constant 19 : index
    %c0_302 = arith.constant 0 : index
    %c0_303 = arith.constant 0 : index
    %545 = vector.load %arg1[%c19, %c0_302, %c0_303] : memref<27x8x256xf32, #tpu.memory_space<vmem>>, vector<1x8x256xf32>
    %546 = vector.shape_cast %545 : vector<1x8x256xf32> to vector<8x256xf32>
    %cst_304 = arith.constant 3.000000e+00 : f32
    %547 = vector.broadcast %cst_304 : f32 to vector<8x256xf32>
    %548 = arith.mulf %547, %546 : vector<8x256xf32>
    %549 = arith.addf %540, %548 : vector<8x256xf32>
    %550 = arith.select %2, %549, %544 : vector<8x256xi1>, vector<8x256xf32>
    %c20 = arith.constant 20 : index
    %c0_305 = arith.constant 0 : index
    %c0_306 = arith.constant 0 : index
    %551 = vector.load %arg1[%c20, %c0_305, %c0_306] : memref<27x8x256xf32, #tpu.memory_space<vmem>>, vector<1x8x256xf32>
    %552 = vector.shape_cast %551 : vector<1x8x256xf32> to vector<8x256xf32>
    %cst_307 = arith.constant 0.328797966 : f32
    %553 = vector.broadcast %cst_307 : f32 to vector<8x256xf32>
    %554 = arith.mulf %553, %550 : vector<8x256xf32>
    %555 = arith.truncf %554 : vector<8x256xf32> to vector<8x256xbf16>
    %c0_308 = arith.constant 0 : index
    %c0_309 = arith.constant 0 : index
    %556 = vector.load %arg2[%c0_308, %c0_309] : memref<256x256xbf16, #tpu.memory_space<vmem>>, vector<256x256xbf16>
    %cst_310 = arith.constant dense<0.000000e+00> : vector<8x256xf32>
    %557 = tpu.matmul %555, %556, %cst_310 {dimension_numbers = #tpu.dot_dimension_numbers<[1], [0], [0], [1], [0, 0, 1, 1], [], []>} : vector<8x256xbf16>, vector<256x256xbf16>, vector<8x256xf32> -> vector<8x256xf32>
    %c0_311 = arith.constant 0 : index
    %c0_312 = arith.constant 0 : index
    %558 = vector.load %arg4[%c0_311, %c0_312] : memref<4x256xf32, #tpu.memory_space<vmem>>, vector<1x256xf32>
    %559 = vector.broadcast %558 : vector<1x256xf32> to vector<8x256xf32>
    %560 = arith.addf %557, %559 : vector<8x256xf32>
    %561 = math.tanh %560 : vector<8x256xf32>
    %562 = arith.truncf %561 : vector<8x256xf32> to vector<8x256xbf16>
    %c0_313 = arith.constant 0 : index
    %c0_314 = arith.constant 0 : index
    %563 = vector.load %arg3[%c0_313, %c0_314] : memref<256x256xbf16, #tpu.memory_space<vmem>>, vector<256x256xbf16>
    %cst_315 = arith.constant dense<0.000000e+00> : vector<8x256xf32>
    %564 = tpu.matmul %562, %563, %cst_315 {dimension_numbers = #tpu.dot_dimension_numbers<[1], [0], [0], [1], [0, 0, 1, 1], [], []>} : vector<8x256xbf16>, vector<256x256xbf16>, vector<8x256xf32> -> vector<8x256xf32>
    %cst_316 = arith.constant 0.0270270277 : f32
    %565 = vector.broadcast %cst_316 : f32 to vector<8x256xf32>
    %566 = arith.mulf %565, %550 : vector<8x256xf32>
    %cst_317 = arith.constant 0.493196964 : f32
    %567 = vector.broadcast %cst_317 : f32 to vector<8x256xf32>
    %568 = arith.mulf %567, %564 : vector<8x256xf32>
    %569 = arith.addf %566, %568 : vector<8x256xf32>
    %cst_318 = arith.constant -1.000000e+00 : f32
    %cst_319 = arith.constant 1.000000e+00 : f32
    %570 = vector.broadcast %cst_318 : f32 to vector<8x256xf32>
    %571 = arith.maximumf %570, %569 : vector<8x256xf32>
    %572 = vector.broadcast %cst_319 : f32 to vector<8x256xf32>
    %573 = arith.minimumf %572, %571 : vector<8x256xf32>
    %574 = arith.subf %550, %573 : vector<8x256xf32>
    %cst_320 = arith.constant 0.333333343 : f32
    %575 = vector.broadcast %cst_320 : f32 to vector<8x256xf32>
    %576 = arith.mulf %574, %575 : vector<8x256xf32>
    %cst_321 = arith.constant -1.49560118 : f32
    %577 = vector.broadcast %cst_321 : f32 to vector<8x256xf32>
    %578 = arith.mulf %576, %577 : vector<8x256xf32>
    %579 = arith.addf %550, %578 : vector<8x256xf32>
    %cst_322 = arith.constant 0.630790472 : f32
    %580 = vector.broadcast %cst_322 : f32 to vector<8x256xf32>
    %581 = arith.mulf %580, %579 : vector<8x256xf32>
    %582 = arith.truncf %581 : vector<8x256xf32> to vector<8x256xbf16>
    %c0_323 = arith.constant 0 : index
    %c0_324 = arith.constant 0 : index
    %583 = vector.load %arg2[%c0_323, %c0_324] : memref<256x256xbf16, #tpu.memory_space<vmem>>, vector<256x256xbf16>
    %cst_325 = arith.constant dense<0.000000e+00> : vector<8x256xf32>
    %584 = tpu.matmul %582, %583, %cst_325 {dimension_numbers = #tpu.dot_dimension_numbers<[1], [0], [0], [1], [0, 0, 1, 1], [], []>} : vector<8x256xbf16>, vector<256x256xbf16>, vector<8x256xf32> -> vector<8x256xf32>
    %c1_326 = arith.constant 1 : index
    %c0_327 = arith.constant 0 : index
    %585 = vector.load %arg4[%c1_326, %c0_327] : memref<4x256xf32, #tpu.memory_space<vmem>>, vector<1x256xf32>
    %586 = vector.broadcast %585 : vector<1x256xf32> to vector<8x256xf32>
    %587 = arith.addf %584, %586 : vector<8x256xf32>
    %588 = math.tanh %587 : vector<8x256xf32>
    %589 = arith.truncf %588 : vector<8x256xf32> to vector<8x256xbf16>
    %c0_328 = arith.constant 0 : index
    %c0_329 = arith.constant 0 : index
    %590 = vector.load %arg3[%c0_328, %c0_329] : memref<256x256xbf16, #tpu.memory_space<vmem>>, vector<256x256xbf16>
    %cst_330 = arith.constant dense<0.000000e+00> : vector<8x256xf32>
    %591 = tpu.matmul %589, %590, %cst_330 {dimension_numbers = #tpu.dot_dimension_numbers<[1], [0], [0], [1], [0, 0, 1, 1], [], []>} : vector<8x256xbf16>, vector<256x256xbf16>, vector<8x256xf32> -> vector<8x256xf32>
    %cst_331 = arith.constant 0.0994741544 : f32
    %592 = vector.broadcast %cst_331 : f32 to vector<8x256xf32>
    %593 = arith.mulf %592, %579 : vector<8x256xf32>
    %cst_332 = arith.constant 0.474480212 : f32
    %594 = vector.broadcast %cst_332 : f32 to vector<8x256xf32>
    %595 = arith.mulf %594, %591 : vector<8x256xf32>
    %596 = arith.addf %593, %595 : vector<8x256xf32>
    %cst_333 = arith.constant -1.000000e+00 : f32
    %cst_334 = arith.constant 1.000000e+00 : f32
    %597 = vector.broadcast %cst_333 : f32 to vector<8x256xf32>
    %598 = arith.maximumf %597, %596 : vector<8x256xf32>
    %599 = vector.broadcast %cst_334 : f32 to vector<8x256xf32>
    %600 = arith.minimumf %599, %598 : vector<8x256xf32>
    %601 = arith.subf %579, %600 : vector<8x256xf32>
    %cst_335 = arith.constant 0.664717376 : f32
    %602 = vector.broadcast %cst_335 : f32 to vector<8x256xf32>
    %603 = arith.mulf %601, %602 : vector<8x256xf32>
    %cst_336 = arith.constant -2.99120235 : f32
    %604 = vector.broadcast %cst_336 : f32 to vector<8x256xf32>
    %605 = arith.mulf %603, %604 : vector<8x256xf32>
    %606 = arith.addf %550, %605 : vector<8x256xf32>
    %cst_337 = arith.constant 0.162219599 : f32
    %607 = vector.broadcast %cst_337 : f32 to vector<8x256xf32>
    %608 = arith.mulf %552, %607 : vector<8x256xf32>
    %609 = arith.addf %606, %608 : vector<8x256xf32>
    %c21 = arith.constant 21 : index
    %c0_338 = arith.constant 0 : index
    %c0_339 = arith.constant 0 : index
    %610 = vector.load %arg1[%c21, %c0_338, %c0_339] : memref<27x8x256xf32, #tpu.memory_space<vmem>>, vector<1x8x256xf32>
    %611 = vector.shape_cast %610 : vector<1x8x256xf32> to vector<8x256xf32>
    %cst_340 = arith.constant 2.99559808 : f32
    %612 = vector.broadcast %cst_340 : f32 to vector<8x256xf32>
    %613 = arith.mulf %612, %611 : vector<8x256xf32>
    %614 = arith.addf %609, %613 : vector<8x256xf32>
    %615 = arith.select %2, %549, %614 : vector<8x256xi1>, vector<8x256xf32>
    %c22 = arith.constant 22 : index
    %c0_341 = arith.constant 0 : index
    %c0_342 = arith.constant 0 : index
    %616 = vector.load %arg1[%c22, %c0_341, %c0_342] : memref<27x8x256xf32, #tpu.memory_space<vmem>>, vector<1x8x256xf32>
    %617 = vector.shape_cast %616 : vector<1x8x256xf32> to vector<8x256xf32>
    %cst_343 = arith.constant 0.328797966 : f32
    %618 = vector.broadcast %cst_343 : f32 to vector<8x256xf32>
    %619 = arith.mulf %618, %615 : vector<8x256xf32>
    %620 = arith.truncf %619 : vector<8x256xf32> to vector<8x256xbf16>
    %c0_344 = arith.constant 0 : index
    %c0_345 = arith.constant 0 : index
    %621 = vector.load %arg2[%c0_344, %c0_345] : memref<256x256xbf16, #tpu.memory_space<vmem>>, vector<256x256xbf16>
    %cst_346 = arith.constant dense<0.000000e+00> : vector<8x256xf32>
    %622 = tpu.matmul %620, %621, %cst_346 {dimension_numbers = #tpu.dot_dimension_numbers<[1], [0], [0], [1], [0, 0, 1, 1], [], []>} : vector<8x256xbf16>, vector<256x256xbf16>, vector<8x256xf32> -> vector<8x256xf32>
    %c0_347 = arith.constant 0 : index
    %c0_348 = arith.constant 0 : index
    %623 = vector.load %arg4[%c0_347, %c0_348] : memref<4x256xf32, #tpu.memory_space<vmem>>, vector<1x256xf32>
    %624 = vector.broadcast %623 : vector<1x256xf32> to vector<8x256xf32>
    %625 = arith.addf %622, %624 : vector<8x256xf32>
    %626 = math.tanh %625 : vector<8x256xf32>
    %627 = arith.truncf %626 : vector<8x256xf32> to vector<8x256xbf16>
    %c0_349 = arith.constant 0 : index
    %c0_350 = arith.constant 0 : index
    %628 = vector.load %arg3[%c0_349, %c0_350] : memref<256x256xbf16, #tpu.memory_space<vmem>>, vector<256x256xbf16>
    %cst_351 = arith.constant dense<0.000000e+00> : vector<8x256xf32>
    %629 = tpu.matmul %627, %628, %cst_351 {dimension_numbers = #tpu.dot_dimension_numbers<[1], [0], [0], [1], [0, 0, 1, 1], [], []>} : vector<8x256xbf16>, vector<256x256xbf16>, vector<8x256xf32> -> vector<8x256xf32>
    %cst_352 = arith.constant 0.0270270277 : f32
    %630 = vector.broadcast %cst_352 : f32 to vector<8x256xf32>
    %631 = arith.mulf %630, %615 : vector<8x256xf32>
    %cst_353 = arith.constant 0.493196964 : f32
    %632 = vector.broadcast %cst_353 : f32 to vector<8x256xf32>
    %633 = arith.mulf %632, %629 : vector<8x256xf32>
    %634 = arith.addf %631, %633 : vector<8x256xf32>
    %cst_354 = arith.constant -1.000000e+00 : f32
    %cst_355 = arith.constant 1.000000e+00 : f32
    %635 = vector.broadcast %cst_354 : f32 to vector<8x256xf32>
    %636 = arith.maximumf %635, %634 : vector<8x256xf32>
    %637 = vector.broadcast %cst_355 : f32 to vector<8x256xf32>
    %638 = arith.minimumf %637, %636 : vector<8x256xf32>
    %639 = arith.subf %615, %638 : vector<8x256xf32>
    %cst_356 = arith.constant 0.333333343 : f32
    %640 = vector.broadcast %cst_356 : f32 to vector<8x256xf32>
    %641 = arith.mulf %639, %640 : vector<8x256xf32>
    %cst_357 = arith.constant -1.49560118 : f32
    %642 = vector.broadcast %cst_357 : f32 to vector<8x256xf32>
    %643 = arith.mulf %641, %642 : vector<8x256xf32>
    %644 = arith.addf %615, %643 : vector<8x256xf32>
    %cst_358 = arith.constant 0.630790472 : f32
    %645 = vector.broadcast %cst_358 : f32 to vector<8x256xf32>
    %646 = arith.mulf %645, %644 : vector<8x256xf32>
    %647 = arith.truncf %646 : vector<8x256xf32> to vector<8x256xbf16>
    %c0_359 = arith.constant 0 : index
    %c0_360 = arith.constant 0 : index
    %648 = vector.load %arg2[%c0_359, %c0_360] : memref<256x256xbf16, #tpu.memory_space<vmem>>, vector<256x256xbf16>
    %cst_361 = arith.constant dense<0.000000e+00> : vector<8x256xf32>
    %649 = tpu.matmul %647, %648, %cst_361 {dimension_numbers = #tpu.dot_dimension_numbers<[1], [0], [0], [1], [0, 0, 1, 1], [], []>} : vector<8x256xbf16>, vector<256x256xbf16>, vector<8x256xf32> -> vector<8x256xf32>
    %c1_362 = arith.constant 1 : index
    %c0_363 = arith.constant 0 : index
    %650 = vector.load %arg4[%c1_362, %c0_363] : memref<4x256xf32, #tpu.memory_space<vmem>>, vector<1x256xf32>
    %651 = vector.broadcast %650 : vector<1x256xf32> to vector<8x256xf32>
    %652 = arith.addf %649, %651 : vector<8x256xf32>
    %653 = math.tanh %652 : vector<8x256xf32>
    %654 = arith.truncf %653 : vector<8x256xf32> to vector<8x256xbf16>
    %c0_364 = arith.constant 0 : index
    %c0_365 = arith.constant 0 : index
    %655 = vector.load %arg3[%c0_364, %c0_365] : memref<256x256xbf16, #tpu.memory_space<vmem>>, vector<256x256xbf16>
    %cst_366 = arith.constant dense<0.000000e+00> : vector<8x256xf32>
    %656 = tpu.matmul %654, %655, %cst_366 {dimension_numbers = #tpu.dot_dimension_numbers<[1], [0], [0], [1], [0, 0, 1, 1], [], []>} : vector<8x256xbf16>, vector<256x256xbf16>, vector<8x256xf32> -> vector<8x256xf32>
    %cst_367 = arith.constant 0.0994741544 : f32
    %657 = vector.broadcast %cst_367 : f32 to vector<8x256xf32>
    %658 = arith.mulf %657, %644 : vector<8x256xf32>
    %cst_368 = arith.constant 0.474480212 : f32
    %659 = vector.broadcast %cst_368 : f32 to vector<8x256xf32>
    %660 = arith.mulf %659, %656 : vector<8x256xf32>
    %661 = arith.addf %658, %660 : vector<8x256xf32>
    %cst_369 = arith.constant -1.000000e+00 : f32
    %cst_370 = arith.constant 1.000000e+00 : f32
    %662 = vector.broadcast %cst_369 : f32 to vector<8x256xf32>
    %663 = arith.maximumf %662, %661 : vector<8x256xf32>
    %664 = vector.broadcast %cst_370 : f32 to vector<8x256xf32>
    %665 = arith.minimumf %664, %663 : vector<8x256xf32>
    %666 = arith.subf %644, %665 : vector<8x256xf32>
    %cst_371 = arith.constant 0.664717376 : f32
    %667 = vector.broadcast %cst_371 : f32 to vector<8x256xf32>
    %668 = arith.mulf %666, %667 : vector<8x256xf32>
    %cst_372 = arith.constant -2.99120235 : f32
    %669 = vector.broadcast %cst_372 : f32 to vector<8x256xf32>
    %670 = arith.mulf %668, %669 : vector<8x256xf32>
    %671 = arith.addf %615, %670 : vector<8x256xf32>
    %cst_373 = arith.constant 0.162219599 : f32
    %672 = vector.broadcast %cst_373 : f32 to vector<8x256xf32>
    %673 = arith.mulf %617, %672 : vector<8x256xf32>
    %674 = arith.addf %671, %673 : vector<8x256xf32>
    %c23 = arith.constant 23 : index
    %c0_374 = arith.constant 0 : index
    %c0_375 = arith.constant 0 : index
    %675 = vector.load %arg1[%c23, %c0_374, %c0_375] : memref<27x8x256xf32, #tpu.memory_space<vmem>>, vector<1x8x256xf32>
    %676 = vector.shape_cast %675 : vector<1x8x256xf32> to vector<8x256xf32>
    %cst_376 = arith.constant 0.162457973 : f32
    %677 = vector.broadcast %cst_376 : f32 to vector<8x256xf32>
    %678 = arith.mulf %677, %676 : vector<8x256xf32>
    %679 = arith.addf %540, %678 : vector<8x256xf32>
    %680 = arith.select %2, %679, %674 : vector<8x256xi1>, vector<8x256xf32>
    %c24 = arith.constant 24 : index
    %c0_377 = arith.constant 0 : index
    %c0_378 = arith.constant 0 : index
    %681 = vector.load %arg1[%c24, %c0_377, %c0_378] : memref<27x8x256xf32, #tpu.memory_space<vmem>>, vector<1x8x256xf32>
    %682 = vector.shape_cast %681 : vector<1x8x256xf32> to vector<8x256xf32>
    %cst_379 = arith.constant 1.90211511 : f32
    %683 = vector.broadcast %cst_379 : f32 to vector<8x256xf32>
    %684 = arith.mulf %683, %680 : vector<8x256xf32>
    %685 = arith.truncf %684 : vector<8x256xf32> to vector<8x256xbf16>
    %c0_380 = arith.constant 0 : index
    %c0_381 = arith.constant 0 : index
    %686 = vector.load %arg2[%c0_380, %c0_381] : memref<256x256xbf16, #tpu.memory_space<vmem>>, vector<256x256xbf16>
    %cst_382 = arith.constant dense<0.000000e+00> : vector<8x256xf32>
    %687 = tpu.matmul %685, %686, %cst_382 {dimension_numbers = #tpu.dot_dimension_numbers<[1], [0], [0], [1], [0, 0, 1, 1], [], []>} : vector<8x256xbf16>, vector<256x256xbf16>, vector<8x256xf32> -> vector<8x256xf32>
    %c2_383 = arith.constant 2 : index
    %c0_384 = arith.constant 0 : index
    %688 = vector.load %arg4[%c2_383, %c0_384] : memref<4x256xf32, #tpu.memory_space<vmem>>, vector<1x256xf32>
    %689 = vector.broadcast %688 : vector<1x256xf32> to vector<8x256xf32>
    %690 = arith.addf %687, %689 : vector<8x256xf32>
    %691 = math.tanh %690 : vector<8x256xf32>
    %692 = arith.truncf %691 : vector<8x256xf32> to vector<8x256xbf16>
    %c0_385 = arith.constant 0 : index
    %c0_386 = arith.constant 0 : index
    %693 = vector.load %arg3[%c0_385, %c0_386] : memref<256x256xbf16, #tpu.memory_space<vmem>>, vector<256x256xbf16>
    %cst_387 = arith.constant dense<0.000000e+00> : vector<8x256xf32>
    %694 = tpu.matmul %692, %693, %cst_387 {dimension_numbers = #tpu.dot_dimension_numbers<[1], [0], [0], [1], [0, 0, 1, 1], [], []>} : vector<8x256xbf16>, vector<256x256xbf16>, vector<8x256xf32> -> vector<8x256xf32>
    %cst_388 = arith.constant 0.904510498 : f32
    %695 = vector.broadcast %cst_388 : f32 to vector<8x256xf32>
    %696 = arith.mulf %695, %680 : vector<8x256xf32>
    %cst_389 = arith.constant 0.154506892 : f32
    %697 = vector.broadcast %cst_389 : f32 to vector<8x256xf32>
    %698 = arith.mulf %697, %694 : vector<8x256xf32>
    %699 = arith.addf %696, %698 : vector<8x256xf32>
    %cst_390 = arith.constant -1.000000e+00 : f32
    %cst_391 = arith.constant 1.000000e+00 : f32
    %700 = vector.broadcast %cst_390 : f32 to vector<8x256xf32>
    %701 = arith.maximumf %700, %699 : vector<8x256xf32>
    %702 = vector.broadcast %cst_391 : f32 to vector<8x256xf32>
    %703 = arith.minimumf %702, %701 : vector<8x256xf32>
    %704 = arith.subf %680, %703 : vector<8x256xf32>
    %cst_392 = arith.constant 6.15543795 : f32
    %705 = vector.broadcast %cst_392 : f32 to vector<8x256xf32>
    %706 = arith.mulf %704, %705 : vector<8x256xf32>
    %cst_393 = arith.constant -0.0812259092 : f32
    %707 = vector.broadcast %cst_393 : f32 to vector<8x256xf32>
    %708 = arith.mulf %706, %707 : vector<8x256xf32>
    %709 = arith.addf %680, %708 : vector<8x256xf32>
    %cst_394 = arith.constant 1.97411668 : f32
    %710 = vector.broadcast %cst_394 : f32 to vector<8x256xf32>
    %711 = arith.mulf %710, %709 : vector<8x256xf32>
    %712 = arith.truncf %711 : vector<8x256xf32> to vector<8x256xbf16>
    %c0_395 = arith.constant 0 : index
    %c0_396 = arith.constant 0 : index
    %713 = vector.load %arg2[%c0_395, %c0_396] : memref<256x256xbf16, #tpu.memory_space<vmem>>, vector<256x256xbf16>
    %cst_397 = arith.constant dense<0.000000e+00> : vector<8x256xf32>
    %714 = tpu.matmul %712, %713, %cst_397 {dimension_numbers = #tpu.dot_dimension_numbers<[1], [0], [0], [1], [0, 0, 1, 1], [], []>} : vector<8x256xbf16>, vector<256x256xbf16>, vector<8x256xf32> -> vector<8x256xf32>
    %c3_398 = arith.constant 3 : index
    %c0_399 = arith.constant 0 : index
    %715 = vector.load %arg4[%c3_398, %c0_399] : memref<4x256xf32, #tpu.memory_space<vmem>>, vector<1x256xf32>
    %716 = vector.broadcast %715 : vector<1x256xf32> to vector<8x256xf32>
    %717 = arith.addf %714, %716 : vector<8x256xf32>
    %718 = math.tanh %717 : vector<8x256xf32>
    %719 = arith.truncf %718 : vector<8x256xf32> to vector<8x256xbf16>
    %c0_400 = arith.constant 0 : index
    %c0_401 = arith.constant 0 : index
    %720 = vector.load %arg3[%c0_400, %c0_401] : memref<256x256xbf16, #tpu.memory_space<vmem>>, vector<256x256xbf16>
    %cst_402 = arith.constant dense<0.000000e+00> : vector<8x256xf32>
    %721 = tpu.matmul %719, %720, %cst_402 {dimension_numbers = #tpu.dot_dimension_numbers<[1], [0], [0], [1], [0, 0, 1, 1], [], []>} : vector<8x256xbf16>, vector<256x256xbf16>, vector<8x256xf32> -> vector<8x256xf32>
    %cst_403 = arith.constant 0.974284172 : f32
    %722 = vector.broadcast %cst_403 : f32 to vector<8x256xf32>
    %723 = arith.mulf %722, %709 : vector<8x256xf32>
    %cst_404 = arith.constant 0.0801807865 : f32
    %724 = vector.broadcast %cst_404 : f32 to vector<8x256xf32>
    %725 = arith.mulf %724, %721 : vector<8x256xf32>
    %726 = arith.addf %723, %725 : vector<8x256xf32>
    %cst_405 = arith.constant -1.000000e+00 : f32
    %cst_406 = arith.constant 1.000000e+00 : f32
    %727 = vector.broadcast %cst_405 : f32 to vector<8x256xf32>
    %728 = arith.maximumf %727, %726 : vector<8x256xf32>
    %729 = vector.broadcast %cst_406 : f32 to vector<8x256xf32>
    %730 = arith.minimumf %729, %728 : vector<8x256xf32>
    %731 = arith.subf %709, %730 : vector<8x256xf32>
    %cst_407 = arith.constant 12.3104095 : f32
    %732 = vector.broadcast %cst_407 : f32 to vector<8x256xf32>
    %733 = arith.mulf %731, %732 : vector<8x256xf32>
    %cst_408 = arith.constant -0.162451819 : f32
    %734 = vector.broadcast %cst_408 : f32 to vector<8x256xf32>
    %735 = arith.mulf %733, %734 : vector<8x256xf32>
    %736 = arith.addf %680, %735 : vector<8x256xf32>
    %cst_409 = arith.constant 9.99981071E-4 : f32
    %737 = vector.broadcast %cst_409 : f32 to vector<8x256xf32>
    %738 = arith.mulf %682, %737 : vector<8x256xf32>
    %739 = arith.addf %736, %738 : vector<8x256xf32>
    %c25 = arith.constant 25 : index
    %c0_410 = arith.constant 0 : index
    %c0_411 = arith.constant 0 : index
    %740 = vector.load %arg1[%c25, %c0_410, %c0_411] : memref<27x8x256xf32, #tpu.memory_space<vmem>>, vector<1x8x256xf32>
    %741 = vector.shape_cast %740 : vector<1x8x256xf32> to vector<8x256xf32>
    %cst_412 = arith.constant 0.162454903 : f32
    %742 = vector.broadcast %cst_412 : f32 to vector<8x256xf32>
    %743 = arith.mulf %742, %741 : vector<8x256xf32>
    %744 = arith.addf %739, %743 : vector<8x256xf32>
    %745 = arith.select %2, %679, %744 : vector<8x256xi1>, vector<8x256xf32>
    %c26 = arith.constant 26 : index
    %c0_413 = arith.constant 0 : index
    %c0_414 = arith.constant 0 : index
    %746 = vector.load %arg1[%c26, %c0_413, %c0_414] : memref<27x8x256xf32, #tpu.memory_space<vmem>>, vector<1x8x256xf32>
    %747 = vector.shape_cast %746 : vector<1x8x256xf32> to vector<8x256xf32>
    %cst_415 = arith.constant 1.90211511 : f32
    %748 = vector.broadcast %cst_415 : f32 to vector<8x256xf32>
    %749 = arith.mulf %748, %745 : vector<8x256xf32>
    %750 = arith.truncf %749 : vector<8x256xf32> to vector<8x256xbf16>
    %c0_416 = arith.constant 0 : index
    %c0_417 = arith.constant 0 : index
    %751 = vector.load %arg2[%c0_416, %c0_417] : memref<256x256xbf16, #tpu.memory_space<vmem>>, vector<256x256xbf16>
    %cst_418 = arith.constant dense<0.000000e+00> : vector<8x256xf32>
    %752 = tpu.matmul %750, %751, %cst_418 {dimension_numbers = #tpu.dot_dimension_numbers<[1], [0], [0], [1], [0, 0, 1, 1], [], []>} : vector<8x256xbf16>, vector<256x256xbf16>, vector<8x256xf32> -> vector<8x256xf32>
    %c2_419 = arith.constant 2 : index
    %c0_420 = arith.constant 0 : index
    %753 = vector.load %arg4[%c2_419, %c0_420] : memref<4x256xf32, #tpu.memory_space<vmem>>, vector<1x256xf32>
    %754 = vector.broadcast %753 : vector<1x256xf32> to vector<8x256xf32>
    %755 = arith.addf %752, %754 : vector<8x256xf32>
    %756 = math.tanh %755 : vector<8x256xf32>
    %757 = arith.truncf %756 : vector<8x256xf32> to vector<8x256xbf16>
    %c0_421 = arith.constant 0 : index
    %c0_422 = arith.constant 0 : index
    %758 = vector.load %arg3[%c0_421, %c0_422] : memref<256x256xbf16, #tpu.memory_space<vmem>>, vector<256x256xbf16>
    %cst_423 = arith.constant dense<0.000000e+00> : vector<8x256xf32>
    %759 = tpu.matmul %757, %758, %cst_423 {dimension_numbers = #tpu.dot_dimension_numbers<[1], [0], [0], [1], [0, 0, 1, 1], [], []>} : vector<8x256xbf16>, vector<256x256xbf16>, vector<8x256xf32> -> vector<8x256xf32>
    %cst_424 = arith.constant 0.904510498 : f32
    %760 = vector.broadcast %cst_424 : f32 to vector<8x256xf32>
    %761 = arith.mulf %760, %745 : vector<8x256xf32>
    %cst_425 = arith.constant 0.154506892 : f32
    %762 = vector.broadcast %cst_425 : f32 to vector<8x256xf32>
    %763 = arith.mulf %762, %759 : vector<8x256xf32>
    %764 = arith.addf %761, %763 : vector<8x256xf32>
    %cst_426 = arith.constant -1.000000e+00 : f32
    %cst_427 = arith.constant 1.000000e+00 : f32
    %765 = vector.broadcast %cst_426 : f32 to vector<8x256xf32>
    %766 = arith.maximumf %765, %764 : vector<8x256xf32>
    %767 = vector.broadcast %cst_427 : f32 to vector<8x256xf32>
    %768 = arith.minimumf %767, %766 : vector<8x256xf32>
    %769 = arith.subf %745, %768 : vector<8x256xf32>
    %cst_428 = arith.constant 6.15543795 : f32
    %770 = vector.broadcast %cst_428 : f32 to vector<8x256xf32>
    %771 = arith.mulf %769, %770 : vector<8x256xf32>
    %cst_429 = arith.constant -0.0812259092 : f32
    %772 = vector.broadcast %cst_429 : f32 to vector<8x256xf32>
    %773 = arith.mulf %771, %772 : vector<8x256xf32>
    %774 = arith.addf %745, %773 : vector<8x256xf32>
    %cst_430 = arith.constant 1.97411668 : f32
    %775 = vector.broadcast %cst_430 : f32 to vector<8x256xf32>
    %776 = arith.mulf %775, %774 : vector<8x256xf32>
    %777 = arith.truncf %776 : vector<8x256xf32> to vector<8x256xbf16>
    %c0_431 = arith.constant 0 : index
    %c0_432 = arith.constant 0 : index
    %778 = vector.load %arg2[%c0_431, %c0_432] : memref<256x256xbf16, #tpu.memory_space<vmem>>, vector<256x256xbf16>
    %cst_433 = arith.constant dense<0.000000e+00> : vector<8x256xf32>
    %779 = tpu.matmul %777, %778, %cst_433 {dimension_numbers = #tpu.dot_dimension_numbers<[1], [0], [0], [1], [0, 0, 1, 1], [], []>} : vector<8x256xbf16>, vector<256x256xbf16>, vector<8x256xf32> -> vector<8x256xf32>
    %c3_434 = arith.constant 3 : index
    %c0_435 = arith.constant 0 : index
    %780 = vector.load %arg4[%c3_434, %c0_435] : memref<4x256xf32, #tpu.memory_space<vmem>>, vector<1x256xf32>
    %781 = vector.broadcast %780 : vector<1x256xf32> to vector<8x256xf32>
    %782 = arith.addf %779, %781 : vector<8x256xf32>
    %783 = math.tanh %782 : vector<8x256xf32>
    %784 = arith.truncf %783 : vector<8x256xf32> to vector<8x256xbf16>
    %c0_436 = arith.constant 0 : index
    %c0_437 = arith.constant 0 : index
    %785 = vector.load %arg3[%c0_436, %c0_437] : memref<256x256xbf16, #tpu.memory_space<vmem>>, vector<256x256xbf16>
    %cst_438 = arith.constant dense<0.000000e+00> : vector<8x256xf32>
    %786 = tpu.matmul %784, %785, %cst_438 {dimension_numbers = #tpu.dot_dimension_numbers<[1], [0], [0], [1], [0, 0, 1, 1], [], []>} : vector<8x256xbf16>, vector<256x256xbf16>, vector<8x256xf32> -> vector<8x256xf32>
    %cst_439 = arith.constant 0.974284172 : f32
    %787 = vector.broadcast %cst_439 : f32 to vector<8x256xf32>
    %788 = arith.mulf %787, %774 : vector<8x256xf32>
    %cst_440 = arith.constant 0.0801807865 : f32
    %789 = vector.broadcast %cst_440 : f32 to vector<8x256xf32>
    %790 = arith.mulf %789, %786 : vector<8x256xf32>
    %791 = arith.addf %788, %790 : vector<8x256xf32>
    %cst_441 = arith.constant -1.000000e+00 : f32
    %cst_442 = arith.constant 1.000000e+00 : f32
    %792 = vector.broadcast %cst_441 : f32 to vector<8x256xf32>
    %793 = arith.maximumf %792, %791 : vector<8x256xf32>
    %794 = vector.broadcast %cst_442 : f32 to vector<8x256xf32>
    %795 = arith.minimumf %794, %793 : vector<8x256xf32>
    %796 = arith.subf %774, %795 : vector<8x256xf32>
    %cst_443 = arith.constant 12.3104095 : f32
    %797 = vector.broadcast %cst_443 : f32 to vector<8x256xf32>
    %798 = arith.mulf %796, %797 : vector<8x256xf32>
    %cst_444 = arith.constant -0.162451819 : f32
    %799 = vector.broadcast %cst_444 : f32 to vector<8x256xf32>
    %800 = arith.mulf %798, %799 : vector<8x256xf32>
    %801 = arith.addf %745, %800 : vector<8x256xf32>
    %cst_445 = arith.constant 9.99981071E-4 : f32
    %802 = vector.broadcast %cst_445 : f32 to vector<8x256xf32>
    %803 = arith.mulf %747, %802 : vector<8x256xf32>
    %804 = arith.addf %801, %803 : vector<8x256xf32>
    %805 = vector.extract_strided_slice %804 {offsets = [0, 128], sizes = [8, 128], strides = [1, 1]} : vector<8x256xf32> to vector<8x128xf32>
    %c0_446 = arith.constant 0 : index
    %c256 = arith.constant 256 : index
    %806 = vector.load %arg5[%c0_446, %c256] : memref<8x384xf32, #tpu.memory_space<vmem>>, vector<8x128xf32>
    tpu.vector_store %arg5[%c0_446, %c256], %805 {strides = array<i32>} : memref<8x384xf32, #tpu.memory_space<vmem>>, vector<8x128xf32>,
    return
  }
}

</mosaic_0001>

<llo_original>
// kernel: span_by_span_composer.1
$region0: #{span_by_span_composer.1}
  #allocation0 [shape = 'u32[]', space=smem, size = 0x4, offset = 0x4, fixed_abs, tag = 'smem constant byte address 0x4 - core index']
  #allocation1 [shape = 'u32[144,128]{1,0:T(1,128)}', space=vmem, size = 0x12000, scoped, tag = 'internal scratch']
  %s0 = inlined_call_operand.vmem [shape: f32[8,256], index: 0, kind: input, shape index: {}]
  %s1 = inlined_call_operand.hbm [shape: f32[27,8,256], index: 1, kind: input, shape index: {}]
  %s2 = inlined_call_operand.hbm [shape: bf16[256,256], index: 2, kind: input, shape index: {}]
  %s3 = inlined_call_operand.hbm [shape: bf16[256,256], index: 3, kind: input, shape index: {}]
  %s4 = inlined_call_operand.vmem [shape: f32[4,256], index: 4, kind: input, shape index: {}]
  %s5 = inlined_call_operand.vmem [shape: f32[8,384], index: 5, kind: output, shape index: {}]
  %s6 = sld [smem:[#allocation0]]
  $region42: #{span_by_span_composer.1} parent=0
    _
  %s8 = ssub.s32 1, %s6
  %s9 = scalar_select 0, %s8, %s6
  $region1: #{span_by_span_composer.1} parent=0
    #allocation2 [shape = 'u8[221184]{0}', space=vmem, size = 0x36000, scoped, tag = 'input window, operand 1, single buffered']
    #allocation3 [shape = 's32[1]{0}', space=sflag, size = 0x4, scoped, tag = 'scoped memory for span_by_span_composer.1']
    #allocation4 [shape = 'u8[131072]{0}', space=vmem, size = 0x20000, scoped, tag = 'input window, operand 2, single buffered']
    #allocation5 [shape = 's32[1]{0}', space=sflag, size = 0x4, scoped, tag = 'scoped memory for span_by_span_composer.1']
    #allocation6 [shape = 'u8[131072]{0}', space=vmem, size = 0x20000, scoped, tag = 'input window, operand 3, single buffered']
    %10 = vsyncpa [#allocation3], 0
    %11 = vsyncpa [#allocation5], 0
    // Predicated region
    $region2: #{span_by_span_composer.1} parent=1 // pred_check
      _
    $region3: #{span_by_span_composer.1} parent=1 // pred_check_branch
      %13 = sbr.rel (0) target = $region5
    $region4: #{span_by_span_composer.1} parent=1 // pred_region
      _
    $region5: #{span_by_span_composer.1} parent=1 // pred_fallthru
      _
    // Predicated region
    $region6: #{span_by_span_composer.1} parent=1 // pred_check
      _
    $region7: #{span_by_span_composer.1} parent=1 // pred_check_branch
      %15 = sbr.rel (0) target = $region9
    $region8: #{span_by_span_composer.1} parent=1 // pred_region
      %s17 = ssub.s32 6912, 6912
      %18 = vsyncadd [#allocation3], %s17
      %s19 = sshll.u32 [#allocation2], 4
      %s20 = int_to_ptr.vmem [resolvable:$true] %s19
      %25 = dma.hbm_to_vmem [thread:$0]  %s1, 6912, %s20, [#allocation3], 256, 256, 16
    $region9: #{span_by_span_composer.1} parent=1 // pred_fallthru
      _
    // Predicated region
    $region10: #{span_by_span_composer.1} parent=1 // pred_check
      _
    $region11: #{span_by_span_composer.1} parent=1 // pred_check_branch
      %27 = sbr.rel (0) target = $region13
    $region12: #{span_by_span_composer.1} parent=1 // pred_region
      %s29 = ssub.s32 4096, 4096
      %30 = vsyncadd [#allocation5], %s29
      %s31 = sshll.u32 [#allocation4], 4
      %s32 = int_to_ptr.vmem [resolvable:$true] %s31
      %37 = dma.hbm_to_vmem [thread:$0]  %s2, 4096, %s32, [#allocation5], 128, 128, 8
    $region13: #{span_by_span_composer.1} parent=1 // pred_fallthru
      _
    // Predicated region
    $region14: #{span_by_span_composer.1} parent=1 // pred_check
      _
    $region15: #{span_by_span_composer.1} parent=1 // pred_check_branch
      %39 = sbr.rel (0) target = $region17
    $region16: #{span_by_span_composer.1} parent=1 // pred_region
      %s41 = ssub.s32 4096, 4096
      %42 = vsyncadd [#allocation5], %s41
      %s43 = sshll.u32 [#allocation6], 4
      %s44 = int_to_ptr.vmem [resolvable:$true] %s43
      %49 = dma.hbm_to_vmem [thread:$0]  %s3, 4096, %s44, [#allocation5], 128, 128, 8
    $region17: #{span_by_span_composer.1} parent=1 // pred_fallthru
      _
    // Predicated region
    $region18: #{span_by_span_composer.1} parent=1 // pred_check
      _
    $region19: #{span_by_span_composer.1} parent=1 // pred_check_branch
      %51 = sbr.rel (0) target = $region21
    $region20: #{span_by_span_composer.1} parent=1 // pred_region
      _
    $region21: #{span_by_span_composer.1} parent=1 // pred_fallthru
      _
    // Predicated region
    $region22: #{span_by_span_composer.1} parent=1 // pred_check
      _
    $region23: #{span_by_span_composer.1} parent=1 // pred_check_branch
      %53 = sbr.rel (0) target = $region25
    $region24: #{span_by_span_composer.1} parent=1 // pred_region
      %54 = dma.done [#allocation3], 6912
    $region25: #{span_by_span_composer.1} parent=1 // pred_fallthru
      _
    // Predicated region
    $region26: #{span_by_span_composer.1} parent=1 // pred_check
      _
    $region27: #{span_by_span_composer.1} parent=1 // pred_check_branch
      %56 = sbr.rel (0) target = $region29
    $region28: #{span_by_span_composer.1} parent=1 // pred_region
      %57 = dma.done [#allocation5], 4096
    $region29: #{span_by_span_composer.1} parent=1 // pred_fallthru
      _
    // Predicated region
    $region30: #{span_by_span_composer.1} parent=1 // pred_check
      _
    $region31: #{span_by_span_composer.1} parent=1 // pred_check_branch
      %59 = sbr.rel (0) target = $region33
    $region32: #{span_by_span_composer.1} parent=1 // pred_region
      %60 = dma.done [#allocation5], 4096
    $region33: #{span_by_span_composer.1} parent=1 // pred_fallthru
      _
    %v61 = vlaneseq
    %v62 = vand.u32 %v61, 127
    %v63 = vadd.s32 %v62, 128
    %vm64 = vcmp.lt.s32.totalorder %v62, 128
    %vm65 = vcmp.lt.s32.totalorder %v63, 128
    %v66 = vld [vmem:[%s0 + $0x8] sm:$0xff]
    %v67 = vld [vmem:[#allocation2] sm:$0xff]
    %v68 = vld [vmem:[#allocation2 + $0x8] sm:$0xff]
    %v69 = vmul.f32 %v67, 3.0
    %v70 = vmul.f32 %v68, 3.0
    %s71 = scalar_lea.vmem [#allocation2], 16
    %v72 = vld [vmem:[%s71] sm:$0xff]
    %v73 = vld [vmem:[%s71 + $0x8] sm:$0xff]
    %v74 = vmul.f32 %v72, 3.0
    %v75 = vmul.f32 %v73, 3.0
    %v76 = vadd.f32 %v66, %v74
    %v77 = vadd.f32 %v75, 0.0
    %v78 = vsel %vm64, %v76, %v69
    %v79 = vsel %vm65, %v77, %v70
    %s80 = scalar_lea.vmem [#allocation2], 32
    %v81 = vld [vmem:[%s80] sm:$0xff]
    %v82 = vld [vmem:[%s80 + $0x8] sm:$0xff]
    %v83 = vmul.f32 %v78, 0.32879797
    %v84 = vmul.f32 %v79, 0.32879797
    %v85 = vpack.c.bf16 %v83, %v83
    %v86 = vpack.c.bf16 %v84, %v84
    %v87 = vld [vmem:[#allocation4] sm:$0xff]
    %v88 = vld [vmem:[#allocation4 + $0x8] sm:$0xff]
    %v89 = vld [vmem:[#allocation4 + $0x10] sm:$0xff]
    %v90 = vld [vmem:[#allocation4 + $0x18] sm:$0xff]
    %v91 = vld [vmem:[#allocation4 + $0x20] sm:$0xff]
    %v92 = vld [vmem:[#allocation4 + $0x28] sm:$0xff]
    %v93 = vld [vmem:[#allocation4 + $0x30] sm:$0xff]
    %v94 = vld [vmem:[#allocation4 + $0x38] sm:$0xff]
    %v95 = vld [vmem:[#allocation4 + $0x40] sm:$0xff]
    %v96 = vld [vmem:[#allocation4 + $0x48] sm:$0xff]
    %v97 = vld [vmem:[#allocation4 + $0x50] sm:$0xff]
    %v98 = vld [vmem:[#allocation4 + $0x58] sm:$0xff]
    %v99 = vld [vmem:[#allocation4 + $0x60] sm:$0xff]
    %v100 = vld [vmem:[#allocation4 + $0x68] sm:$0xff]
    %v101 = vld [vmem:[#allocation4 + $0x70] sm:$0xff]
    %v102 = vld [vmem:[#allocation4 + $0x78] sm:$0xff]
    %v103 = vld [vmem:[#allocation4 + $0x80] sm:$0xff]
    %v104 = vld [vmem:[#allocation4 + $0x88] sm:$0xff]
    %v105 = vld [vmem:[#allocation4 + $0x90] sm:$0xff]
    %v106 = vld [vmem:[#allocation4 + $0x98] sm:$0xff]
    %v107 = vld [vmem:[#allocation4 + $0xa0] sm:$0xff]
    %v108 = vld [vmem:[#allocation4 + $0xa8] sm:$0xff]
    %v109 = vld [vmem:[#allocation4 + $0xb0] sm:$0xff]
    %v110 = vld [vmem:[#allocation4 + $0xb8] sm:$0xff]
    %v111 = vld [vmem:[#allocation4 + $0xc0] sm:$0xff]
    %v112 = vld [vmem:[#allocation4 + $0xc8] sm:$0xff]
    %v113 = vld [vmem:[#allocation4 + $0xd0] sm:$0xff]
    %v114 = vld [vmem:[#allocation4 + $0xd8] sm:$0xff]
    %v115 = vld [vmem:[#allocation4 + $0xe0] sm:$0xff]
    %v116 = vld [vmem:[#allocation4 + $0xe8] sm:$0xff]
    %v117 = vld [vmem:[#allocation4 + $0xf0] sm:$0xff]
    %v118 = vld [vmem:[#allocation4 + $0xf8] sm:$0xff]
    %v119 = vld [vmem:[%s4] ss:$4 sm:$0x3]
    %v121 = vlaneseq
    %v122 = vshrl.u32 %v121, 7
    %v123 = vsub.s32 0, %v122
    %v124 = vrot.slane %v119, %v123
    %v125 = vlaneseq
    %v126 = vshrl.u32 %v125, 7
    %v127 = vsub.s32 1, %v126
    %v128 = vrot.slane %v119, %v127
    %v163 = vunpack.c.l.b16 %v87
    %v164 = vunpack.c.h.b16 %v87
    %v165 = vunpack.c.l.b16 %v88
    %v166 = vunpack.c.h.b16 %v88
    %v167 = vunpack.c.l.b16 %v89
    %v168 = vunpack.c.h.b16 %v89
    %v169 = vunpack.c.l.b16 %v90
    %v170 = vunpack.c.h.b16 %v90
    %v171 = vunpack.c.l.b16 %v91
    %v172 = vunpack.c.h.b16 %v91
    %v173 = vunpack.c.l.b16 %v92
    %v174 = vunpack.c.h.b16 %v92
    %v175 = vunpack.c.l.b16 %v93
    %v176 = vunpack.c.h.b16 %v93
    %v177 = vunpack.c.l.b16 %v94
    %v178 = vunpack.c.h.b16 %v94
    %v179 = vunpack.c.l.b16 %v95
    %v180 = vunpack.c.h.b16 %v95
    %v181 = vunpack.c.l.b16 %v96
    %v182 = vunpack.c.h.b16 %v96
    %v183 = vunpack.c.l.b16 %v97
    %v184 = vunpack.c.h.b16 %v97
    %v185 = vunpack.c.l.b16 %v98
    %v186 = vunpack.c.h.b16 %v98
    %v187 = vunpack.c.l.b16 %v99
    %v188 = vunpack.c.h.b16 %v99
    %v189 = vunpack.c.l.b16 %v100
    %v190 = vunpack.c.h.b16 %v100
    %v191 = vunpack.c.l.b16 %v101
    %v192 = vunpack.c.h.b16 %v101
    %v193 = vunpack.c.l.b16 %v102
    %v194 = vunpack.c.h.b16 %v102
    %v195 = vunpack.c.l.b16 %v103
    %v196 = vunpack.c.h.b16 %v103
    %v197 = vunpack.c.l.b16 %v104
    %v198 = vunpack.c.h.b16 %v104
    %v199 = vunpack.c.l.b16 %v105
    %v200 = vunpack.c.h.b16 %v105
    %v201 = vunpack.c.l.b16 %v106
    %v202 = vunpack.c.h.b16 %v106
    %v203 = vunpack.c.l.b16 %v107
    %v204 = vunpack.c.h.b16 %v107
    %v205 = vunpack.c.l.b16 %v108
    %v206 = vunpack.c.h.b16 %v108
    %v207 = vunpack.c.l.b16 %v109
    %v208 = vunpack.c.h.b16 %v109
    %v209 = vunpack.c.l.b16 %v110
    %v210 = vunpack.c.h.b16 %v110
    %v211 = vunpack.c.l.b16 %v111
    %v212 = vunpack.c.h.b16 %v111
    %v213 = vunpack.c.l.b16 %v112
    %v214 = vunpack.c.h.b16 %v112
    %v215 = vunpack.c.l.b16 %v113
    %v216 = vunpack.c.h.b16 %v113
    %v217 = vunpack.c.l.b16 %v114
    %v218 = vunpack.c.h.b16 %v114
    %v219 = vunpack.c.l.b16 %v115
    %v220 = vunpack.c.h.b16 %v115
    %v221 = vunpack.c.l.b16 %v116
    %v222 = vunpack.c.h.b16 %v116
    %v223 = vunpack.c.l.b16 %v117
    %v224 = vunpack.c.h.b16 %v117
    %v225 = vunpack.c.l.b16 %v118
    %v226 = vunpack.c.h.b16 %v118
    %v227 = vpack.c.b16 %v165, %v163
    %v228 = vpack.c.b16 %v166, %v164
    %v229 = vpack.c.b16 %v169, %v167
    %v230 = vpack.c.b16 %v170, %v168
    %v231 = vpack.c.b16 %v173, %v171
    %v232 = vpack.c.b16 %v174, %v172
    %v233 = vpack.c.b16 %v177, %v175
    %v234 = vpack.c.b16 %v178, %v176
    %v235 = vpack.c.b16 %v181, %v179
    %v236 = vpack.c.b16 %v182, %v180
    %v237 = vpack.c.b16 %v185, %v183
    %v238 = vpack.c.b16 %v186, %v184
    %v239 = vpack.c.b16 %v189, %v187
    %v240 = vpack.c.b16 %v190, %v188
    %v241 = vpack.c.b16 %v193, %v191
    %v242 = vpack.c.b16 %v194, %v192
    %v243 = vpack.c.b16 %v197, %v195
    %v244 = vpack.c.b16 %v198, %v196
    %v245 = vpack.c.b16 %v201, %v199
    %v246 = vpack.c.b16 %v202, %v200
    %v247 = vpack.c.b16 %v205, %v203
    %v248 = vpack.c.b16 %v206, %v204
    %v249 = vpack.c.b16 %v209, %v207
    %v250 = vpack.c.b16 %v210, %v208
    %v251 = vpack.c.b16 %v213, %v211
    %v252 = vpack.c.b16 %v214, %v212
    %v253 = vpack.c.b16 %v217, %v215
    %v254 = vpack.c.b16 %v218, %v216
    %v255 = vpack.c.b16 %v221, %v219
    %v256 = vpack.c.b16 %v222, %v220
    %v257 = vpack.c.b16 %v225, %v223
    %v258 = vpack.c.b16 %v226, %v224
    %291 = vmatprep.subr.bf16.mxu0 %v242
    %292 = vmatpush1.bf16.msra.mxu0 %v241
    %293 = vmatprep.subr.bf16.mxu0 %v240
    %294 = vmatpush1.bf16.msra.mxu0 %v239
    %295 = vmatprep.subr.bf16.mxu0 %v238
    %296 = vmatpush1.bf16.msra.mxu0 %v237
    %297 = vmatprep.subr.bf16.mxu0 %v236
    %298 = vmatpush1.bf16.msra.mxu0 %v235
    %299 = vmatprep.subr.bf16.mxu0 %v234
    %300 = vmatpush1.bf16.msra.mxu0 %v233
    %301 = vmatprep.subr.bf16.mxu0 %v232
    %302 = vmatpush1.bf16.msra.mxu0 %v231
    %303 = vmatprep.subr.bf16.mxu0 %v230
    %304 = vmatpush1.bf16.msra.mxu0 %v229
    %305 = vmatprep.subr.bf16.mxu0 %v228
    %306 = vmatpush1.bf16.msra.mxu0 %v227
    %307 = vmatprep.subr.bf16.mxu0 %v258
    %308 = vmatpush2.bf16.msra.mxu0 %v257
    %309 = vmatprep.subr.bf16.mxu0 %v256
    %310 = vmatpush2.bf16.msra.mxu0 %v255
    %311 = vmatprep.subr.bf16.mxu0 %v254
    %312 = vmatpush2.bf16.msra.mxu0 %v253
    %313 = vmatprep.subr.bf16.mxu0 %v252
    %314 = vmatpush2.bf16.msra.mxu0 %v251
    %315 = vmatprep.subr.bf16.mxu0 %v250
    %316 = vmatpush2.bf16.msra.mxu0 %v249
    %317 = vmatprep.subr.bf16.mxu0 %v248
    %318 = vmatpush2.bf16.msra.mxu0 %v247
    %319 = vmatprep.subr.bf16.mxu0 %v246
    %320 = vmatpush2.bf16.msra.mxu0 %v245
    %321 = vmatprep.subr.bf16.mxu0 %v244
    %322 = vmatpush2.bf16.msra.mxu0 %v243
    %323 = vmatprep.mubr.bf16.mxu0 %v86
    %324 = vmatmul.mubr.bf16.gmra.mxu0 %v85
    %v325 = vpop.f32.mrf.mxu0
    %v326 = vadd.f32 %v124, %v325
    %v327 = vpop.f32.mrf.mxu0
    %v328 = vadd.f32 %v128, %v327
    %v329 = vpop.f32.mrf.mxu0
    %v330 = vpop.f32.mrf.mxu0
    %331 = vdwg.mxu0
    %v332 = vtanh.pop %v326
    %v333 = vtanh.pop %v328
    %v334 = vpack.c.bf16 %v332, %v332
    %v335 = vpack.c.bf16 %v333, %v333
    %v336 = vld [vmem:[#allocation6] sm:$0xff]
    %v337 = vld [vmem:[#allocation6 + $0x8] sm:$0xff]
    %v338 = vld [vmem:[#allocation6 + $0x10] sm:$0xff]
    %v339 = vld [vmem:[#allocation6 + $0x18] sm:$0xff]
    %v340 = vld [vmem:[#allocation6 + $0x20] sm:$0xff]
    %v341 = vld [vmem:[#allocation6 + $0x28] sm:$0xff]
    %v342 = vld [vmem:[#allocation6 + $0x30] sm:$0xff]
    %v343 = vld [vmem:[#allocation6 + $0x38] sm:$0xff]
    %v344 = vld [vmem:[#allocation6 + $0x40] sm:$0xff]
    %v345 = vld [vmem:[#allocation6 + $0x48] sm:$0xff]
    %v346 = vld [vmem:[#allocation6 + $0x50] sm:$0xff]
    %v347 = vld [vmem:[#allocation6 + $0x58] sm:$0xff]
    %v348 = vld [vmem:[#allocation6 + $0x60] sm:$0xff]
    %v349 = vld [vmem:[#allocation6 + $0x68] sm:$0xff]
    %v350 = vld [vmem:[#allocation6 + $0x70] sm:$0xff]
    %v351 = vld [vmem:[#allocation6 + $0x78] sm:$0xff]
    %v352 = vld [vmem:[#allocation6 + $0x80] sm:$0xff]
    %v353 = vld [vmem:[#allocation6 + $0x88] sm:$0xff]
    %v354 = vld [vmem:[#allocation6 + $0x90] sm:$0xff]
    %v355 = vld [vmem:[#allocation6 + $0x98] sm:$0xff]
    %v356 = vld [vmem:[#allocation6 + $0xa0] sm:$0xff]
    %v357 = vld [vmem:[#allocation6 + $0xa8] sm:$0xff]
    %v358 = vld [vmem:[#allocation6 + $0xb0] sm:$0xff]
    %v359 = vld [vmem:[#allocation6 + $0xb8] sm:$0xff]
    %v360 = vld [vmem:[#allocation6 + $0xc0] sm:$0xff]
    %v361 = vld [vmem:[#allocation6 + $0xc8] sm:$0xff]
    %v362 = vld [vmem:[#allocation6 + $0xd0] sm:$0xff]
    %v363 = vld [vmem:[#allocation6 + $0xd8] sm:$0xff]
    %v364 = vld [vmem:[#allocation6 + $0xe0] sm:$0xff]
    %v365 = vld [vmem:[#allocation6 + $0xe8] sm:$0xff]
    %v366 = vld [vmem:[#allocation6 + $0xf0] sm:$0xff]
    %v367 = vld [vmem:[#allocation6 + $0xf8] sm:$0xff]
    %v400 = vunpack.c.l.b16 %v336
    %v401 = vunpack.c.h.b16 %v336
    %v402 = vunpack.c.l.b16 %v337
    %v403 = vunpack.c.h.b16 %v337
    %v404 = vunpack.c.l.b16 %v338
    %v405 = vunpack.c.h.b16 %v338
    %v406 = vunpack.c.l.b16 %v339
    %v407 = vunpack.c.h.b16 %v339
    %v408 = vunpack.c.l.b16 %v340
    %v409 = vunpack.c.h.b16 %v340
    %v410 = vunpack.c.l.b16 %v341
    %v411 = vunpack.c.h.b16 %v341
    %v412 = vunpack.c.l.b16 %v342
    %v413 = vunpack.c.h.b16 %v342
    %v414 = vunpack.c.l.b16 %v343
    %v415 = vunpack.c.h.b16 %v343
    %v416 = vunpack.c.l.b16 %v344
    %v417 = vunpack.c.h.b16 %v344
    %v418 = vunpack.c.l.b16 %v345
    %v419 = vunpack.c.h.b16 %v345
    %v420 = vunpack.c.l.b16 %v346
    %v421 = vunpack.c.h.b16 %v346
    %v422 = vunpack.c.l.b16 %v347
    %v423 = vunpack.c.h.b16 %v347
    %v424 = vunpack.c.l.b16 %v348
    %v425 = vunpack.c.h.b16 %v348
    %v426 = vunpack.c.l.b16 %v349
    %v427 = vunpack.c.h.b16 %v349
    %v428 = vunpack.c.l.b16 %v350
    %v429 = vunpack.c.h.b16 %v350
    %v430 = vunpack.c.l.b16 %v351
    %v431 = vunpack.c.h.b16 %v351
    %v432 = vunpack.c.l.b16 %v352
    %v433 = vunpack.c.h.b16 %v352
    %v434 = vunpack.c.l.b16 %v353
    %v435 = vunpack.c.h.b16 %v353
    %v436 = vunpack.c.l.b16 %v354
    %v437 = vunpack.c.h.b16 %v354
    %v438 = vunpack.c.l.b16 %v355
    %v439 = vunpack.c.h.b16 %v355
    %v440 = vunpack.c.l.b16 %v356
    %v441 = vunpack.c.h.b16 %v356
    %v442 = vunpack.c.l.b16 %v357
    %v443 = vunpack.c.h.b16 %v357
    %v444 = vunpack.c.l.b16 %v358
    %v445 = vunpack.c.h.b16 %v358
    %v446 = vunpack.c.l.b16 %v359
    %v447 = vunpack.c.h.b16 %v359
    %v448 = vunpack.c.l.b16 %v360
    %v449 = vunpack.c.h.b16 %v360
    %v450 = vunpack.c.l.b16 %v361
    %v451 = vunpack.c.h.b16 %v361
    %v452 = vunpack.c.l.b16 %v362
    %v453 = vunpack.c.h.b16 %v362
    %v454 = vunpack.c.l.b16 %v363
    %v455 = vunpack.c.h.b16 %v363
    %v456 = vunpack.c.l.b16 %v364
    %v457 = vunpack.c.h.b16 %v364
    %v458 = vunpack.c.l.b16 %v365
    %v459 = vunpack.c.h.b16 %v365
    %v460 = vunpack.c.l.b16 %v366
    %v461 = vunpack.c.h.b16 %v366
    %v462 = vunpack.c.l.b16 %v367
    %v463 = vunpack.c.h.b16 %v367
    %v464 = vpack.c.b16 %v402, %v400
    %v465 = vpack.c.b16 %v403, %v401
    %v466 = vpack.c.b16 %v406, %v404
    %v467 = vpack.c.b16 %v407, %v405
    %v468 = vpack.c.b16 %v410, %v408
    %v469 = vpack.c.b16 %v411, %v409
    %v470 = vpack.c.b16 %v414, %v412
    %v471 = vpack.c.b16 %v415, %v413
    %v472 = vpack.c.b16 %v418, %v416
    %v473 = vpack.c.b16 %v419, %v417
    %v474 = vpack.c.b16 %v422, %v420
    %v475 = vpack.c.b16 %v423, %v421
    %v476 = vpack.c.b16 %v426, %v424
    %v477 = vpack.c.b16 %v427, %v425
    %v478 = vpack.c.b16 %v430, %v428
    %v479 = vpack.c.b16 %v431, %v429
    %v480 = vpack.c.b16 %v434, %v432
    %v481 = vpack.c.b16 %v435, %v433
    %v482 = vpack.c.b16 %v438, %v436
    %v483 = vpack.c.b16 %v439, %v437
    %v484 = vpack.c.b16 %v442, %v440
    %v485 = vpack.c.b16 %v443, %v441
    %v486 = vpack.c.b16 %v446, %v444
    %v487 = vpack.c.b16 %v447, %v445
    %v488 = vpack.c.b16 %v450, %v448
    %v489 = vpack.c.b16 %v451, %v449
    %v490 = vpack.c.b16 %v454, %v452
    %v491 = vpack.c.b16 %v455, %v453
    %v492 = vpack.c.b16 %v458, %v456
    %v493 = vpack.c.b16 %v459, %v457
    %v494 = vpack.c.b16 %v462, %v460
    %v495 = vpack.c.b16 %v463, %v461
    %528 = vmatprep.subr.bf16.mxu0 %v479
    %529 = vmatpush1.bf16.msra.mxu0 %v478
    %530 = vmatprep.subr.bf16.mxu0 %v477
    %531 = vmatpush1.bf16.msra.mxu0 %v476
    %532 = vmatprep.subr.bf16.mxu0 %v475
    %533 = vmatpush1.bf16.msra.mxu0 %v474
    %534 = vmatprep.subr.bf16.mxu0 %v473
    %535 = vmatpush1.bf16.msra.mxu0 %v472
    %536 = vmatprep.subr.bf16.mxu0 %v471
    %537 = vmatpush1.bf16.msra.mxu0 %v470
    %538 = vmatprep.subr.bf16.mxu0 %v469
    %539 = vmatpush1.bf16.msra.mxu0 %v468
    %540 = vmatprep.subr.bf16.mxu0 %v467
    %541 = vmatpush1.bf16.msra.mxu0 %v466
    %542 = vmatprep.subr.bf16.mxu0 %v465
    %543 = vmatpush1.bf16.msra.mxu0 %v464
    %544 = vmatprep.subr.bf16.mxu0 %v495
    %545 = vmatpush2.bf16.msra.mxu0 %v494
    %546 = vmatprep.subr.bf16.mxu0 %v493
    %547 = vmatpush2.bf16.msra.mxu0 %v492
    %548 = vmatprep.subr.bf16.mxu0 %v491
    %549 = vmatpush2.bf16.msra.mxu0 %v490
    %550 = vmatprep.subr.bf16.mxu0 %v489
    %551 = vmatpush2.bf16.msra.mxu0 %v488
    %552 = vmatprep.subr.bf16.mxu0 %v487
    %553 = vmatpush2.bf16.msra.mxu0 %v486
    %554 = vmatprep.subr.bf16.mxu0 %v485
    %555 = vmatpush2.bf16.msra.mxu0 %v484
    %556 = vmatprep.subr.bf16.mxu0 %v483
    %557 = vmatpush2.bf16.msra.mxu0 %v482
    %558 = vmatprep.subr.bf16.mxu0 %v481
    %559 = vmatpush2.bf16.msra.mxu0 %v480
    %560 = vmatprep.mubr.bf16.mxu0 %v335
    %561 = vmatmul.mubr.bf16.gmra.mxu0 %v334
    %v562 = vpop.f32.mrf.mxu0
    %v563 = vadd.f32 0.0, %v562
    %v564 = vpop.f32.mrf.mxu0
    %v565 = vadd.f32 0.0, %v564
    %v566 = vpop.f32.mrf.mxu0
    %v567 = vpop.f32.mrf.mxu0
    %568 = vdwg.mxu0
    %v569 = vmul.f32 %v78, 0.027027028
    %v570 = vmul.f32 %v79, 0.027027028
    %v571 = vmul.f32 %v563, 0.49319696
    %v572 = vmul.f32 %v565, 0.49319696
    %v573 = vadd.f32 %v569, %v571
    %v574 = vadd.f32 %v570, %v572
    %v575 = vmax.f32 %v573, -1.0
    %v576 = vmax.f32 %v574, -1.0
    %v577 = vmin.f32 %v575, 1.0
    %v578 = vmin.f32 %v576, 1.0
    %v579 = vsub.f32 %v78, %v577
    %v580 = vsub.f32 %v79, %v578
    %v581 = vmul.f32 %v579, 0.33333334
    %v582 = vmul.f32 %v580, 0.33333334
    %v583 = vmul.f32 %v581, -1.4956012
    %v584 = vmul.f32 %v582, -1.4956012
    %v585 = vadd.f32 %v78, %v583
    %v586 = vadd.f32 %v79, %v584
    %v587 = vmul.f32 %v585, 0.6307905
    %v588 = vmul.f32 %v586, 0.6307905
    %v589 = vpack.c.bf16 %v587, %v587
    %v590 = vpack.c.bf16 %v588, %v588
    %s591 = scalar_lea.vmem %s4, 1
    %v592 = vld [vmem:[%s591] ss:$4 sm:$0x3]
    %v594 = vlaneseq
    %v595 = vshrl.u32 %v594, 7
    %v596 = vsub.s32 0, %v595
    %v597 = vrot.slane %v592, %v596
    %v598 = vlaneseq
    %v599 = vshrl.u32 %v598, 7
    %v600 = vsub.s32 1, %v599
    %v601 = vrot.slane %v592, %v600
    %604 = vmatprep.subr.bf16.mxu0 %v242
    %605 = vmatpush1.bf16.msra.mxu0 %v241
    %606 = vmatprep.subr.bf16.mxu0 %v240
    %607 = vmatpush1.bf16.msra.mxu0 %v239
    %608 = vmatprep.subr.bf16.mxu0 %v238
    %609 = vmatpush1.bf16.msra.mxu0 %v237
    %610 = vmatprep.subr.bf16.mxu0 %v236
    %611 = vmatpush1.bf16.msra.mxu0 %v235
    %612 = vmatprep.subr.bf16.mxu0 %v234
    %613 = vmatpush1.bf16.msra.mxu0 %v233
    %614 = vmatprep.subr.bf16.mxu0 %v232
    %615 = vmatpush1.bf16.msra.mxu0 %v231
    %616 = vmatprep.subr.bf16.mxu0 %v230
    %617 = vmatpush1.bf16.msra.mxu0 %v229
    %618 = vmatprep.subr.bf16.mxu0 %v228
    %619 = vmatpush1.bf16.msra.mxu0 %v227
    %620 = vmatprep.subr.bf16.mxu0 %v258
    %621 = vmatpush2.bf16.msra.mxu0 %v257
    %622 = vmatprep.subr.bf16.mxu0 %v256
    %623 = vmatpush2.bf16.msra.mxu0 %v255
    %624 = vmatprep.subr.bf16.mxu0 %v254
    %625 = vmatpush2.bf16.msra.mxu0 %v253
    %626 = vmatprep.subr.bf16.mxu0 %v252
    %627 = vmatpush2.bf16.msra.mxu0 %v251
    %628 = vmatprep.subr.bf16.mxu0 %v250
    %629 = vmatpush2.bf16.msra.mxu0 %v249
    %630 = vmatprep.subr.bf16.mxu0 %v248
    %631 = vmatpush2.bf16.msra.mxu0 %v247
    %632 = vmatprep.subr.bf16.mxu0 %v246
    %633 = vmatpush2.bf16.msra.mxu0 %v245
    %634 = vmatprep.subr.bf16.mxu0 %v244
    %635 = vmatpush2.bf16.msra.mxu0 %v243
    %636 = vmatprep.mubr.bf16.mxu0 %v590
    %637 = vmatmul.mubr.bf16.gmra.mxu0 %v589
    %v638 = vpop.f32.mrf.mxu0
    %v639 = vadd.f32 %v597, %v638
    %v640 = vpop.f32.mrf.mxu0
    %v641 = vadd.f32 %v601, %v640
    %v642 = vpop.f32.mrf.mxu0
    %v643 = vpop.f32.mrf.mxu0
    %644 = vdwg.mxu0
    %v645 = vtanh.pop %v639
    %v646 = vtanh.pop %v641
    %v647 = vpack.c.bf16 %v645, %v645
    %v648 = vpack.c.bf16 %v646, %v646
    %649 = vmatprep.subr.bf16.mxu0 %v479
    %650 = vmatpush1.bf16.msra.mxu0 %v478
    %651 = vmatprep.subr.bf16.mxu0 %v477
    %652 = vmatpush1.bf16.msra.mxu0 %v476
    %653 = vmatprep.subr.bf16.mxu0 %v475
    %654 = vmatpush1.bf16.msra.mxu0 %v474
    %655 = vmatprep.subr.bf16.mxu0 %v473
    %656 = vmatpush1.bf16.msra.mxu0 %v472
    %657 = vmatprep.subr.bf16.mxu0 %v471
    %658 = vmatpush1.bf16.msra.mxu0 %v470
    %659 = vmatprep.subr.bf16.mxu0 %v469
    %660 = vmatpush1.bf16.msra.mxu0 %v468
    %661 = vmatprep.subr.bf16.mxu0 %v467
    %662 = vmatpush1.bf16.msra.mxu0 %v466
    %663 = vmatprep.subr.bf16.mxu0 %v465
    %664 = vmatpush1.bf16.msra.mxu0 %v464
    %665 = vmatprep.subr.bf16.mxu0 %v495
    %666 = vmatpush2.bf16.msra.mxu0 %v494
    %667 = vmatprep.subr.bf16.mxu0 %v493
    %668 = vmatpush2.bf16.msra.mxu0 %v492
    %669 = vmatprep.subr.bf16.mxu0 %v491
    %670 = vmatpush2.bf16.msra.mxu0 %v490
    %671 = vmatprep.subr.bf16.mxu0 %v489
    %672 = vmatpush2.bf16.msra.mxu0 %v488
    %673 = vmatprep.subr.bf16.mxu0 %v487
    %674 = vmatpush2.bf16.msra.mxu0 %v486
    %675 = vmatprep.subr.bf16.mxu0 %v485
    %676 = vmatpush2.bf16.msra.mxu0 %v484
    %677 = vmatprep.subr.bf16.mxu0 %v483
    %678 = vmatpush2.bf16.msra.mxu0 %v482
    %679 = vmatprep.subr.bf16.mxu0 %v481
    %680 = vmatpush2.bf16.msra.mxu0 %v480
    %681 = vmatprep.mubr.bf16.mxu0 %v648
    %682 = vmatmul.mubr.bf16.gmra.mxu0 %v647
    %v683 = vpop.f32.mrf.mxu0
    %v684 = vadd.f32 0.0, %v683
    %v685 = vpop.f32.mrf.mxu0
    %v686 = vadd.f32 0.0, %v685
    %v687 = vpop.f32.mrf.mxu0
    %v688 = vpop.f32.mrf.mxu0
    %689 = vdwg.mxu0
    %v690 = vmul.f32 %v585, 0.099474154
    %v691 = vmul.f32 %v586, 0.099474154
    %v692 = vmul.f32 %v684, 0.4744802
    %v693 = vmul.f32 %v686, 0.4744802
    %v694 = vadd.f32 %v690, %v692
    %v695 = vadd.f32 %v691, %v693
    %v696 = vmax.f32 %v694, -1.0
    %v697 = vmax.f32 %v695, -1.0
    %v698 = vmin.f32 %v696, 1.0
    %v699 = vmin.f32 %v697, 1.0
    %v700 = vsub.f32 %v585, %v698
    %v701 = vsub.f32 %v586, %v699
    %v702 = vmul.f32 %v700, 0.6647174
    %v703 = vmul.f32 %v701, 0.6647174
    %v704 = vmul.f32 %v702, -2.9912024
    %v705 = vmul.f32 %v703, -2.9912024
    %v706 = vadd.f32 %v78, %v704
    %v707 = vadd.f32 %v79, %v705
    %v708 = vmul.f32 %v81, 0.1622196
    %v709 = vmul.f32 %v82, 0.1622196
    %v710 = vadd.f32 %v706, %v708
    %v711 = vadd.f32 %v707, %v709
    %s712 = scalar_lea.vmem [#allocation2], 48
    %v713 = vld [vmem:[%s712] sm:$0xff]
    %v714 = vld [vmem:[%s712 + $0x8] sm:$0xff]
    %v715 = vmul.f32 %v713, 2.995598
    %v716 = vmul.f32 %v714, 2.995598
    %v717 = vadd.f32 %v710, %v715
    %v718 = vadd.f32 %v711, %v716
    %v719 = vsel %vm64, %v76, %v717
    %v720 = vsel %vm65, %v77, %v718
    %s721 = scalar_lea.vmem [#allocation2], 64
    %v722 = vld [vmem:[%s721] sm:$0xff]
    %v723 = vld [vmem:[%s721 + $0x8] sm:$0xff]
    %v724 = vmul.f32 %v719, 0.32879797
    %v725 = vmul.f32 %v720, 0.32879797
    %v726 = vpack.c.bf16 %v724, %v724
    %v727 = vpack.c.bf16 %v725, %v725
    %728 = vmatprep.subr.bf16.mxu0 %v242
    %729 = vmatpush1.bf16.msra.mxu0 %v241
    %730 = vmatprep.subr.bf16.mxu0 %v240
    %731 = vmatpush1.bf16.msra.mxu0 %v239
    %732 = vmatprep.subr.bf16.mxu0 %v238
    %733 = vmatpush1.bf16.msra.mxu0 %v237
    %734 = vmatprep.subr.bf16.mxu0 %v236
    %735 = vmatpush1.bf16.msra.mxu0 %v235
    %736 = vmatprep.subr.bf16.mxu0 %v234
    %737 = vmatpush1.bf16.msra.mxu0 %v233
    %738 = vmatprep.subr.bf16.mxu0 %v232
    %739 = vmatpush1.bf16.msra.mxu0 %v231
    %740 = vmatprep.subr.bf16.mxu0 %v230
    %741 = vmatpush1.bf16.msra.mxu0 %v229
    %742 = vmatprep.subr.bf16.mxu0 %v228
    %743 = vmatpush1.bf16.msra.mxu0 %v227
    %744 = vmatprep.subr.bf16.mxu0 %v258
    %745 = vmatpush2.bf16.msra.mxu0 %v257
    %746 = vmatprep.subr.bf16.mxu0 %v256
    %747 = vmatpush2.bf16.msra.mxu0 %v255
    %748 = vmatprep.subr.bf16.mxu0 %v254
    %749 = vmatpush2.bf16.msra.mxu0 %v253
    %750 = vmatprep.subr.bf16.mxu0 %v252
    %751 = vmatpush2.bf16.msra.mxu0 %v251
    %752 = vmatprep.subr.bf16.mxu0 %v250
    %753 = vmatpush2.bf16.msra.mxu0 %v249
    %754 = vmatprep.subr.bf16.mxu0 %v248
    %755 = vmatpush2.bf16.msra.mxu0 %v247
    %756 = vmatprep.subr.bf16.mxu0 %v246
    %757 = vmatpush2.bf16.msra.mxu0 %v245
    %758 = vmatprep.subr.bf16.mxu0 %v244
    %759 = vmatpush2.bf16.msra.mxu0 %v243
    %760 = vmatprep.mubr.bf16.mxu0 %v727
    %761 = vmatmul.mubr.bf16.gmra.mxu0 %v726
    %v762 = vpop.f32.mrf.mxu0
    %v763 = vadd.f32 %v124, %v762
    %v764 = vpop.f32.mrf.mxu0
    %v765 = vadd.f32 %v128, %v764
    %v766 = vpop.f32.mrf.mxu0
    %v767 = vpop.f32.mrf.mxu0
    %768 = vdwg.mxu0
    %v769 = vtanh.pop %v763
    %v770 = vtanh.pop %v765
    %v771 = vpack.c.bf16 %v769, %v769
    %v772 = vpack.c.bf16 %v770, %v770
    %773 = vmatprep.subr.bf16.mxu0 %v479
    %774 = vmatpush1.bf16.msra.mxu0 %v478
    %775 = vmatprep.subr.bf16.mxu0 %v477
    %776 = vmatpush1.bf16.msra.mxu0 %v476
    %777 = vmatprep.subr.bf16.mxu0 %v475
    %778 = vmatpush1.bf16.msra.mxu0 %v474
    %779 = vmatprep.subr.bf16.mxu0 %v473
    %780 = vmatpush1.bf16.msra.mxu0 %v472
    %781 = vmatprep.subr.bf16.mxu0 %v471
    %782 = vmatpush1.bf16.msra.mxu0 %v470
    %783 = vmatprep.subr.bf16.mxu0 %v469
    %784 = vmatpush1.bf16.msra.mxu0 %v468
    %785 = vmatprep.subr.bf16.mxu0 %v467
    %786 = vmatpush1.bf16.msra.mxu0 %v466
    %787 = vmatprep.subr.bf16.mxu0 %v465
    %788 = vmatpush1.bf16.msra.mxu0 %v464
    %789 = vmatprep.subr.bf16.mxu0 %v495
    %790 = vmatpush2.bf16.msra.mxu0 %v494
    %791 = vmatprep.subr.bf16.mxu0 %v493
    %792 = vmatpush2.bf16.msra.mxu0 %v492
    %793 = vmatprep.subr.bf16.mxu0 %v491
    %794 = vmatpush2.bf16.msra.mxu0 %v490
    %795 = vmatprep.subr.bf16.mxu0 %v489
    %796 = vmatpush2.bf16.msra.mxu0 %v488
    %797 = vmatprep.subr.bf16.mxu0 %v487
    %798 = vmatpush2.bf16.msra.mxu0 %v486
    %799 = vmatprep.subr.bf16.mxu0 %v485
    %800 = vmatpush2.bf16.msra.mxu0 %v484
    %801 = vmatprep.subr.bf16.mxu0 %v483
    %802 = vmatpush2.bf16.msra.mxu0 %v482
    %803 = vmatprep.subr.bf16.mxu0 %v481
    %804 = vmatpush2.bf16.msra.mxu0 %v480
    %805 = vmatprep.mubr.bf16.mxu0 %v772
    %806 = vmatmul.mubr.bf16.gmra.mxu0 %v771
    %v807 = vpop.f32.mrf.mxu0
    %v808 = vadd.f32 0.0, %v807
    %v809 = vpop.f32.mrf.mxu0
    %v810 = vadd.f32 0.0, %v809
    %v811 = vpop.f32.mrf.mxu0
    %v812 = vpop.f32.mrf.mxu0
    %813 = vdwg.mxu0
    %v814 = vmul.f32 %v719, 0.027027028
    %v815 = vmul.f32 %v720, 0.027027028
    %v816 = vmul.f32 %v808, 0.49319696
    %v817 = vmul.f32 %v810, 0.49319696
    %v818 = vadd.f32 %v814, %v816
    %v819 = vadd.f32 %v815, %v817
    %v820 = vmax.f32 %v818, -1.0
    %v821 = vmax.f32 %v819, -1.0
    %v822 = vmin.f32 %v820, 1.0
    %v823 = vmin.f32 %v821, 1.0
    %v824 = vsub.f32 %v719, %v822
    %v825 = vsub.f32 %v720, %v823
    %v826 = vmul.f32 %v824, 0.33333334
    %v827 = vmul.f32 %v825, 0.33333334
    %v828 = vmul.f32 %v826, -1.4956012
    %v829 = vmul.f32 %v827, -1.4956012
    %v830 = vadd.f32 %v719, %v828
    %v831 = vadd.f32 %v720, %v829
    %v832 = vmul.f32 %v830, 0.6307905
    %v833 = vmul.f32 %v831, 0.6307905
    %v834 = vpack.c.bf16 %v832, %v832
    %v835 = vpack.c.bf16 %v833, %v833
    %836 = vmatprep.subr.bf16.mxu0 %v242
    %837 = vmatpush1.bf16.msra.mxu0 %v241
    %838 = vmatprep.subr.bf16.mxu0 %v240
    %839 = vmatpush1.bf16.msra.mxu0 %v239
    %840 = vmatprep.subr.bf16.mxu0 %v238
    %841 = vmatpush1.bf16.msra.mxu0 %v237
    %842 = vmatprep.subr.bf16.mxu0 %v236
    %843 = vmatpush1.bf16.msra.mxu0 %v235
    %844 = vmatprep.subr.bf16.mxu0 %v234
    %845 = vmatpush1.bf16.msra.mxu0 %v233
    %846 = vmatprep.subr.bf16.mxu0 %v232
    %847 = vmatpush1.bf16.msra.mxu0 %v231
    %848 = vmatprep.subr.bf16.mxu0 %v230
    %849 = vmatpush1.bf16.msra.mxu0 %v229
    %850 = vmatprep.subr.bf16.mxu0 %v228
    %851 = vmatpush1.bf16.msra.mxu0 %v227
    %852 = vmatprep.subr.bf16.mxu0 %v258
    %853 = vmatpush2.bf16.msra.mxu0 %v257
    %854 = vmatprep.subr.bf16.mxu0 %v256
    %855 = vmatpush2.bf16.msra.mxu0 %v255
    %856 = vmatprep.subr.bf16.mxu0 %v254
    %857 = vmatpush2.bf16.msra.mxu0 %v253
    %858 = vmatprep.subr.bf16.mxu0 %v252
    %859 = vmatpush2.bf16.msra.mxu0 %v251
    %860 = vmatprep.subr.bf16.mxu0 %v250
    %861 = vmatpush2.bf16.msra.mxu0 %v249
    %862 = vmatprep.subr.bf16.mxu0 %v248
    %863 = vmatpush2.bf16.msra.mxu0 %v247
    %864 = vmatprep.subr.bf16.mxu0 %v246
    %865 = vmatpush2.bf16.msra.mxu0 %v245
    %866 = vmatprep.subr.bf16.mxu0 %v244
    %867 = vmatpush2.bf16.msra.mxu0 %v243
    %868 = vmatprep.mubr.bf16.mxu0 %v835
    %869 = vmatmul.mubr.bf16.gmra.mxu0 %v834
    %v870 = vpop.f32.mrf.mxu0
    %v871 = vadd.f32 %v597, %v870
    %v872 = vpop.f32.mrf.mxu0
    %v873 = vadd.f32 %v601, %v872
    %v874 = vpop.f32.mrf.mxu0
    %v875 = vpop.f32.mrf.mxu0
    %876 = vdwg.mxu0
    %v877 = vtanh.pop %v871
    %v878 = vtanh.pop %v873
    %v879 = vpack.c.bf16 %v877, %v877
    %v880 = vpack.c.bf16 %v878, %v878
    %881 = vmatprep.subr.bf16.mxu0 %v479
    %882 = vmatpush1.bf16.msra.mxu0 %v478
    %883 = vmatprep.subr.bf16.mxu0 %v477
    %884 = vmatpush1.bf16.msra.mxu0 %v476
    %885 = vmatprep.subr.bf16.mxu0 %v475
    %886 = vmatpush1.bf16.msra.mxu0 %v474
    %887 = vmatprep.subr.bf16.mxu0 %v473
    %888 = vmatpush1.bf16.msra.mxu0 %v472
    %889 = vmatprep.subr.bf16.mxu0 %v471
    %890 = vmatpush1.bf16.msra.mxu0 %v470
    %891 = vmatprep.subr.bf16.mxu0 %v469
    %892 = vmatpush1.bf16.msra.mxu0 %v468
    %893 = vmatprep.subr.bf16.mxu0 %v467
    %894 = vmatpush1.bf16.msra.mxu0 %v466
    %895 = vmatprep.subr.bf16.mxu0 %v465
    %896 = vmatpush1.bf16.msra.mxu0 %v464
    %897 = vmatprep.subr.bf16.mxu0 %v495
    %898 = vmatpush2.bf16.msra.mxu0 %v494
    %899 = vmatprep.subr.bf16.mxu0 %v493
    %900 = vmatpush2.bf16.msra.mxu0 %v492
    %901 = vmatprep.subr.bf16.mxu0 %v491
    %902 = vmatpush2.bf16.msra.mxu0 %v490
    %903 = vmatprep.subr.bf16.mxu0 %v489
    %904 = vmatpush2.bf16.msra.mxu0 %v488
    %905 = vmatprep.subr.bf16.mxu0 %v487
    %906 = vmatpush2.bf16.msra.mxu0 %v486
    %907 = vmatprep.subr.bf16.mxu0 %v485
    %908 = vmatpush2.bf16.msra.mxu0 %v484
    %909 = vmatprep.subr.bf16.mxu0 %v483
    %910 = vmatpush2.bf16.msra.mxu0 %v482
    %911 = vmatprep.subr.bf16.mxu0 %v481
    %912 = vmatpush2.bf16.msra.mxu0 %v480
    %913 = vmatprep.mubr.bf16.mxu0 %v880
    %914 = vmatmul.mubr.bf16.gmra.mxu0 %v879
    %v915 = vpop.f32.mrf.mxu0
    %v916 = vadd.f32 0.0, %v915
    %v917 = vpop.f32.mrf.mxu0
    %v918 = vadd.f32 0.0, %v917
    %v919 = vpop.f32.mrf.mxu0
    %v920 = vpop.f32.mrf.mxu0
    %921 = vdwg.mxu0
    %v922 = vmul.f32 %v830, 0.099474154
    %v923 = vmul.f32 %v831, 0.099474154
    %v924 = vmul.f32 %v916, 0.4744802
    %v925 = vmul.f32 %v918, 0.4744802
    %v926 = vadd.f32 %v922, %v924
    %v927 = vadd.f32 %v923, %v925
    %v928 = vmax.f32 %v926, -1.0
    %v929 = vmax.f32 %v927, -1.0
    %v930 = vmin.f32 %v928, 1.0
    %v931 = vmin.f32 %v929, 1.0
    %v932 = vsub.f32 %v830, %v930
    %v933 = vsub.f32 %v831, %v931
    %v934 = vmul.f32 %v932, 0.6647174
    %v935 = vmul.f32 %v933, 0.6647174
    %v936 = vmul.f32 %v934, -2.9912024
    %v937 = vmul.f32 %v935, -2.9912024
    %v938 = vadd.f32 %v719, %v936
    %v939 = vadd.f32 %v720, %v937
    %v940 = vmul.f32 %v722, 0.1622196
    %v941 = vmul.f32 %v723, 0.1622196
    %v942 = vadd.f32 %v938, %v940
    %v943 = vadd.f32 %v939, %v941
    %s944 = scalar_lea.vmem [#allocation2], 80
    %v945 = vld [vmem:[%s944] sm:$0xff]
    %v946 = vld [vmem:[%s944 + $0x8] sm:$0xff]
    %v947 = vmul.f32 %v945, 0.16245797
    %v948 = vmul.f32 %v946, 0.16245797
    %v949 = vadd.f32 %v66, %v947
    %v950 = vadd.f32 %v948, 0.0
    %v951 = vsel %vm64, %v949, %v942
    %v952 = vsel %vm65, %v950, %v943
    %s953 = scalar_lea.vmem [#allocation2], 96
    %v954 = vld [vmem:[%s953] sm:$0xff]
    %v955 = vld [vmem:[%s953 + $0x8] sm:$0xff]
    %v956 = vmul.f32 %v951, 1.9021151
    %v957 = vmul.f32 %v952, 1.9021151
    %v958 = vpack.c.bf16 %v956, %v956
    %v959 = vpack.c.bf16 %v957, %v957
    %s960 = scalar_lea.vmem %s4, 2
    %v961 = vld [vmem:[%s960] ss:$4 sm:$0x3]
    %v963 = vlaneseq
    %v964 = vshrl.u32 %v963, 7
    %v965 = vsub.s32 0, %v964
    %v966 = vrot.slane %v961, %v965
    %v967 = vlaneseq
    %v968 = vshrl.u32 %v967, 7
    %v969 = vsub.s32 1, %v968
    %v970 = vrot.slane %v961, %v969
    %973 = vmatprep.subr.bf16.mxu0 %v242
    %974 = vmatpush1.bf16.msra.mxu0 %v241
    %975 = vmatprep.subr.bf16.mxu0 %v240
    %976 = vmatpush1.bf16.msra.mxu0 %v239
    %977 = vmatprep.subr.bf16.mxu0 %v238
    %978 = vmatpush1.bf16.msra.mxu0 %v237
    %979 = vmatprep.subr.bf16.mxu0 %v236
    %980 = vmatpush1.bf16.msra.mxu0 %v235
    %981 = vmatprep.subr.bf16.mxu0 %v234
    %982 = vmatpush1.bf16.msra.mxu0 %v233
    %983 = vmatprep.subr.bf16.mxu0 %v232
    %984 = vmatpush1.bf16.msra.mxu0 %v231
    %985 = vmatprep.subr.bf16.mxu0 %v230
    %986 = vmatpush1.bf16.msra.mxu0 %v229
    %987 = vmatprep.subr.bf16.mxu0 %v228
    %988 = vmatpush1.bf16.msra.mxu0 %v227
    %989 = vmatprep.subr.bf16.mxu0 %v258
    %990 = vmatpush2.bf16.msra.mxu0 %v257
    %991 = vmatprep.subr.bf16.mxu0 %v256
    %992 = vmatpush2.bf16.msra.mxu0 %v255
    %993 = vmatprep.subr.bf16.mxu0 %v254
    %994 = vmatpush2.bf16.msra.mxu0 %v253
    %995 = vmatprep.subr.bf16.mxu0 %v252
    %996 = vmatpush2.bf16.msra.mxu0 %v251
    %997 = vmatprep.subr.bf16.mxu0 %v250
    %998 = vmatpush2.bf16.msra.mxu0 %v249
    %999 = vmatprep.subr.bf16.mxu0 %v248
    %1000 = vmatpush2.bf16.msra.mxu0 %v247
    %1001 = vmatprep.subr.bf16.mxu0 %v246
    %1002 = vmatpush2.bf16.msra.mxu0 %v245
    %1003 = vmatprep.subr.bf16.mxu0 %v244
    %1004 = vmatpush2.bf16.msra.mxu0 %v243
    %1005 = vmatprep.mubr.bf16.mxu0 %v959
    %1006 = vmatmul.mubr.bf16.gmra.mxu0 %v958
    %v1007 = vpop.f32.mrf.mxu0
    %v1008 = vadd.f32 %v966, %v1007
    %v1009 = vpop.f32.mrf.mxu0
    %v1010 = vadd.f32 %v970, %v1009
    %v1011 = vpop.f32.mrf.mxu0
    %v1012 = vpop.f32.mrf.mxu0
    %1013 = vdwg.mxu0
    %v1014 = vtanh.pop %v1008
    %v1015 = vtanh.pop %v1010
    %v1016 = vpack.c.bf16 %v1014, %v1014
    %v1017 = vpack.c.bf16 %v1015, %v1015
    %1018 = vmatprep.subr.bf16.mxu0 %v479
    %1019 = vmatpush1.bf16.msra.mxu0 %v478
    %1020 = vmatprep.subr.bf16.mxu0 %v477
    %1021 = vmatpush1.bf16.msra.mxu0 %v476
    %1022 = vmatprep.subr.bf16.mxu0 %v475
    %1023 = vmatpush1.bf16.msra.mxu0 %v474
    %1024 = vmatprep.subr.bf16.mxu0 %v473
    %1025 = vmatpush1.bf16.msra.mxu0 %v472
    %1026 = vmatprep.subr.bf16.mxu0 %v471
    %1027 = vmatpush1.bf16.msra.mxu0 %v470
    %1028 = vmatprep.subr.bf16.mxu0 %v469
    %1029 = vmatpush1.bf16.msra.mxu0 %v468
    %1030 = vmatprep.subr.bf16.mxu0 %v467
    %1031 = vmatpush1.bf16.msra.mxu0 %v466
    %1032 = vmatprep.subr.bf16.mxu0 %v465
    %1033 = vmatpush1.bf16.msra.mxu0 %v464
    %1034 = vmatprep.subr.bf16.mxu0 %v495
    %1035 = vmatpush2.bf16.msra.mxu0 %v494
    %1036 = vmatprep.subr.bf16.mxu0 %v493
    %1037 = vmatpush2.bf16.msra.mxu0 %v492
    %1038 = vmatprep.subr.bf16.mxu0 %v491
    %1039 = vmatpush2.bf16.msra.mxu0 %v490
    %1040 = vmatprep.subr.bf16.mxu0 %v489
    %1041 = vmatpush2.bf16.msra.mxu0 %v488
    %1042 = vmatprep.subr.bf16.mxu0 %v487
    %1043 = vmatpush2.bf16.msra.mxu0 %v486
    %1044 = vmatprep.subr.bf16.mxu0 %v485
    %1045 = vmatpush2.bf16.msra.mxu0 %v484
    %1046 = vmatprep.subr.bf16.mxu0 %v483
    %1047 = vmatpush2.bf16.msra.mxu0 %v482
    %1048 = vmatprep.subr.bf16.mxu0 %v481
    %1049 = vmatpush2.bf16.msra.mxu0 %v480
    %1050 = vmatprep.mubr.bf16.mxu0 %v1017
    %1051 = vmatmul.mubr.bf16.gmra.mxu0 %v1016
    %v1052 = vpop.f32.mrf.mxu0
    %v1053 = vadd.f32 0.0, %v1052
    %v1054 = vpop.f32.mrf.mxu0
    %v1055 = vadd.f32 0.0, %v1054
    %v1056 = vpop.f32.mrf.mxu0
    %v1057 = vpop.f32.mrf.mxu0
    %1058 = vdwg.mxu0
    %v1059 = vmul.f32 %v951, 0.9045105
    %v1060 = vmul.f32 %v952, 0.9045105
    %v1061 = vmul.f32 %v1053, 0.15450689
    %v1062 = vmul.f32 %v1055, 0.15450689
    %v1063 = vadd.f32 %v1059, %v1061
    %v1064 = vadd.f32 %v1060, %v1062
    %v1065 = vmax.f32 %v1063, -1.0
    %v1066 = vmax.f32 %v1064, -1.0
    %v1067 = vmin.f32 %v1065, 1.0
    %v1068 = vmin.f32 %v1066, 1.0
    %v1069 = vsub.f32 %v951, %v1067
    %v1070 = vsub.f32 %v952, %v1068
    %v1071 = vmul.f32 %v1069, 6.155438
    %v1072 = vmul.f32 %v1070, 6.155438
    %v1073 = vmul.f32 %v1071, -0.08122591
    %v1074 = vmul.f32 %v1072, -0.08122591
    %v1075 = vadd.f32 %v951, %v1073
    %v1076 = vadd.f32 %v952, %v1074
    %v1077 = vmul.f32 %v1075, 1.9741167
    %v1078 = vmul.f32 %v1076, 1.9741167
    %v1079 = vpack.c.bf16 %v1077, %v1077
    %v1080 = vpack.c.bf16 %v1078, %v1078
    %s1081 = scalar_lea.vmem %s4, 3
    %v1082 = vld [vmem:[%s1081] ss:$4 sm:$0x3]
    %v1084 = vlaneseq
    %v1085 = vshrl.u32 %v1084, 7
    %v1086 = vsub.s32 0, %v1085
    %v1087 = vrot.slane %v1082, %v1086
    %v1088 = vlaneseq
    %v1089 = vshrl.u32 %v1088, 7
    %v1090 = vsub.s32 1, %v1089
    %v1091 = vrot.slane %v1082, %v1090
    %1094 = vmatprep.subr.bf16.mxu0 %v242
    %1095 = vmatpush1.bf16.msra.mxu0 %v241
    %1096 = vmatprep.subr.bf16.mxu0 %v240
    %1097 = vmatpush1.bf16.msra.mxu0 %v239
    %1098 = vmatprep.subr.bf16.mxu0 %v238
    %1099 = vmatpush1.bf16.msra.mxu0 %v237
    %1100 = vmatprep.subr.bf16.mxu0 %v236
    %1101 = vmatpush1.bf16.msra.mxu0 %v235
    %1102 = vmatprep.subr.bf16.mxu0 %v234
    %1103 = vmatpush1.bf16.msra.mxu0 %v233
    %1104 = vmatprep.subr.bf16.mxu0 %v232
    %1105 = vmatpush1.bf16.msra.mxu0 %v231
    %1106 = vmatprep.subr.bf16.mxu0 %v230
    %1107 = vmatpush1.bf16.msra.mxu0 %v229
    %1108 = vmatprep.subr.bf16.mxu0 %v228
    %1109 = vmatpush1.bf16.msra.mxu0 %v227
    %1110 = vmatprep.subr.bf16.mxu0 %v258
    %1111 = vmatpush2.bf16.msra.mxu0 %v257
    %1112 = vmatprep.subr.bf16.mxu0 %v256
    %1113 = vmatpush2.bf16.msra.mxu0 %v255
    %1114 = vmatprep.subr.bf16.mxu0 %v254
    %1115 = vmatpush2.bf16.msra.mxu0 %v253
    %1116 = vmatprep.subr.bf16.mxu0 %v252
    %1117 = vmatpush2.bf16.msra.mxu0 %v251
    %1118 = vmatprep.subr.bf16.mxu0 %v250
    %1119 = vmatpush2.bf16.msra.mxu0 %v249
    %1120 = vmatprep.subr.bf16.mxu0 %v248
    %1121 = vmatpush2.bf16.msra.mxu0 %v247
    %1122 = vmatprep.subr.bf16.mxu0 %v246
    %1123 = vmatpush2.bf16.msra.mxu0 %v245
    %1124 = vmatprep.subr.bf16.mxu0 %v244
    %1125 = vmatpush2.bf16.msra.mxu0 %v243
    %1126 = vmatprep.mubr.bf16.mxu0 %v1080
    %1127 = vmatmul.mubr.bf16.gmra.mxu0 %v1079
    %v1128 = vpop.f32.mrf.mxu0
    %v1129 = vadd.f32 %v1087, %v1128
    %v1130 = vpop.f32.mrf.mxu0
    %v1131 = vadd.f32 %v1091, %v1130
    %v1132 = vpop.f32.mrf.mxu0
    %v1133 = vpop.f32.mrf.mxu0
    %1134 = vdwg.mxu0
    %v1135 = vtanh.pop %v1129
    %v1136 = vtanh.pop %v1131
    %v1137 = vpack.c.bf16 %v1135, %v1135
    %v1138 = vpack.c.bf16 %v1136, %v1136
    %1139 = vmatprep.subr.bf16.mxu0 %v479
    %1140 = vmatpush1.bf16.msra.mxu0 %v478
    %1141 = vmatprep.subr.bf16.mxu0 %v477
    %1142 = vmatpush1.bf16.msra.mxu0 %v476
    %1143 = vmatprep.subr.bf16.mxu0 %v475
    %1144 = vmatpush1.bf16.msra.mxu0 %v474
    %1145 = vmatprep.subr.bf16.mxu0 %v473
    %1146 = vmatpush1.bf16.msra.mxu0 %v472
    %1147 = vmatprep.subr.bf16.mxu0 %v471
    %1148 = vmatpush1.bf16.msra.mxu0 %v470
    %1149 = vmatprep.subr.bf16.mxu0 %v469
    %1150 = vmatpush1.bf16.msra.mxu0 %v468
    %1151 = vmatprep.subr.bf16.mxu0 %v467
    %1152 = vmatpush1.bf16.msra.mxu0 %v466
    %1153 = vmatprep.subr.bf16.mxu0 %v465
    %1154 = vmatpush1.bf16.msra.mxu0 %v464
    %1155 = vmatprep.subr.bf16.mxu0 %v495
    %1156 = vmatpush2.bf16.msra.mxu0 %v494
    %1157 = vmatprep.subr.bf16.mxu0 %v493
    %1158 = vmatpush2.bf16.msra.mxu0 %v492
    %1159 = vmatprep.subr.bf16.mxu0 %v491
    %1160 = vmatpush2.bf16.msra.mxu0 %v490
    %1161 = vmatprep.subr.bf16.mxu0 %v489
    %1162 = vmatpush2.bf16.msra.mxu0 %v488
    %1163 = vmatprep.subr.bf16.mxu0 %v487
    %1164 = vmatpush2.bf16.msra.mxu0 %v486
    %1165 = vmatprep.subr.bf16.mxu0 %v485
    %1166 = vmatpush2.bf16.msra.mxu0 %v484
    %1167 = vmatprep.subr.bf16.mxu0 %v483
    %1168 = vmatpush2.bf16.msra.mxu0 %v482
    %1169 = vmatprep.subr.bf16.mxu0 %v481
    %1170 = vmatpush2.bf16.msra.mxu0 %v480
    %1171 = vmatprep.mubr.bf16.mxu0 %v1138
    %1172 = vmatmul.mubr.bf16.gmra.mxu0 %v1137
    %v1173 = vpop.f32.mrf.mxu0
    %v1174 = vadd.f32 0.0, %v1173
    %v1175 = vpop.f32.mrf.mxu0
    %v1176 = vadd.f32 0.0, %v1175
    %v1177 = vpop.f32.mrf.mxu0
    %v1178 = vpop.f32.mrf.mxu0
    %1179 = vdwg.mxu0
    %v1180 = vmul.f32 %v1075, 0.9742842
    %v1181 = vmul.f32 %v1076, 0.9742842
    %v1182 = vmul.f32 %v1174, 0.08018079
    %v1183 = vmul.f32 %v1176, 0.08018079
    %v1184 = vadd.f32 %v1180, %v1182
    %v1185 = vadd.f32 %v1181, %v1183
    %v1186 = vmax.f32 %v1184, -1.0
    %v1187 = vmax.f32 %v1185, -1.0
    %v1188 = vmin.f32 %v1186, 1.0
    %v1189 = vmin.f32 %v1187, 1.0
    %v1190 = vsub.f32 %v1075, %v1188
    %v1191 = vsub.f32 %v1076, %v1189
    %v1192 = vmul.f32 %v1190, 12.31041
    %v1193 = vmul.f32 %v1191, 12.31041
    %v1194 = vmul.f32 %v1192, -0.16245182
    %v1195 = vmul.f32 %v1193, -0.16245182
    %v1196 = vadd.f32 %v951, %v1194
    %v1197 = vadd.f32 %v952, %v1195
    %v1198 = vmul.f32 %v954, 0.0009999811
    %v1199 = vmul.f32 %v955, 0.0009999811
    %v1200 = vadd.f32 %v1196, %v1198
    %v1201 = vadd.f32 %v1197, %v1199
    %s1202 = scalar_lea.vmem [#allocation2], 112
    %v1203 = vld [vmem:[%s1202] sm:$0xff]
    %v1204 = vld [vmem:[%s1202 + $0x8] sm:$0xff]
    %v1205 = vmul.f32 %v1203, 0.1624549
    %v1206 = vmul.f32 %v1204, 0.1624549
    %v1207 = vadd.f32 %v1200, %v1205
    %v1208 = vadd.f32 %v1201, %v1206
    %v1209 = vsel %vm64, %v949, %v1207
    %v1210 = vsel %vm65, %v950, %v1208
    %s1211 = scalar_lea.vmem [#allocation2], 128
    %v1212 = vld [vmem:[%s1211 + $0x8] sm:$0xff]
    %v1213 = vmul.f32 %v1209, 1.9021151
    %v1214 = vmul.f32 %v1210, 1.9021151
    %v1215 = vpack.c.bf16 %v1213, %v1213
    %v1216 = vpack.c.bf16 %v1214, %v1214
    %1217 = vmatprep.subr.bf16.mxu0 %v242
    %1218 = vmatpush1.bf16.msra.mxu0 %v241
    %1219 = vmatprep.subr.bf16.mxu0 %v240
    %1220 = vmatpush1.bf16.msra.mxu0 %v239
    %1221 = vmatprep.subr.bf16.mxu0 %v238
    %1222 = vmatpush1.bf16.msra.mxu0 %v237
    %1223 = vmatprep.subr.bf16.mxu0 %v236
    %1224 = vmatpush1.bf16.msra.mxu0 %v235
    %1225 = vmatprep.subr.bf16.mxu0 %v234
    %1226 = vmatpush1.bf16.msra.mxu0 %v233
    %1227 = vmatprep.subr.bf16.mxu0 %v232
    %1228 = vmatpush1.bf16.msra.mxu0 %v231
    %1229 = vmatprep.subr.bf16.mxu0 %v230
    %1230 = vmatpush1.bf16.msra.mxu0 %v229
    %1231 = vmatprep.subr.bf16.mxu0 %v228
    %1232 = vmatpush1.bf16.msra.mxu0 %v227
    %1233 = vmatprep.subr.bf16.mxu0 %v258
    %1234 = vmatpush2.bf16.msra.mxu0 %v257
    %1235 = vmatprep.subr.bf16.mxu0 %v256
    %1236 = vmatpush2.bf16.msra.mxu0 %v255
    %1237 = vmatprep.subr.bf16.mxu0 %v254
    %1238 = vmatpush2.bf16.msra.mxu0 %v253
    %1239 = vmatprep.subr.bf16.mxu0 %v252
    %1240 = vmatpush2.bf16.msra.mxu0 %v251
    %1241 = vmatprep.subr.bf16.mxu0 %v250
    %1242 = vmatpush2.bf16.msra.mxu0 %v249
    %1243 = vmatprep.subr.bf16.mxu0 %v248
    %1244 = vmatpush2.bf16.msra.mxu0 %v247
    %1245 = vmatprep.subr.bf16.mxu0 %v246
    %1246 = vmatpush2.bf16.msra.mxu0 %v245
    %1247 = vmatprep.subr.bf16.mxu0 %v244
    %1248 = vmatpush2.bf16.msra.mxu0 %v243
    %1249 = vmatprep.mubr.bf16.mxu0 %v1216
    %1250 = vmatmul.mubr.bf16.gmra.mxu0 %v1215
    %v1251 = vpop.f32.mrf.mxu0
    %v1252 = vadd.f32 %v966, %v1251
    %v1253 = vpop.f32.mrf.mxu0
    %v1254 = vadd.f32 %v970, %v1253
    %v1255 = vpop.f32.mrf.mxu0
    %v1256 = vpop.f32.mrf.mxu0
    %1257 = vdwg.mxu0
    %v1258 = vtanh.pop %v1252
    %v1259 = vtanh.pop %v1254
    %v1260 = vpack.c.bf16 %v1258, %v1258
    %v1261 = vpack.c.bf16 %v1259, %v1259
    %1262 = vmatprep.subr.bf16.mxu0 %v479
    %1263 = vmatpush1.bf16.msra.mxu0 %v478
    %1264 = vmatprep.subr.bf16.mxu0 %v477
    %1265 = vmatpush1.bf16.msra.mxu0 %v476
    %1266 = vmatprep.subr.bf16.mxu0 %v475
    %1267 = vmatpush1.bf16.msra.mxu0 %v474
    %1268 = vmatprep.subr.bf16.mxu0 %v473
    %1269 = vmatpush1.bf16.msra.mxu0 %v472
    %1270 = vmatprep.subr.bf16.mxu0 %v471
    %1271 = vmatpush1.bf16.msra.mxu0 %v470
    %1272 = vmatprep.subr.bf16.mxu0 %v469
    %1273 = vmatpush1.bf16.msra.mxu0 %v468
    %1274 = vmatprep.subr.bf16.mxu0 %v467
    %1275 = vmatpush1.bf16.msra.mxu0 %v466
    %1276 = vmatprep.subr.bf16.mxu0 %v465
    %1277 = vmatpush1.bf16.msra.mxu0 %v464
    %1278 = vmatprep.subr.bf16.mxu0 %v495
    %1279 = vmatpush2.bf16.msra.mxu0 %v494
    %1280 = vmatprep.subr.bf16.mxu0 %v493
    %1281 = vmatpush2.bf16.msra.mxu0 %v492
    %1282 = vmatprep.subr.bf16.mxu0 %v491
    %1283 = vmatpush2.bf16.msra.mxu0 %v490
    %1284 = vmatprep.subr.bf16.mxu0 %v489
    %1285 = vmatpush2.bf16.msra.mxu0 %v488
    %1286 = vmatprep.subr.bf16.mxu0 %v487
    %1287 = vmatpush2.bf16.msra.mxu0 %v486
    %1288 = vmatprep.subr.bf16.mxu0 %v485
    %1289 = vmatpush2.bf16.msra.mxu0 %v484
    %1290 = vmatprep.subr.bf16.mxu0 %v483
    %1291 = vmatpush2.bf16.msra.mxu0 %v482
    %1292 = vmatprep.subr.bf16.mxu0 %v481
    %1293 = vmatpush2.bf16.msra.mxu0 %v480
    %1294 = vmatprep.mubr.bf16.mxu0 %v1261
    %1295 = vmatmul.mubr.bf16.gmra.mxu0 %v1260
    %v1296 = vpop.f32.mrf.mxu0
    %v1297 = vadd.f32 0.0, %v1296
    %v1298 = vpop.f32.mrf.mxu0
    %v1299 = vadd.f32 0.0, %v1298
    %v1300 = vpop.f32.mrf.mxu0
    %v1301 = vpop.f32.mrf.mxu0
    %1302 = vdwg.mxu0
    %v1303 = vmul.f32 %v1209, 0.9045105
    %v1304 = vmul.f32 %v1210, 0.9045105
    %v1305 = vmul.f32 %v1297, 0.15450689
    %v1306 = vmul.f32 %v1299, 0.15450689
    %v1307 = vadd.f32 %v1303, %v1305
    %v1308 = vadd.f32 %v1304, %v1306
    %v1309 = vmax.f32 %v1307, -1.0
    %v1310 = vmax.f32 %v1308, -1.0
    %v1311 = vmin.f32 %v1309, 1.0
    %v1312 = vmin.f32 %v1310, 1.0
    %v1313 = vsub.f32 %v1209, %v1311
    %v1314 = vsub.f32 %v1210, %v1312
    %v1315 = vmul.f32 %v1313, 6.155438
    %v1316 = vmul.f32 %v1314, 6.155438
    %v1317 = vmul.f32 %v1315, -0.08122591
    %v1318 = vmul.f32 %v1316, -0.08122591
    %v1319 = vadd.f32 %v1209, %v1317
    %v1320 = vadd.f32 %v1210, %v1318
    %v1321 = vmul.f32 %v1319, 1.9741167
    %v1322 = vmul.f32 %v1320, 1.9741167
    %v1323 = vpack.c.bf16 %v1321, %v1321
    %v1324 = vpack.c.bf16 %v1322, %v1322
    %1325 = vmatprep.subr.bf16.mxu0 %v242
    %1326 = vmatpush1.bf16.msra.mxu0 %v241
    %1327 = vmatprep.subr.bf16.mxu0 %v240
    %1328 = vmatpush1.bf16.msra.mxu0 %v239
    %1329 = vmatprep.subr.bf16.mxu0 %v238
    %1330 = vmatpush1.bf16.msra.mxu0 %v237
    %1331 = vmatprep.subr.bf16.mxu0 %v236
    %1332 = vmatpush1.bf16.msra.mxu0 %v235
    %1333 = vmatprep.subr.bf16.mxu0 %v234
    %1334 = vmatpush1.bf16.msra.mxu0 %v233
    %1335 = vmatprep.subr.bf16.mxu0 %v232
    %1336 = vmatpush1.bf16.msra.mxu0 %v231
    %1337 = vmatprep.subr.bf16.mxu0 %v230
    %1338 = vmatpush1.bf16.msra.mxu0 %v229
    %1339 = vmatprep.subr.bf16.mxu0 %v228
    %1340 = vmatpush1.bf16.msra.mxu0 %v227
    %1341 = vmatprep.subr.bf16.mxu0 %v258
    %1342 = vmatpush2.bf16.msra.mxu0 %v257
    %1343 = vmatprep.subr.bf16.mxu0 %v256
    %1344 = vmatpush2.bf16.msra.mxu0 %v255
    %1345 = vmatprep.subr.bf16.mxu0 %v254
    %1346 = vmatpush2.bf16.msra.mxu0 %v253
    %1347 = vmatprep.subr.bf16.mxu0 %v252
    %1348 = vmatpush2.bf16.msra.mxu0 %v251
    %1349 = vmatprep.subr.bf16.mxu0 %v250
    %1350 = vmatpush2.bf16.msra.mxu0 %v249
    %1351 = vmatprep.subr.bf16.mxu0 %v248
    %1352 = vmatpush2.bf16.msra.mxu0 %v247
    %1353 = vmatprep.subr.bf16.mxu0 %v246
    %1354 = vmatpush2.bf16.msra.mxu0 %v245
    %1355 = vmatprep.subr.bf16.mxu0 %v244
    %1356 = vmatpush2.bf16.msra.mxu0 %v243
    %1357 = vmatprep.mubr.bf16.mxu0 %v1324
    %1358 = vmatmul.mubr.bf16.gmra.mxu0 %v1323
    %v1359 = vpop.f32.mrf.mxu0
    %v1360 = vadd.f32 %v1087, %v1359
    %v1361 = vpop.f32.mrf.mxu0
    %v1362 = vadd.f32 %v1091, %v1361
    %v1363 = vpop.f32.mrf.mxu0
    %v1364 = vpop.f32.mrf.mxu0
    %1365 = vdwg.mxu0
    %v1366 = vtanh.pop %v1360
    %v1367 = vtanh.pop %v1362
    %v1368 = vpack.c.bf16 %v1366, %v1366
    %v1369 = vpack.c.bf16 %v1367, %v1367
    %1370 = vmatprep.subr.bf16.mxu0 %v479
    %1371 = vmatpush1.bf16.msra.mxu0 %v478
    %1372 = vmatprep.subr.bf16.mxu0 %v477
    %1373 = vmatpush1.bf16.msra.mxu0 %v476
    %1374 = vmatprep.subr.bf16.mxu0 %v475
    %1375 = vmatpush1.bf16.msra.mxu0 %v474
    %1376 = vmatprep.subr.bf16.mxu0 %v473
    %1377 = vmatpush1.bf16.msra.mxu0 %v472
    %1378 = vmatprep.subr.bf16.mxu0 %v471
    %1379 = vmatpush1.bf16.msra.mxu0 %v470
    %1380 = vmatprep.subr.bf16.mxu0 %v469
    %1381 = vmatpush1.bf16.msra.mxu0 %v468
    %1382 = vmatprep.subr.bf16.mxu0 %v467
    %1383 = vmatpush1.bf16.msra.mxu0 %v466
    %1384 = vmatprep.subr.bf16.mxu0 %v465
    %1385 = vmatpush1.bf16.msra.mxu0 %v464
    %1386 = vmatprep.subr.bf16.mxu0 %v495
    %1387 = vmatpush2.bf16.msra.mxu0 %v494
    %1388 = vmatprep.subr.bf16.mxu0 %v493
    %1389 = vmatpush2.bf16.msra.mxu0 %v492
    %1390 = vmatprep.subr.bf16.mxu0 %v491
    %1391 = vmatpush2.bf16.msra.mxu0 %v490
    %1392 = vmatprep.subr.bf16.mxu0 %v489
    %1393 = vmatpush2.bf16.msra.mxu0 %v488
    %1394 = vmatprep.subr.bf16.mxu0 %v487
    %1395 = vmatpush2.bf16.msra.mxu0 %v486
    %1396 = vmatprep.subr.bf16.mxu0 %v485
    %1397 = vmatpush2.bf16.msra.mxu0 %v484
    %1398 = vmatprep.subr.bf16.mxu0 %v483
    %1399 = vmatpush2.bf16.msra.mxu0 %v482
    %1400 = vmatprep.subr.bf16.mxu0 %v481
    %1401 = vmatpush2.bf16.msra.mxu0 %v480
    %1402 = vmatprep.mubr.bf16.mxu0 %v1369
    %1403 = vmatmul.mubr.bf16.gmra.mxu0 %v1368
    %v1404 = vpop.f32.mrf.mxu0
    %v1405 = vpop.f32.mrf.mxu0
    %v1406 = vadd.f32 0.0, %v1405
    %v1407 = vpop.f32.mrf.mxu0
    %v1408 = vpop.f32.mrf.mxu0
    %1409 = vdwg.mxu0
    %v1410 = vmul.f32 %v1320, 0.9742842
    %v1411 = vmul.f32 %v1406, 0.08018079
    %v1412 = vadd.f32 %v1410, %v1411
    %v1413 = vmax.f32 %v1412, -1.0
    %v1414 = vmin.f32 %v1413, 1.0
    %v1415 = vsub.f32 %v1320, %v1414
    %v1416 = vmul.f32 %v1415, 12.31041
    %v1417 = vmul.f32 %v1416, -0.16245182
    %v1418 = vadd.f32 %v1210, %v1417
    %v1419 = vmul.f32 %v1212, 0.0009999811
    %v1420 = vadd.f32 %v1418, %v1419
    %1421 = vst [vmem:[%s5] sm:$0xff] %v1420
    %s1422 = scalar_lea.vmem [#allocation2], 144
    %v1423 = vld [vmem:[%s1422] sm:$0xff]
    %v1424 = vld [vmem:[%s1422 + $0x8] sm:$0xff]
    %v1425 = vmul.f32 %v1423, 3.0
    %v1426 = vmul.f32 %v1424, 3.0
    %s1427 = scalar_lea.vmem [#allocation2], 160
    %v1428 = vld [vmem:[%s1427] sm:$0xff]
    %v1429 = vld [vmem:[%s1427 + $0x8] sm:$0xff]
    %v1430 = vmul.f32 %v1428, 3.0
    %v1431 = vmul.f32 %v1429, 3.0
    %v1432 = vadd.f32 %v1420, %v1430
    %v1433 = vadd.f32 %v1431, 0.0
    %v1434 = vsel %vm64, %v1432, %v1425
    %v1435 = vsel %vm65, %v1433, %v1426
    %s1436 = scalar_lea.vmem [#allocation2], 176
    %v1437 = vld [vmem:[%s1436] sm:$0xff]
    %v1438 = vld [vmem:[%s1436 + $0x8] sm:$0xff]
    %v1439 = vmul.f32 %v1434, 0.32879797
    %v1440 = vmul.f32 %v1435, 0.32879797
    %v1441 = vpack.c.bf16 %v1439, %v1439
    %v1442 = vpack.c.bf16 %v1440, %v1440
    %v1443 = vld [vmem:[#allocation4] sm:$0xff]
    %v1444 = vld [vmem:[#allocation4 + $0x8] sm:$0xff]
    %v1445 = vld [vmem:[#allocation4 + $0x10] sm:$0xff]
    %v1446 = vld [vmem:[#allocation4 + $0x18] sm:$0xff]
    %v1447 = vld [vmem:[#allocation4 + $0x20] sm:$0xff]
    %v1448 = vld [vmem:[#allocation4 + $0x28] sm:$0xff]
    %v1449 = vld [vmem:[#allocation4 + $0x30] sm:$0xff]
    %v1450 = vld [vmem:[#allocation4 + $0x38] sm:$0xff]
    %v1451 = vld [vmem:[#allocation4 + $0x40] sm:$0xff]
    %v1452 = vld [vmem:[#allocation4 + $0x48] sm:$0xff]
    %v1453 = vld [vmem:[#allocation4 + $0x50] sm:$0xff]
    %v1454 = vld [vmem:[#allocation4 + $0x58] sm:$0xff]
    %v1455 = vld [vmem:[#allocation4 + $0x60] sm:$0xff]
    %v1456 = vld [vmem:[#allocation4 + $0x68] sm:$0xff]
    %v1457 = vld [vmem:[#allocation4 + $0x70] sm:$0xff]
    %v1458 = vld [vmem:[#allocation4 + $0x78] sm:$0xff]
    %v1459 = vld [vmem:[#allocation4 + $0x80] sm:$0xff]
    %v1460 = vld [vmem:[#allocation4 + $0x88] sm:$0xff]
    %v1461 = vld [vmem:[#allocation4 + $0x90] sm:$0xff]
    %v1462 = vld [vmem:[#allocation4 + $0x98] sm:$0xff]
    %v1463 = vld [vmem:[#allocation4 + $0xa0] sm:$0xff]
    %v1464 = vld [vmem:[#allocation4 + $0xa8] sm:$0xff]
    %v1465 = vld [vmem:[#allocation4 + $0xb0] sm:$0xff]
    %v1466 = vld [vmem:[#allocation4 + $0xb8] sm:$0xff]
    %v1467 = vld [vmem:[#allocation4 + $0xc0] sm:$0xff]
    %v1468 = vld [vmem:[#allocation4 + $0xc8] sm:$0xff]
    %v1469 = vld [vmem:[#allocation4 + $0xd0] sm:$0xff]
    %v1470 = vld [vmem:[#allocation4 + $0xd8] sm:$0xff]
    %v1471 = vld [vmem:[#allocation4 + $0xe0] sm:$0xff]
    %v1472 = vld [vmem:[#allocation4 + $0xe8] sm:$0xff]
    %v1473 = vld [vmem:[#allocation4 + $0xf0] sm:$0xff]
    %v1474 = vld [vmem:[#allocation4 + $0xf8] sm:$0xff]
    %v1475 = vld [vmem:[%s4] ss:$4 sm:$0x3]
    %v1477 = vlaneseq
    %v1478 = vshrl.u32 %v1477, 7
    %v1479 = vsub.s32 0, %v1478
    %v1480 = vrot.slane %v1475, %v1479
    %v1481 = vlaneseq
    %v1482 = vshrl.u32 %v1481, 7
    %v1483 = vsub.s32 1, %v1482
    %v1484 = vrot.slane %v1475, %v1483
    %v1519 = vunpack.c.l.b16 %v1443
    %v1520 = vunpack.c.h.b16 %v1443
    %v1521 = vunpack.c.l.b16 %v1444
    %v1522 = vunpack.c.h.b16 %v1444
    %v1523 = vunpack.c.l.b16 %v1445
    %v1524 = vunpack.c.h.b16 %v1445
    %v1525 = vunpack.c.l.b16 %v1446
    %v1526 = vunpack.c.h.b16 %v1446
    %v1527 = vunpack.c.l.b16 %v1447
    %v1528 = vunpack.c.h.b16 %v1447
    %v1529 = vunpack.c.l.b16 %v1448
    %v1530 = vunpack.c.h.b16 %v1448
    %v1531 = vunpack.c.l.b16 %v1449
    %v1532 = vunpack.c.h.b16 %v1449
    %v1533 = vunpack.c.l.b16 %v1450
    %v1534 = vunpack.c.h.b16 %v1450
    %v1535 = vunpack.c.l.b16 %v1451
    %v1536 = vunpack.c.h.b16 %v1451
    %v1537 = vunpack.c.l.b16 %v1452
    %v1538 = vunpack.c.h.b16 %v1452
    %v1539 = vunpack.c.l.b16 %v1453
    %v1540 = vunpack.c.h.b16 %v1453
    %v1541 = vunpack.c.l.b16 %v1454
    %v1542 = vunpack.c.h.b16 %v1454
    %v1543 = vunpack.c.l.b16 %v1455
    %v1544 = vunpack.c.h.b16 %v1455
    %v1545 = vunpack.c.l.b16 %v1456
    %v1546 = vunpack.c.h.b16 %v1456
    %v1547 = vunpack.c.l.b16 %v1457
    %v1548 = vunpack.c.h.b16 %v1457
    %v1549 = vunpack.c.l.b16 %v1458
    %v1550 = vunpack.c.h.b16 %v1458
    %v1551 = vunpack.c.l.b16 %v1459
    %v1552 = vunpack.c.h.b16 %v1459
    %v1553 = vunpack.c.l.b16 %v1460
    %v1554 = vunpack.c.h.b16 %v1460
    %v1555 = vunpack.c.l.b16 %v1461
    %v1556 = vunpack.c.h.b16 %v1461
    %v1557 = vunpack.c.l.b16 %v1462
    %v1558 = vunpack.c.h.b16 %v1462
    %v1559 = vunpack.c.l.b16 %v1463
    %v1560 = vunpack.c.h.b16 %v1463
    %v1561 = vunpack.c.l.b16 %v1464
    %v1562 = vunpack.c.h.b16 %v1464
    %v1563 = vunpack.c.l.b16 %v1465
    %v1564 = vunpack.c.h.b16 %v1465
    %v1565 = vunpack.c.l.b16 %v1466
    %v1566 = vunpack.c.h.b16 %v1466
    %v1567 = vunpack.c.l.b16 %v1467
    %v1568 = vunpack.c.h.b16 %v1467
    %v1569 = vunpack.c.l.b16 %v1468
    %v1570 = vunpack.c.h.b16 %v1468
    %v1571 = vunpack.c.l.b16 %v1469
    %v1572 = vunpack.c.h.b16 %v1469
    %v1573 = vunpack.c.l.b16 %v1470
    %v1574 = vunpack.c.h.b16 %v1470
    %v1575 = vunpack.c.l.b16 %v1471
    %v1576 = vunpack.c.h.b16 %v1471
    %v1577 = vunpack.c.l.b16 %v1472
    %v1578 = vunpack.c.h.b16 %v1472
    %v1579 = vunpack.c.l.b16 %v1473
    %v1580 = vunpack.c.h.b16 %v1473
    %v1581 = vunpack.c.l.b16 %v1474
    %v1582 = vunpack.c.h.b16 %v1474
    %v1583 = vpack.c.b16 %v1521, %v1519
    %v1584 = vpack.c.b16 %v1522, %v1520
    %v1585 = vpack.c.b16 %v1525, %v1523
    %v1586 = vpack.c.b16 %v1526, %v1524
    %v1587 = vpack.c.b16 %v1529, %v1527
    %v1588 = vpack.c.b16 %v1530, %v1528
    %v1589 = vpack.c.b16 %v1533, %v1531
    %v1590 = vpack.c.b16 %v1534, %v1532
    %v1591 = vpack.c.b16 %v1537, %v1535
    %v1592 = vpack.c.b16 %v1538, %v1536
    %v1593 = vpack.c.b16 %v1541, %v1539
    %v1594 = vpack.c.b16 %v1542, %v1540
    %v1595 = vpack.c.b16 %v1545, %v1543
    %v1596 = vpack.c.b16 %v1546, %v1544
    %v1597 = vpack.c.b16 %v1549, %v1547
    %v1598 = vpack.c.b16 %v1550, %v1548
    %v1599 = vpack.c.b16 %v1553, %v1551
    %v1600 = vpack.c.b16 %v1554, %v1552
    %v1601 = vpack.c.b16 %v1557, %v1555
    %v1602 = vpack.c.b16 %v1558, %v1556
    %v1603 = vpack.c.b16 %v1561, %v1559
    %v1604 = vpack.c.b16 %v1562, %v1560
    %v1605 = vpack.c.b16 %v1565, %v1563
    %v1606 = vpack.c.b16 %v1566, %v1564
    %v1607 = vpack.c.b16 %v1569, %v1567
    %v1608 = vpack.c.b16 %v1570, %v1568
    %v1609 = vpack.c.b16 %v1573, %v1571
    %v1610 = vpack.c.b16 %v1574, %v1572
    %v1611 = vpack.c.b16 %v1577, %v1575
    %v1612 = vpack.c.b16 %v1578, %v1576
    %v1613 = vpack.c.b16 %v1581, %v1579
    %v1614 = vpack.c.b16 %v1582, %v1580
    %1647 = vmatprep.subr.bf16.mxu0 %v1598
    %1648 = vmatpush1.bf16.msra.mxu0 %v1597
    %1649 = vmatprep.subr.bf16.mxu0 %v1596
    %1650 = vmatpush1.bf16.msra.mxu0 %v1595
    %1651 = vmatprep.subr.bf16.mxu0 %v1594
    %1652 = vmatpush1.bf16.msra.mxu0 %v1593
    %1653 = vmatprep.subr.bf16.mxu0 %v1592
    %1654 = vmatpush1.bf16.msra.mxu0 %v1591
    %1655 = vmatprep.subr.bf16.mxu0 %v1590
    %1656 = vmatpush1.bf16.msra.mxu0 %v1589
    %1657 = vmatprep.subr.bf16.mxu0 %v1588
    %1658 = vmatpush1.bf16.msra.mxu0 %v1587
    %1659 = vmatprep.subr.bf16.mxu0 %v1586
    %1660 = vmatpush1.bf16.msra.mxu0 %v1585
    %1661 = vmatprep.subr.bf16.mxu0 %v1584
    %1662 = vmatpush1.bf16.msra.mxu0 %v1583
    %1663 = vmatprep.subr.bf16.mxu0 %v1614
    %1664 = vmatpush2.bf16.msra.mxu0 %v1613
    %1665 = vmatprep.subr.bf16.mxu0 %v1612
    %1666 = vmatpush2.bf16.msra.mxu0 %v1611
    %1667 = vmatprep.subr.bf16.mxu0 %v1610
    %1668 = vmatpush2.bf16.msra.mxu0 %v1609
    %1669 = vmatprep.subr.bf16.mxu0 %v1608
    %1670 = vmatpush2.bf16.msra.mxu0 %v1607
    %1671 = vmatprep.subr.bf16.mxu0 %v1606
    %1672 = vmatpush2.bf16.msra.mxu0 %v1605
    %1673 = vmatprep.subr.bf16.mxu0 %v1604
    %1674 = vmatpush2.bf16.msra.mxu0 %v1603
    %1675 = vmatprep.subr.bf16.mxu0 %v1602
    %1676 = vmatpush2.bf16.msra.mxu0 %v1601
    %1677 = vmatprep.subr.bf16.mxu0 %v1600
    %1678 = vmatpush2.bf16.msra.mxu0 %v1599
    %1679 = vmatprep.mubr.bf16.mxu0 %v1442
    %1680 = vmatmul.mubr.bf16.gmra.mxu0 %v1441
    %v1681 = vpop.f32.mrf.mxu0
    %v1682 = vadd.f32 %v1480, %v1681
    %v1683 = vpop.f32.mrf.mxu0
    %v1684 = vadd.f32 %v1484, %v1683
    %v1685 = vpop.f32.mrf.mxu0
    %v1686 = vpop.f32.mrf.mxu0
    %1687 = vdwg.mxu0
    %v1688 = vtanh.pop %v1682
    %v1689 = vtanh.pop %v1684
    %v1690 = vpack.c.bf16 %v1688, %v1688
    %v1691 = vpack.c.bf16 %v1689, %v1689
    %v1692 = vld [vmem:[#allocation6] sm:$0xff]
    %v1693 = vld [vmem:[#allocation6 + $0x8] sm:$0xff]
    %v1694 = vld [vmem:[#allocation6 + $0x10] sm:$0xff]
    %v1695 = vld [vmem:[#allocation6 + $0x18] sm:$0xff]
    %v1696 = vld [vmem:[#allocation6 + $0x20] sm:$0xff]
    %v1697 = vld [vmem:[#allocation6 + $0x28] sm:$0xff]
    %v1698 = vld [vmem:[#allocation6 + $0x30] sm:$0xff]
    %v1699 = vld [vmem:[#allocation6 + $0x38] sm:$0xff]
    %v1700 = vld [vmem:[#allocation6 + $0x40] sm:$0xff]
    %v1701 = vld [vmem:[#allocation6 + $0x48] sm:$0xff]
    %v1702 = vld [vmem:[#allocation6 + $0x50] sm:$0xff]
    %v1703 = vld [vmem:[#allocation6 + $0x58] sm:$0xff]
    %v1704 = vld [vmem:[#allocation6 + $0x60] sm:$0xff]
    %v1705 = vld [vmem:[#allocation6 + $0x68] sm:$0xff]
    %v1706 = vld [vmem:[#allocation6 + $0x70] sm:$0xff]
    %v1707 = vld [vmem:[#allocation6 + $0x78] sm:$0xff]
    %v1708 = vld [vmem:[#allocation6 + $0x80] sm:$0xff]
    %v1709 = vld [vmem:[#allocation6 + $0x88] sm:$0xff]
    %v1710 = vld [vmem:[#allocation6 + $0x90] sm:$0xff]
    %v1711 = vld [vmem:[#allocation6 + $0x98] sm:$0xff]
    %v1712 = vld [vmem:[#allocation6 + $0xa0] sm:$0xff]
    %v1713 = vld [vmem:[#allocation6 + $0xa8] sm:$0xff]
    %v1714 = vld [vmem:[#allocation6 + $0xb0] sm:$0xff]
    %v1715 = vld [vmem:[#allocation6 + $0xb8] sm:$0xff]
    %v1716 = vld [vmem:[#allocation6 + $0xc0] sm:$0xff]
    %v1717 = vld [vmem:[#allocation6 + $0xc8] sm:$0xff]
    %v1718 = vld [vmem:[#allocation6 + $0xd0] sm:$0xff]
    %v1719 = vld [vmem:[#allocation6 + $0xd8] sm:$0xff]
    %v1720 = vld [vmem:[#allocation6 + $0xe0] sm:$0xff]
    %v1721 = vld [vmem:[#allocation6 + $0xe8] sm:$0xff]
    %v1722 = vld [vmem:[#allocation6 + $0xf0] sm:$0xff]
    %v1723 = vld [vmem:[#allocation6 + $0xf8] sm:$0xff]
    %v1756 = vunpack.c.l.b16 %v1692
    %v1757 = vunpack.c.h.b16 %v1692
    %v1758 = vunpack.c.l.b16 %v1693
    %v1759 = vunpack.c.h.b16 %v1693
    %v1760 = vunpack.c.l.b16 %v1694
    %v1761 = vunpack.c.h.b16 %v1694
    %v1762 = vunpack.c.l.b16 %v1695
    %v1763 = vunpack.c.h.b16 %v1695
    %v1764 = vunpack.c.l.b16 %v1696
    %v1765 = vunpack.c.h.b16 %v1696
    %v1766 = vunpack.c.l.b16 %v1697
    %v1767 = vunpack.c.h.b16 %v1697
    %v1768 = vunpack.c.l.b16 %v1698
    %v1769 = vunpack.c.h.b16 %v1698
    %v1770 = vunpack.c.l.b16 %v1699
    %v1771 = vunpack.c.h.b16 %v1699
    %v1772 = vunpack.c.l.b16 %v1700
    %v1773 = vunpack.c.h.b16 %v1700
    %v1774 = vunpack.c.l.b16 %v1701
    %v1775 = vunpack.c.h.b16 %v1701
    %v1776 = vunpack.c.l.b16 %v1702
    %v1777 = vunpack.c.h.b16 %v1702
    %v1778 = vunpack.c.l.b16 %v1703
    %v1779 = vunpack.c.h.b16 %v1703
    %v1780 = vunpack.c.l.b16 %v1704
    %v1781 = vunpack.c.h.b16 %v1704
    %v1782 = vunpack.c.l.b16 %v1705
    %v1783 = vunpack.c.h.b16 %v1705
    %v1784 = vunpack.c.l.b16 %v1706
    %v1785 = vunpack.c.h.b16 %v1706
    %v1786 = vunpack.c.l.b16 %v1707
    %v1787 = vunpack.c.h.b16 %v1707
    %v1788 = vunpack.c.l.b16 %v1708
    %v1789 = vunpack.c.h.b16 %v1708
    %v1790 = vunpack.c.l.b16 %v1709
    %v1791 = vunpack.c.h.b16 %v1709
    %v1792 = vunpack.c.l.b16 %v1710
    %v1793 = vunpack.c.h.b16 %v1710
    %v1794 = vunpack.c.l.b16 %v1711
    %v1795 = vunpack.c.h.b16 %v1711
    %v1796 = vunpack.c.l.b16 %v1712
    %v1797 = vunpack.c.h.b16 %v1712
    %v1798 = vunpack.c.l.b16 %v1713
    %v1799 = vunpack.c.h.b16 %v1713
    %v1800 = vunpack.c.l.b16 %v1714
    %v1801 = vunpack.c.h.b16 %v1714
    %v1802 = vunpack.c.l.b16 %v1715
    %v1803 = vunpack.c.h.b16 %v1715
    %v1804 = vunpack.c.l.b16 %v1716
    %v1805 = vunpack.c.h.b16 %v1716
    %v1806 = vunpack.c.l.b16 %v1717
    %v1807 = vunpack.c.h.b16 %v1717
    %v1808 = vunpack.c.l.b16 %v1718
    %v1809 = vunpack.c.h.b16 %v1718
    %v1810 = vunpack.c.l.b16 %v1719
    %v1811 = vunpack.c.h.b16 %v1719
    %v1812 = vunpack.c.l.b16 %v1720
    %v1813 = vunpack.c.h.b16 %v1720
    %v1814 = vunpack.c.l.b16 %v1721
    %v1815 = vunpack.c.h.b16 %v1721
    %v1816 = vunpack.c.l.b16 %v1722
    %v1817 = vunpack.c.h.b16 %v1722
    %v1818 = vunpack.c.l.b16 %v1723
    %v1819 = vunpack.c.h.b16 %v1723
    %v1820 = vpack.c.b16 %v1758, %v1756
    %v1821 = vpack.c.b16 %v1759, %v1757
    %v1822 = vpack.c.b16 %v1762, %v1760
    %v1823 = vpack.c.b16 %v1763, %v1761
    %v1824 = vpack.c.b16 %v1766, %v1764
    %v1825 = vpack.c.b16 %v1767, %v1765
    %v1826 = vpack.c.b16 %v1770, %v1768
    %v1827 = vpack.c.b16 %v1771, %v1769
    %v1828 = vpack.c.b16 %v1774, %v1772
    %v1829 = vpack.c.b16 %v1775, %v1773
    %v1830 = vpack.c.b16 %v1778, %v1776
    %v1831 = vpack.c.b16 %v1779, %v1777
    %v1832 = vpack.c.b16 %v1782, %v1780
    %v1833 = vpack.c.b16 %v1783, %v1781
    %v1834 = vpack.c.b16 %v1786, %v1784
    %v1835 = vpack.c.b16 %v1787, %v1785
    %v1836 = vpack.c.b16 %v1790, %v1788
    %v1837 = vpack.c.b16 %v1791, %v1789
    %v1838 = vpack.c.b16 %v1794, %v1792
    %v1839 = vpack.c.b16 %v1795, %v1793
    %v1840 = vpack.c.b16 %v1798, %v1796
    %v1841 = vpack.c.b16 %v1799, %v1797
    %v1842 = vpack.c.b16 %v1802, %v1800
    %v1843 = vpack.c.b16 %v1803, %v1801
    %v1844 = vpack.c.b16 %v1806, %v1804
    %v1845 = vpack.c.b16 %v1807, %v1805
    %v1846 = vpack.c.b16 %v1810, %v1808
    %v1847 = vpack.c.b16 %v1811, %v1809
    %v1848 = vpack.c.b16 %v1814, %v1812
    %v1849 = vpack.c.b16 %v1815, %v1813
    %v1850 = vpack.c.b16 %v1818, %v1816
    %v1851 = vpack.c.b16 %v1819, %v1817
    %1884 = vmatprep.subr.bf16.mxu0 %v1835
    %1885 = vmatpush1.bf16.msra.mxu0 %v1834
    %1886 = vmatprep.subr.bf16.mxu0 %v1833
    %1887 = vmatpush1.bf16.msra.mxu0 %v1832
    %1888 = vmatprep.subr.bf16.mxu0 %v1831
    %1889 = vmatpush1.bf16.msra.mxu0 %v1830
    %1890 = vmatprep.subr.bf16.mxu0 %v1829
    %1891 = vmatpush1.bf16.msra.mxu0 %v1828
    %1892 = vmatprep.subr.bf16.mxu0 %v1827
    %1893 = vmatpush1.bf16.msra.mxu0 %v1826
    %1894 = vmatprep.subr.bf16.mxu0 %v1825
    %1895 = vmatpush1.bf16.msra.mxu0 %v1824
    %1896 = vmatprep.subr.bf16.mxu0 %v1823
    %1897 = vmatpush1.bf16.msra.mxu0 %v1822
    %1898 = vmatprep.subr.bf16.mxu0 %v1821
    %1899 = vmatpush1.bf16.msra.mxu0 %v1820
    %1900 = vmatprep.subr.bf16.mxu0 %v1851
    %1901 = vmatpush2.bf16.msra.mxu0 %v1850
    %1902 = vmatprep.subr.bf16.mxu0 %v1849
    %1903 = vmatpush2.bf16.msra.mxu0 %v1848
    %1904 = vmatprep.subr.bf16.mxu0 %v1847
    %1905 = vmatpush2.bf16.msra.mxu0 %v1846
    %1906 = vmatprep.subr.bf16.mxu0 %v1845
    %1907 = vmatpush2.bf16.msra.mxu0 %v1844
    %1908 = vmatprep.subr.bf16.mxu0 %v1843
    %1909 = vmatpush2.bf16.msra.mxu0 %v1842
    %1910 = vmatprep.subr.bf16.mxu0 %v1841
    %1911 = vmatpush2.bf16.msra.mxu0 %v1840
    %1912 = vmatprep.subr.bf16.mxu0 %v1839
    %1913 = vmatpush2.bf16.msra.mxu0 %v1838
    %1914 = vmatprep.subr.bf16.mxu0 %v1837
    %1915 = vmatpush2.bf16.msra.mxu0 %v1836
    %1916 = vmatprep.mubr.bf16.mxu0 %v1691
    %1917 = vmatmul.mubr.bf16.gmra.mxu0 %v1690
    %v1918 = vpop.f32.mrf.mxu0
    %v1919 = vadd.f32 0.0, %v1918
    %v1920 = vpop.f32.mrf.mxu0
    %v1921 = vadd.f32 0.0, %v1920
    %v1922 = vpop.f32.mrf.mxu0
    %v1923 = vpop.f32.mrf.mxu0
    %1924 = vdwg.mxu0
    %v1925 = vmul.f32 %v1434, 0.027027028
    %v1926 = vmul.f32 %v1435, 0.027027028
    %v1927 = vmul.f32 %v1919, 0.49319696
    %v1928 = vmul.f32 %v1921, 0.49319696
    %v1929 = vadd.f32 %v1925, %v1927
    %v1930 = vadd.f32 %v1926, %v1928
    %v1931 = vmax.f32 %v1929, -1.0
    %v1932 = vmax.f32 %v1930, -1.0
    %v1933 = vmin.f32 %v1931, 1.0
    %v1934 = vmin.f32 %v1932, 1.0
    %v1935 = vsub.f32 %v1434, %v1933
    %v1936 = vsub.f32 %v1435, %v1934
    %v1937 = vmul.f32 %v1935, 0.33333334
    %v1938 = vmul.f32 %v1936, 0.33333334
    %v1939 = vmul.f32 %v1937, -1.4956012
    %v1940 = vmul.f32 %v1938, -1.4956012
    %v1941 = vadd.f32 %v1434, %v1939
    %v1942 = vadd.f32 %v1435, %v1940
    %v1943 = vmul.f32 %v1941, 0.6307905
    %v1944 = vmul.f32 %v1942, 0.6307905
    %v1945 = vpack.c.bf16 %v1943, %v1943
    %v1946 = vpack.c.bf16 %v1944, %v1944
    %v1947 = vld [vmem:[%s591] ss:$4 sm:$0x3]
    %v1949 = vlaneseq
    %v1950 = vshrl.u32 %v1949, 7
    %v1951 = vsub.s32 0, %v1950
    %v1952 = vrot.slane %v1947, %v1951
    %v1953 = vlaneseq
    %v1954 = vshrl.u32 %v1953, 7
    %v1955 = vsub.s32 1, %v1954
    %v1956 = vrot.slane %v1947, %v1955
    %1959 = vmatprep.subr.bf16.mxu0 %v1598
    %1960 = vmatpush1.bf16.msra.mxu0 %v1597
    %1961 = vmatprep.subr.bf16.mxu0 %v1596
    %1962 = vmatpush1.bf16.msra.mxu0 %v1595
    %1963 = vmatprep.subr.bf16.mxu0 %v1594
    %1964 = vmatpush1.bf16.msra.mxu0 %v1593
    %1965 = vmatprep.subr.bf16.mxu0 %v1592
    %1966 = vmatpush1.bf16.msra.mxu0 %v1591
    %1967 = vmatprep.subr.bf16.mxu0 %v1590
    %1968 = vmatpush1.bf16.msra.mxu0 %v1589
    %1969 = vmatprep.subr.bf16.mxu0 %v1588
    %1970 = vmatpush1.bf16.msra.mxu0 %v1587
    %1971 = vmatprep.subr.bf16.mxu0 %v1586
    %1972 = vmatpush1.bf16.msra.mxu0 %v1585
    %1973 = vmatprep.subr.bf16.mxu0 %v1584
    %1974 = vmatpush1.bf16.msra.mxu0 %v1583
    %1975 = vmatprep.subr.bf16.mxu0 %v1614
    %1976 = vmatpush2.bf16.msra.mxu0 %v1613
    %1977 = vmatprep.subr.bf16.mxu0 %v1612
    %1978 = vmatpush2.bf16.msra.mxu0 %v1611
    %1979 = vmatprep.subr.bf16.mxu0 %v1610
    %1980 = vmatpush2.bf16.msra.mxu0 %v1609
    %1981 = vmatprep.subr.bf16.mxu0 %v1608
    %1982 = vmatpush2.bf16.msra.mxu0 %v1607
    %1983 = vmatprep.subr.bf16.mxu0 %v1606
    %1984 = vmatpush2.bf16.msra.mxu0 %v1605
    %1985 = vmatprep.subr.bf16.mxu0 %v1604
    %1986 = vmatpush2.bf16.msra.mxu0 %v1603
    %1987 = vmatprep.subr.bf16.mxu0 %v1602
    %1988 = vmatpush2.bf16.msra.mxu0 %v1601
    %1989 = vmatprep.subr.bf16.mxu0 %v1600
    %1990 = vmatpush2.bf16.msra.mxu0 %v1599
    %1991 = vmatprep.mubr.bf16.mxu0 %v1946
    %1992 = vmatmul.mubr.bf16.gmra.mxu0 %v1945
    %v1993 = vpop.f32.mrf.mxu0
    %v1994 = vadd.f32 %v1952, %v1993
    %v1995 = vpop.f32.mrf.mxu0
    %v1996 = vadd.f32 %v1956, %v1995
    %v1997 = vpop.f32.mrf.mxu0
    %v1998 = vpop.f32.mrf.mxu0
    %1999 = vdwg.mxu0
    %v2000 = vtanh.pop %v1994
    %v2001 = vtanh.pop %v1996
    %v2002 = vpack.c.bf16 %v2000, %v2000
    %v2003 = vpack.c.bf16 %v2001, %v2001
    %2004 = vmatprep.subr.bf16.mxu0 %v1835
    %2005 = vmatpush1.bf16.msra.mxu0 %v1834
    %2006 = vmatprep.subr.bf16.mxu0 %v1833
    %2007 = vmatpush1.bf16.msra.mxu0 %v1832
    %2008 = vmatprep.subr.bf16.mxu0 %v1831
    %2009 = vmatpush1.bf16.msra.mxu0 %v1830
    %2010 = vmatprep.subr.bf16.mxu0 %v1829
    %2011 = vmatpush1.bf16.msra.mxu0 %v1828
    %2012 = vmatprep.subr.bf16.mxu0 %v1827
    %2013 = vmatpush1.bf16.msra.mxu0 %v1826
    %2014 = vmatprep.subr.bf16.mxu0 %v1825
    %2015 = vmatpush1.bf16.msra.mxu0 %v1824
    %2016 = vmatprep.subr.bf16.mxu0 %v1823
    %2017 = vmatpush1.bf16.msra.mxu0 %v1822
    %2018 = vmatprep.subr.bf16.mxu0 %v1821
    %2019 = vmatpush1.bf16.msra.mxu0 %v1820
    %2020 = vmatprep.subr.bf16.mxu0 %v1851
    %2021 = vmatpush2.bf16.msra.mxu0 %v1850
    %2022 = vmatprep.subr.bf16.mxu0 %v1849
    %2023 = vmatpush2.bf16.msra.mxu0 %v1848
    %2024 = vmatprep.subr.bf16.mxu0 %v1847
    %2025 = vmatpush2.bf16.msra.mxu0 %v1846
    %2026 = vmatprep.subr.bf16.mxu0 %v1845
    %2027 = vmatpush2.bf16.msra.mxu0 %v1844
    %2028 = vmatprep.subr.bf16.mxu0 %v1843
    %2029 = vmatpush2.bf16.msra.mxu0 %v1842
    %2030 = vmatprep.subr.bf16.mxu0 %v1841
    %2031 = vmatpush2.bf16.msra.mxu0 %v1840
    %2032 = vmatprep.subr.bf16.mxu0 %v1839
    %2033 = vmatpush2.bf16.msra.mxu0 %v1838
    %2034 = vmatprep.subr.bf16.mxu0 %v1837
    %2035 = vmatpush2.bf16.msra.mxu0 %v1836
    %2036 = vmatprep.mubr.bf16.mxu0 %v2003
    %2037 = vmatmul.mubr.bf16.gmra.mxu0 %v2002
    %v2038 = vpop.f32.mrf.mxu0
    %v2039 = vadd.f32 0.0, %v2038
    %v2040 = vpop.f32.mrf.mxu0
    %v2041 = vadd.f32 0.0, %v2040
    %v2042 = vpop.f32.mrf.mxu0
    %v2043 = vpop.f32.mrf.mxu0
    %2044 = vdwg.mxu0
    %v2045 = vmul.f32 %v1941, 0.099474154
    %v2046 = vmul.f32 %v1942, 0.099474154
    %v2047 = vmul.f32 %v2039, 0.4744802
    %v2048 = vmul.f32 %v2041, 0.4744802
    %v2049 = vadd.f32 %v2045, %v2047
    %v2050 = vadd.f32 %v2046, %v2048
    %v2051 = vmax.f32 %v2049, -1.0
    %v2052 = vmax.f32 %v2050, -1.0
    %v2053 = vmin.f32 %v2051, 1.0
    %v2054 = vmin.f32 %v2052, 1.0
    %v2055 = vsub.f32 %v1941, %v2053
    %v2056 = vsub.f32 %v1942, %v2054
    %v2057 = vmul.f32 %v2055, 0.6647174
    %v2058 = vmul.f32 %v2056, 0.6647174
    %v2059 = vmul.f32 %v2057, -2.9912024
    %v2060 = vmul.f32 %v2058, -2.9912024
    %v2061 = vadd.f32 %v1434, %v2059
    %v2062 = vadd.f32 %v1435, %v2060
    %v2063 = vmul.f32 %v1437, 0.1622196
    %v2064 = vmul.f32 %v1438, 0.1622196
    %v2065 = vadd.f32 %v2061, %v2063
    %v2066 = vadd.f32 %v2062, %v2064
    %s2067 = scalar_lea.vmem [#allocation2], 192
    %v2068 = vld [vmem:[%s2067] sm:$0xff]
    %v2069 = vld [vmem:[%s2067 + $0x8] sm:$0xff]
    %v2070 = vmul.f32 %v2068, 2.995598
    %v2071 = vmul.f32 %v2069, 2.995598
    %v2072 = vadd.f32 %v2065, %v2070
    %v2073 = vadd.f32 %v2066, %v2071
    %v2074 = vsel %vm64, %v1432, %v2072
    %v2075 = vsel %vm65, %v1433, %v2073
    %s2076 = scalar_lea.vmem [#allocation2], 208
    %v2077 = vld [vmem:[%s2076] sm:$0xff]
    %v2078 = vld [vmem:[%s2076 + $0x8] sm:$0xff]
    %v2079 = vmul.f32 %v2074, 0.32879797
    %v2080 = vmul.f32 %v2075, 0.32879797
    %v2081 = vpack.c.bf16 %v2079, %v2079
    %v2082 = vpack.c.bf16 %v2080, %v2080
    %2083 = vmatprep.subr.bf16.mxu0 %v1598
    %2084 = vmatpush1.bf16.msra.mxu0 %v1597
    %2085 = vmatprep.subr.bf16.mxu0 %v1596
    %2086 = vmatpush1.bf16.msra.mxu0 %v1595
    %2087 = vmatprep.subr.bf16.mxu0 %v1594
    %2088 = vmatpush1.bf16.msra.mxu0 %v1593
    %2089 = vmatprep.subr.bf16.mxu0 %v1592
    %2090 = vmatpush1.bf16.msra.mxu0 %v1591
    %2091 = vmatprep.subr.bf16.mxu0 %v1590
    %2092 = vmatpush1.bf16.msra.mxu0 %v1589
    %2093 = vmatprep.subr.bf16.mxu0 %v1588
    %2094 = vmatpush1.bf16.msra.mxu0 %v1587
    %2095 = vmatprep.subr.bf16.mxu0 %v1586
    %2096 = vmatpush1.bf16.msra.mxu0 %v1585
    %2097 = vmatprep.subr.bf16.mxu0 %v1584
    %2098 = vmatpush1.bf16.msra.mxu0 %v1583
    %2099 = vmatprep.subr.bf16.mxu0 %v1614
    %2100 = vmatpush2.bf16.msra.mxu0 %v1613
    %2101 = vmatprep.subr.bf16.mxu0 %v1612
    %2102 = vmatpush2.bf16.msra.mxu0 %v1611
    %2103 = vmatprep.subr.bf16.mxu0 %v1610
    %2104 = vmatpush2.bf16.msra.mxu0 %v1609
    %2105 = vmatprep.subr.bf16.mxu0 %v1608
    %2106 = vmatpush2.bf16.msra.mxu0 %v1607
    %2107 = vmatprep.subr.bf16.mxu0 %v1606
    %2108 = vmatpush2.bf16.msra.mxu0 %v1605
    %2109 = vmatprep.subr.bf16.mxu0 %v1604
    %2110 = vmatpush2.bf16.msra.mxu0 %v1603
    %2111 = vmatprep.subr.bf16.mxu0 %v1602
    %2112 = vmatpush2.bf16.msra.mxu0 %v1601
    %2113 = vmatprep.subr.bf16.mxu0 %v1600
    %2114 = vmatpush2.bf16.msra.mxu0 %v1599
    %2115 = vmatprep.mubr.bf16.mxu0 %v2082
    %2116 = vmatmul.mubr.bf16.gmra.mxu0 %v2081
    %v2117 = vpop.f32.mrf.mxu0
    %v2118 = vadd.f32 %v1480, %v2117
    %v2119 = vpop.f32.mrf.mxu0
    %v2120 = vadd.f32 %v1484, %v2119
    %v2121 = vpop.f32.mrf.mxu0
    %v2122 = vpop.f32.mrf.mxu0
    %2123 = vdwg.mxu0
    %v2124 = vtanh.pop %v2118
    %v2125 = vtanh.pop %v2120
    %v2126 = vpack.c.bf16 %v2124, %v2124
    %v2127 = vpack.c.bf16 %v2125, %v2125
    %2128 = vmatprep.subr.bf16.mxu0 %v1835
    %2129 = vmatpush1.bf16.msra.mxu0 %v1834
    %2130 = vmatprep.subr.bf16.mxu0 %v1833
    %2131 = vmatpush1.bf16.msra.mxu0 %v1832
    %2132 = vmatprep.subr.bf16.mxu0 %v1831
    %2133 = vmatpush1.bf16.msra.mxu0 %v1830
    %2134 = vmatprep.subr.bf16.mxu0 %v1829
    %2135 = vmatpush1.bf16.msra.mxu0 %v1828
    %2136 = vmatprep.subr.bf16.mxu0 %v1827
    %2137 = vmatpush1.bf16.msra.mxu0 %v1826
    %2138 = vmatprep.subr.bf16.mxu0 %v1825
    %2139 = vmatpush1.bf16.msra.mxu0 %v1824
    %2140 = vmatprep.subr.bf16.mxu0 %v1823
    %2141 = vmatpush1.bf16.msra.mxu0 %v1822
    %2142 = vmatprep.subr.bf16.mxu0 %v1821
    %2143 = vmatpush1.bf16.msra.mxu0 %v1820
    %2144 = vmatprep.subr.bf16.mxu0 %v1851
    %2145 = vmatpush2.bf16.msra.mxu0 %v1850
    %2146 = vmatprep.subr.bf16.mxu0 %v1849
    %2147 = vmatpush2.bf16.msra.mxu0 %v1848
    %2148 = vmatprep.subr.bf16.mxu0 %v1847
    %2149 = vmatpush2.bf16.msra.mxu0 %v1846
    %2150 = vmatprep.subr.bf16.mxu0 %v1845
    %2151 = vmatpush2.bf16.msra.mxu0 %v1844
    %2152 = vmatprep.subr.bf16.mxu0 %v1843
    %2153 = vmatpush2.bf16.msra.mxu0 %v1842
    %2154 = vmatprep.subr.bf16.mxu0 %v1841
    %2155 = vmatpush2.bf16.msra.mxu0 %v1840
    %2156 = vmatprep.subr.bf16.mxu0 %v1839
    %2157 = vmatpush2.bf16.msra.mxu0 %v1838
    %2158 = vmatprep.subr.bf16.mxu0 %v1837
    %2159 = vmatpush2.bf16.msra.mxu0 %v1836
    %2160 = vmatprep.mubr.bf16.mxu0 %v2127
    %2161 = vmatmul.mubr.bf16.gmra.mxu0 %v2126
    %v2162 = vpop.f32.mrf.mxu0
    %v2163 = vadd.f32 0.0, %v2162
    %v2164 = vpop.f32.mrf.mxu0
    %v2165 = vadd.f32 0.0, %v2164
    %v2166 = vpop.f32.mrf.mxu0
    %v2167 = vpop.f32.mrf.mxu0
    %2168 = vdwg.mxu0
    %v2169 = vmul.f32 %v2074, 0.027027028
    %v2170 = vmul.f32 %v2075, 0.027027028
    %v2171 = vmul.f32 %v2163, 0.49319696
    %v2172 = vmul.f32 %v2165, 0.49319696
    %v2173 = vadd.f32 %v2169, %v2171
    %v2174 = vadd.f32 %v2170, %v2172
    %v2175 = vmax.f32 %v2173, -1.0
    %v2176 = vmax.f32 %v2174, -1.0
    %v2177 = vmin.f32 %v2175, 1.0
    %v2178 = vmin.f32 %v2176, 1.0
    %v2179 = vsub.f32 %v2074, %v2177
    %v2180 = vsub.f32 %v2075, %v2178
    %v2181 = vmul.f32 %v2179, 0.33333334
    %v2182 = vmul.f32 %v2180, 0.33333334
    %v2183 = vmul.f32 %v2181, -1.4956012
    %v2184 = vmul.f32 %v2182, -1.4956012
    %v2185 = vadd.f32 %v2074, %v2183
    %v2186 = vadd.f32 %v2075, %v2184
    %v2187 = vmul.f32 %v2185, 0.6307905
    %v2188 = vmul.f32 %v2186, 0.6307905
    %v2189 = vpack.c.bf16 %v2187, %v2187
    %v2190 = vpack.c.bf16 %v2188, %v2188
    %2191 = vmatprep.subr.bf16.mxu0 %v1598
    %2192 = vmatpush1.bf16.msra.mxu0 %v1597
    %2193 = vmatprep.subr.bf16.mxu0 %v1596
    %2194 = vmatpush1.bf16.msra.mxu0 %v1595
    %2195 = vmatprep.subr.bf16.mxu0 %v1594
    %2196 = vmatpush1.bf16.msra.mxu0 %v1593
    %2197 = vmatprep.subr.bf16.mxu0 %v1592
    %2198 = vmatpush1.bf16.msra.mxu0 %v1591
    %2199 = vmatprep.subr.bf16.mxu0 %v1590
    %2200 = vmatpush1.bf16.msra.mxu0 %v1589
    %2201 = vmatprep.subr.bf16.mxu0 %v1588
    %2202 = vmatpush1.bf16.msra.mxu0 %v1587
    %2203 = vmatprep.subr.bf16.mxu0 %v1586
    %2204 = vmatpush1.bf16.msra.mxu0 %v1585
    %2205 = vmatprep.subr.bf16.mxu0 %v1584
    %2206 = vmatpush1.bf16.msra.mxu0 %v1583
    %2207 = vmatprep.subr.bf16.mxu0 %v1614
    %2208 = vmatpush2.bf16.msra.mxu0 %v1613
    %2209 = vmatprep.subr.bf16.mxu0 %v1612
    %2210 = vmatpush2.bf16.msra.mxu0 %v1611
    %2211 = vmatprep.subr.bf16.mxu0 %v1610
    %2212 = vmatpush2.bf16.msra.mxu0 %v1609
    %2213 = vmatprep.subr.bf16.mxu0 %v1608
    %2214 = vmatpush2.bf16.msra.mxu0 %v1607
    %2215 = vmatprep.subr.bf16.mxu0 %v1606
    %2216 = vmatpush2.bf16.msra.mxu0 %v1605
    %2217 = vmatprep.subr.bf16.mxu0 %v1604
    %2218 = vmatpush2.bf16.msra.mxu0 %v1603
    %2219 = vmatprep.subr.bf16.mxu0 %v1602
    %2220 = vmatpush2.bf16.msra.mxu0 %v1601
    %2221 = vmatprep.subr.bf16.mxu0 %v1600
    %2222 = vmatpush2.bf16.msra.mxu0 %v1599
    %2223 = vmatprep.mubr.bf16.mxu0 %v2190
    %2224 = vmatmul.mubr.bf16.gmra.mxu0 %v2189
    %v2225 = vpop.f32.mrf.mxu0
    %v2226 = vadd.f32 %v1952, %v2225
    %v2227 = vpop.f32.mrf.mxu0
    %v2228 = vadd.f32 %v1956, %v2227
    %v2229 = vpop.f32.mrf.mxu0
    %v2230 = vpop.f32.mrf.mxu0
    %2231 = vdwg.mxu0
    %v2232 = vtanh.pop %v2226
    %v2233 = vtanh.pop %v2228
    %v2234 = vpack.c.bf16 %v2232, %v2232
    %v2235 = vpack.c.bf16 %v2233, %v2233
    %2236 = vmatprep.subr.bf16.mxu0 %v1835
    %2237 = vmatpush1.bf16.msra.mxu0 %v1834
    %2238 = vmatprep.subr.bf16.mxu0 %v1833
    %2239 = vmatpush1.bf16.msra.mxu0 %v1832
    %2240 = vmatprep.subr.bf16.mxu0 %v1831
    %2241 = vmatpush1.bf16.msra.mxu0 %v1830
    %2242 = vmatprep.subr.bf16.mxu0 %v1829
    %2243 = vmatpush1.bf16.msra.mxu0 %v1828
    %2244 = vmatprep.subr.bf16.mxu0 %v1827
    %2245 = vmatpush1.bf16.msra.mxu0 %v1826
    %2246 = vmatprep.subr.bf16.mxu0 %v1825
    %2247 = vmatpush1.bf16.msra.mxu0 %v1824
    %2248 = vmatprep.subr.bf16.mxu0 %v1823
    %2249 = vmatpush1.bf16.msra.mxu0 %v1822
    %2250 = vmatprep.subr.bf16.mxu0 %v1821
    %2251 = vmatpush1.bf16.msra.mxu0 %v1820
    %2252 = vmatprep.subr.bf16.mxu0 %v1851
    %2253 = vmatpush2.bf16.msra.mxu0 %v1850
    %2254 = vmatprep.subr.bf16.mxu0 %v1849
    %2255 = vmatpush2.bf16.msra.mxu0 %v1848
    %2256 = vmatprep.subr.bf16.mxu0 %v1847
    %2257 = vmatpush2.bf16.msra.mxu0 %v1846
    %2258 = vmatprep.subr.bf16.mxu0 %v1845
    %2259 = vmatpush2.bf16.msra.mxu0 %v1844
    %2260 = vmatprep.subr.bf16.mxu0 %v1843
    %2261 = vmatpush2.bf16.msra.mxu0 %v1842
    %2262 = vmatprep.subr.bf16.mxu0 %v1841
    %2263 = vmatpush2.bf16.msra.mxu0 %v1840
    %2264 = vmatprep.subr.bf16.mxu0 %v1839
    %2265 = vmatpush2.bf16.msra.mxu0 %v1838
    %2266 = vmatprep.subr.bf16.mxu0 %v1837
    %2267 = vmatpush2.bf16.msra.mxu0 %v1836
    %2268 = vmatprep.mubr.bf16.mxu0 %v2235
    %2269 = vmatmul.mubr.bf16.gmra.mxu0 %v2234
    %v2270 = vpop.f32.mrf.mxu0
    %v2271 = vadd.f32 0.0, %v2270
    %v2272 = vpop.f32.mrf.mxu0
    %v2273 = vadd.f32 0.0, %v2272
    %v2274 = vpop.f32.mrf.mxu0
    %v2275 = vpop.f32.mrf.mxu0
    %2276 = vdwg.mxu0
    %v2277 = vmul.f32 %v2185, 0.099474154
    %v2278 = vmul.f32 %v2186, 0.099474154
    %v2279 = vmul.f32 %v2271, 0.4744802
    %v2280 = vmul.f32 %v2273, 0.4744802
    %v2281 = vadd.f32 %v2277, %v2279
    %v2282 = vadd.f32 %v2278, %v2280
    %v2283 = vmax.f32 %v2281, -1.0
    %v2284 = vmax.f32 %v2282, -1.0
    %v2285 = vmin.f32 %v2283, 1.0
    %v2286 = vmin.f32 %v2284, 1.0
    %v2287 = vsub.f32 %v2185, %v2285
    %v2288 = vsub.f32 %v2186, %v2286
    %v2289 = vmul.f32 %v2287, 0.6647174
    %v2290 = vmul.f32 %v2288, 0.6647174
    %v2291 = vmul.f32 %v2289, -2.9912024
    %v2292 = vmul.f32 %v2290, -2.9912024
    %v2293 = vadd.f32 %v2074, %v2291
    %v2294 = vadd.f32 %v2075, %v2292
    %v2295 = vmul.f32 %v2077, 0.1622196
    %v2296 = vmul.f32 %v2078, 0.1622196
    %v2297 = vadd.f32 %v2293, %v2295
    %v2298 = vadd.f32 %v2294, %v2296
    %s2299 = scalar_lea.vmem [#allocation2], 224
    %v2300 = vld [vmem:[%s2299] sm:$0xff]
    %v2301 = vld [vmem:[%s2299 + $0x8] sm:$0xff]
    %v2302 = vmul.f32 %v2300, 0.16245797
    %v2303 = vmul.f32 %v2301, 0.16245797
    %v2304 = vadd.f32 %v1420, %v2302
    %v2305 = vadd.f32 %v2303, 0.0
    %v2306 = vsel %vm64, %v2304, %v2297
    %v2307 = vsel %vm65, %v2305, %v2298
    %s2308 = scalar_lea.vmem [#allocation2], 240
    %v2309 = vld [vmem:[%s2308] sm:$0xff]
    %v2310 = vld [vmem:[%s2308 + $0x8] sm:$0xff]
    %v2311 = vmul.f32 %v2306, 1.9021151
    %v2312 = vmul.f32 %v2307, 1.9021151
    %v2313 = vpack.c.bf16 %v2311, %v2311
    %v2314 = vpack.c.bf16 %v2312, %v2312
    %v2315 = vld [vmem:[%s960] ss:$4 sm:$0x3]
    %v2317 = vlaneseq
    %v2318 = vshrl.u32 %v2317, 7
    %v2319 = vsub.s32 0, %v2318
    %v2320 = vrot.slane %v2315, %v2319
    %v2321 = vlaneseq
    %v2322 = vshrl.u32 %v2321, 7
    %v2323 = vsub.s32 1, %v2322
    %v2324 = vrot.slane %v2315, %v2323
    %2327 = vmatprep.subr.bf16.mxu0 %v1598
    %2328 = vmatpush1.bf16.msra.mxu0 %v1597
    %2329 = vmatprep.subr.bf16.mxu0 %v1596
    %2330 = vmatpush1.bf16.msra.mxu0 %v1595
    %2331 = vmatprep.subr.bf16.mxu0 %v1594
    %2332 = vmatpush1.bf16.msra.mxu0 %v1593
    %2333 = vmatprep.subr.bf16.mxu0 %v1592
    %2334 = vmatpush1.bf16.msra.mxu0 %v1591
    %2335 = vmatprep.subr.bf16.mxu0 %v1590
    %2336 = vmatpush1.bf16.msra.mxu0 %v1589
    %2337 = vmatprep.subr.bf16.mxu0 %v1588
    %2338 = vmatpush1.bf16.msra.mxu0 %v1587
    %2339 = vmatprep.subr.bf16.mxu0 %v1586
    %2340 = vmatpush1.bf16.msra.mxu0 %v1585
    %2341 = vmatprep.subr.bf16.mxu0 %v1584
    %2342 = vmatpush1.bf16.msra.mxu0 %v1583
    %2343 = vmatprep.subr.bf16.mxu0 %v1614
    %2344 = vmatpush2.bf16.msra.mxu0 %v1613
    %2345 = vmatprep.subr.bf16.mxu0 %v1612
    %2346 = vmatpush2.bf16.msra.mxu0 %v1611
    %2347 = vmatprep.subr.bf16.mxu0 %v1610
    %2348 = vmatpush2.bf16.msra.mxu0 %v1609
    %2349 = vmatprep.subr.bf16.mxu0 %v1608
    %2350 = vmatpush2.bf16.msra.mxu0 %v1607
    %2351 = vmatprep.subr.bf16.mxu0 %v1606
    %2352 = vmatpush2.bf16.msra.mxu0 %v1605
    %2353 = vmatprep.subr.bf16.mxu0 %v1604
    %2354 = vmatpush2.bf16.msra.mxu0 %v1603
    %2355 = vmatprep.subr.bf16.mxu0 %v1602
    %2356 = vmatpush2.bf16.msra.mxu0 %v1601
    %2357 = vmatprep.subr.bf16.mxu0 %v1600
    %2358 = vmatpush2.bf16.msra.mxu0 %v1599
    %2359 = vmatprep.mubr.bf16.mxu0 %v2314
    %2360 = vmatmul.mubr.bf16.gmra.mxu0 %v2313
    %v2361 = vpop.f32.mrf.mxu0
    %v2362 = vadd.f32 %v2320, %v2361
    %v2363 = vpop.f32.mrf.mxu0
    %v2364 = vadd.f32 %v2324, %v2363
    %v2365 = vpop.f32.mrf.mxu0
    %v2366 = vpop.f32.mrf.mxu0
    %2367 = vdwg.mxu0
    %v2368 = vtanh.pop %v2362
    %v2369 = vtanh.pop %v2364
    %v2370 = vpack.c.bf16 %v2368, %v2368
    %v2371 = vpack.c.bf16 %v2369, %v2369
    %2372 = vmatprep.subr.bf16.mxu0 %v1835
    %2373 = vmatpush1.bf16.msra.mxu0 %v1834
    %2374 = vmatprep.subr.bf16.mxu0 %v1833
    %2375 = vmatpush1.bf16.msra.mxu0 %v1832
    %2376 = vmatprep.subr.bf16.mxu0 %v1831
    %2377 = vmatpush1.bf16.msra.mxu0 %v1830
    %2378 = vmatprep.subr.bf16.mxu0 %v1829
    %2379 = vmatpush1.bf16.msra.mxu0 %v1828
    %2380 = vmatprep.subr.bf16.mxu0 %v1827
    %2381 = vmatpush1.bf16.msra.mxu0 %v1826
    %2382 = vmatprep.subr.bf16.mxu0 %v1825
    %2383 = vmatpush1.bf16.msra.mxu0 %v1824
    %2384 = vmatprep.subr.bf16.mxu0 %v1823
    %2385 = vmatpush1.bf16.msra.mxu0 %v1822
    %2386 = vmatprep.subr.bf16.mxu0 %v1821
    %2387 = vmatpush1.bf16.msra.mxu0 %v1820
    %2388 = vmatprep.subr.bf16.mxu0 %v1851
    %2389 = vmatpush2.bf16.msra.mxu0 %v1850
    %2390 = vmatprep.subr.bf16.mxu0 %v1849
    %2391 = vmatpush2.bf16.msra.mxu0 %v1848
    %2392 = vmatprep.subr.bf16.mxu0 %v1847
    %2393 = vmatpush2.bf16.msra.mxu0 %v1846
    %2394 = vmatprep.subr.bf16.mxu0 %v1845
    %2395 = vmatpush2.bf16.msra.mxu0 %v1844
    %2396 = vmatprep.subr.bf16.mxu0 %v1843
    %2397 = vmatpush2.bf16.msra.mxu0 %v1842
    %2398 = vmatprep.subr.bf16.mxu0 %v1841
    %2399 = vmatpush2.bf16.msra.mxu0 %v1840
    %2400 = vmatprep.subr.bf16.mxu0 %v1839
    %2401 = vmatpush2.bf16.msra.mxu0 %v1838
    %2402 = vmatprep.subr.bf16.mxu0 %v1837
    %2403 = vmatpush2.bf16.msra.mxu0 %v1836
    %2404 = vmatprep.mubr.bf16.mxu0 %v2371
    %2405 = vmatmul.mubr.bf16.gmra.mxu0 %v2370
    %v2406 = vpop.f32.mrf.mxu0
    %v2407 = vadd.f32 0.0, %v2406
    %v2408 = vpop.f32.mrf.mxu0
    %v2409 = vadd.f32 0.0, %v2408
    %v2410 = vpop.f32.mrf.mxu0
    %v2411 = vpop.f32.mrf.mxu0
    %2412 = vdwg.mxu0
    %v2413 = vmul.f32 %v2306, 0.9045105
    %v2414 = vmul.f32 %v2307, 0.9045105
    %v2415 = vmul.f32 %v2407, 0.15450689
    %v2416 = vmul.f32 %v2409, 0.15450689
    %v2417 = vadd.f32 %v2413, %v2415
    %v2418 = vadd.f32 %v2414, %v2416
    %v2419 = vmax.f32 %v2417, -1.0
    %v2420 = vmax.f32 %v2418, -1.0
    %v2421 = vmin.f32 %v2419, 1.0
    %v2422 = vmin.f32 %v2420, 1.0
    %v2423 = vsub.f32 %v2306, %v2421
    %v2424 = vsub.f32 %v2307, %v2422
    %v2425 = vmul.f32 %v2423, 6.155438
    %v2426 = vmul.f32 %v2424, 6.155438
    %v2427 = vmul.f32 %v2425, -0.08122591
    %v2428 = vmul.f32 %v2426, -0.08122591
    %v2429 = vadd.f32 %v2306, %v2427
    %v2430 = vadd.f32 %v2307, %v2428
    %v2431 = vmul.f32 %v2429, 1.9741167
    %v2432 = vmul.f32 %v2430, 1.9741167
    %v2433 = vpack.c.bf16 %v2431, %v2431
    %v2434 = vpack.c.bf16 %v2432, %v2432
    %v2435 = vld [vmem:[%s1081] ss:$4 sm:$0x3]
    %v2437 = vlaneseq
    %v2438 = vshrl.u32 %v2437, 7
    %v2439 = vsub.s32 0, %v2438
    %v2440 = vrot.slane %v2435, %v2439
    %v2441 = vlaneseq
    %v2442 = vshrl.u32 %v2441, 7
    %v2443 = vsub.s32 1, %v2442
    %v2444 = vrot.slane %v2435, %v2443
    %2447 = vmatprep.subr.bf16.mxu0 %v1598
    %2448 = vmatpush1.bf16.msra.mxu0 %v1597
    %2449 = vmatprep.subr.bf16.mxu0 %v1596
    %2450 = vmatpush1.bf16.msra.mxu0 %v1595
    %2451 = vmatprep.subr.bf16.mxu0 %v1594
    %2452 = vmatpush1.bf16.msra.mxu0 %v1593
    %2453 = vmatprep.subr.bf16.mxu0 %v1592
    %2454 = vmatpush1.bf16.msra.mxu0 %v1591
    %2455 = vmatprep.subr.bf16.mxu0 %v1590
    %2456 = vmatpush1.bf16.msra.mxu0 %v1589
    %2457 = vmatprep.subr.bf16.mxu0 %v1588
    %2458 = vmatpush1.bf16.msra.mxu0 %v1587
    %2459 = vmatprep.subr.bf16.mxu0 %v1586
    %2460 = vmatpush1.bf16.msra.mxu0 %v1585
    %2461 = vmatprep.subr.bf16.mxu0 %v1584
    %2462 = vmatpush1.bf16.msra.mxu0 %v1583
    %2463 = vmatprep.subr.bf16.mxu0 %v1614
    %2464 = vmatpush2.bf16.msra.mxu0 %v1613
    %2465 = vmatprep.subr.bf16.mxu0 %v1612
    %2466 = vmatpush2.bf16.msra.mxu0 %v1611
    %2467 = vmatprep.subr.bf16.mxu0 %v1610
    %2468 = vmatpush2.bf16.msra.mxu0 %v1609
    %2469 = vmatprep.subr.bf16.mxu0 %v1608
    %2470 = vmatpush2.bf16.msra.mxu0 %v1607
    %2471 = vmatprep.subr.bf16.mxu0 %v1606
    %2472 = vmatpush2.bf16.msra.mxu0 %v1605
    %2473 = vmatprep.subr.bf16.mxu0 %v1604
    %2474 = vmatpush2.bf16.msra.mxu0 %v1603
    %2475 = vmatprep.subr.bf16.mxu0 %v1602
    %2476 = vmatpush2.bf16.msra.mxu0 %v1601
    %2477 = vmatprep.subr.bf16.mxu0 %v1600
    %2478 = vmatpush2.bf16.msra.mxu0 %v1599
    %2479 = vmatprep.mubr.bf16.mxu0 %v2434
    %2480 = vmatmul.mubr.bf16.gmra.mxu0 %v2433
    %v2481 = vpop.f32.mrf.mxu0
    %v2482 = vadd.f32 %v2440, %v2481
    %v2483 = vpop.f32.mrf.mxu0
    %v2484 = vadd.f32 %v2444, %v2483
    %v2485 = vpop.f32.mrf.mxu0
    %v2486 = vpop.f32.mrf.mxu0
    %2487 = vdwg.mxu0
    %v2488 = vtanh.pop %v2482
    %v2489 = vtanh.pop %v2484
    %v2490 = vpack.c.bf16 %v2488, %v2488
    %v2491 = vpack.c.bf16 %v2489, %v2489
    %2492 = vmatprep.subr.bf16.mxu0 %v1835
    %2493 = vmatpush1.bf16.msra.mxu0 %v1834
    %2494 = vmatprep.subr.bf16.mxu0 %v1833
    %2495 = vmatpush1.bf16.msra.mxu0 %v1832
    %2496 = vmatprep.subr.bf16.mxu0 %v1831
    %2497 = vmatpush1.bf16.msra.mxu0 %v1830
    %2498 = vmatprep.subr.bf16.mxu0 %v1829
    %2499 = vmatpush1.bf16.msra.mxu0 %v1828
    %2500 = vmatprep.subr.bf16.mxu0 %v1827
    %2501 = vmatpush1.bf16.msra.mxu0 %v1826
    %2502 = vmatprep.subr.bf16.mxu0 %v1825
    %2503 = vmatpush1.bf16.msra.mxu0 %v1824
    %2504 = vmatprep.subr.bf16.mxu0 %v1823
    %2505 = vmatpush1.bf16.msra.mxu0 %v1822
    %2506 = vmatprep.subr.bf16.mxu0 %v1821
    %2507 = vmatpush1.bf16.msra.mxu0 %v1820
    %2508 = vmatprep.subr.bf16.mxu0 %v1851
    %2509 = vmatpush2.bf16.msra.mxu0 %v1850
    %2510 = vmatprep.subr.bf16.mxu0 %v1849
    %2511 = vmatpush2.bf16.msra.mxu0 %v1848
    %2512 = vmatprep.subr.bf16.mxu0 %v1847
    %2513 = vmatpush2.bf16.msra.mxu0 %v1846
    %2514 = vmatprep.subr.bf16.mxu0 %v1845
    %2515 = vmatpush2.bf16.msra.mxu0 %v1844
    %2516 = vmatprep.subr.bf16.mxu0 %v1843
    %2517 = vmatpush2.bf16.msra.mxu0 %v1842
    %2518 = vmatprep.subr.bf16.mxu0 %v1841
    %2519 = vmatpush2.bf16.msra.mxu0 %v1840
    %2520 = vmatprep.subr.bf16.mxu0 %v1839
    %2521 = vmatpush2.bf16.msra.mxu0 %v1838
    %2522 = vmatprep.subr.bf16.mxu0 %v1837
    %2523 = vmatpush2.bf16.msra.mxu0 %v1836
    %2524 = vmatprep.mubr.bf16.mxu0 %v2491
    %2525 = vmatmul.mubr.bf16.gmra.mxu0 %v2490
    %v2526 = vpop.f32.mrf.mxu0
    %v2527 = vadd.f32 0.0, %v2526
    %v2528 = vpop.f32.mrf.mxu0
    %v2529 = vadd.f32 0.0, %v2528
    %v2530 = vpop.f32.mrf.mxu0
    %v2531 = vpop.f32.mrf.mxu0
    %2532 = vdwg.mxu0
    %v2533 = vmul.f32 %v2429, 0.9742842
    %v2534 = vmul.f32 %v2430, 0.9742842
    %v2535 = vmul.f32 %v2527, 0.08018079
    %v2536 = vmul.f32 %v2529, 0.08018079
    %v2537 = vadd.f32 %v2533, %v2535
    %v2538 = vadd.f32 %v2534, %v2536
    %v2539 = vmax.f32 %v2537, -1.0
    %v2540 = vmax.f32 %v2538, -1.0
    %v2541 = vmin.f32 %v2539, 1.0
    %v2542 = vmin.f32 %v2540, 1.0
    %v2543 = vsub.f32 %v2429, %v2541
    %v2544 = vsub.f32 %v2430, %v2542
    %v2545 = vmul.f32 %v2543, 12.31041
    %v2546 = vmul.f32 %v2544, 12.31041
    %v2547 = vmul.f32 %v2545, -0.16245182
    %v2548 = vmul.f32 %v2546, -0.16245182
    %v2549 = vadd.f32 %v2306, %v2547
    %v2550 = vadd.f32 %v2307, %v2548
    %v2551 = vmul.f32 %v2309, 0.0009999811
    %v2552 = vmul.f32 %v2310, 0.0009999811
    %v2553 = vadd.f32 %v2549, %v2551
    %v2554 = vadd.f32 %v2550, %v2552
    %s2555 = scalar_lea.vmem [#allocation2], 256
    %v2556 = vld [vmem:[%s2555] sm:$0xff]
    %v2557 = vld [vmem:[%s2555 + $0x8] sm:$0xff]
    %v2558 = vmul.f32 %v2556, 0.1624549
    %v2559 = vmul.f32 %v2557, 0.1624549
    %v2560 = vadd.f32 %v2553, %v2558
    %v2561 = vadd.f32 %v2554, %v2559
    %v2562 = vsel %vm64, %v2304, %v2560
    %v2563 = vsel %vm65, %v2305, %v2561
    %s2564 = scalar_lea.vmem [#allocation2], 272
    %v2565 = vld [vmem:[%s2564 + $0x8] sm:$0xff]
    %v2566 = vmul.f32 %v2562, 1.9021151
    %v2567 = vmul.f32 %v2563, 1.9021151
    %v2568 = vpack.c.bf16 %v2566, %v2566
    %v2569 = vpack.c.bf16 %v2567, %v2567
    %2570 = vmatprep.subr.bf16.mxu0 %v1598
    %2571 = vmatpush1.bf16.msra.mxu0 %v1597
    %2572 = vmatprep.subr.bf16.mxu0 %v1596
    %2573 = vmatpush1.bf16.msra.mxu0 %v1595
    %2574 = vmatprep.subr.bf16.mxu0 %v1594
    %2575 = vmatpush1.bf16.msra.mxu0 %v1593
    %2576 = vmatprep.subr.bf16.mxu0 %v1592
    %2577 = vmatpush1.bf16.msra.mxu0 %v1591
    %2578 = vmatprep.subr.bf16.mxu0 %v1590
    %2579 = vmatpush1.bf16.msra.mxu0 %v1589
    %2580 = vmatprep.subr.bf16.mxu0 %v1588
    %2581 = vmatpush1.bf16.msra.mxu0 %v1587
    %2582 = vmatprep.subr.bf16.mxu0 %v1586
    %2583 = vmatpush1.bf16.msra.mxu0 %v1585
    %2584 = vmatprep.subr.bf16.mxu0 %v1584
    %2585 = vmatpush1.bf16.msra.mxu0 %v1583
    %2586 = vmatprep.subr.bf16.mxu0 %v1614
    %2587 = vmatpush2.bf16.msra.mxu0 %v1613
    %2588 = vmatprep.subr.bf16.mxu0 %v1612
    %2589 = vmatpush2.bf16.msra.mxu0 %v1611
    %2590 = vmatprep.subr.bf16.mxu0 %v1610
    %2591 = vmatpush2.bf16.msra.mxu0 %v1609
    %2592 = vmatprep.subr.bf16.mxu0 %v1608
    %2593 = vmatpush2.bf16.msra.mxu0 %v1607
    %2594 = vmatprep.subr.bf16.mxu0 %v1606
    %2595 = vmatpush2.bf16.msra.mxu0 %v1605
    %2596 = vmatprep.subr.bf16.mxu0 %v1604
    %2597 = vmatpush2.bf16.msra.mxu0 %v1603
    %2598 = vmatprep.subr.bf16.mxu0 %v1602
    %2599 = vmatpush2.bf16.msra.mxu0 %v1601
    %2600 = vmatprep.subr.bf16.mxu0 %v1600
    %2601 = vmatpush2.bf16.msra.mxu0 %v1599
    %2602 = vmatprep.mubr.bf16.mxu0 %v2569
    %2603 = vmatmul.mubr.bf16.gmra.mxu0 %v2568
    %v2604 = vpop.f32.mrf.mxu0
    %v2605 = vadd.f32 %v2320, %v2604
    %v2606 = vpop.f32.mrf.mxu0
    %v2607 = vadd.f32 %v2324, %v2606
    %v2608 = vpop.f32.mrf.mxu0
    %v2609 = vpop.f32.mrf.mxu0
    %2610 = vdwg.mxu0
    %v2611 = vtanh.pop %v2605
    %v2612 = vtanh.pop %v2607
    %v2613 = vpack.c.bf16 %v2611, %v2611
    %v2614 = vpack.c.bf16 %v2612, %v2612
    %2615 = vmatprep.subr.bf16.mxu0 %v1835
    %2616 = vmatpush1.bf16.msra.mxu0 %v1834
    %2617 = vmatprep.subr.bf16.mxu0 %v1833
    %2618 = vmatpush1.bf16.msra.mxu0 %v1832
    %2619 = vmatprep.subr.bf16.mxu0 %v1831
    %2620 = vmatpush1.bf16.msra.mxu0 %v1830
    %2621 = vmatprep.subr.bf16.mxu0 %v1829
    %2622 = vmatpush1.bf16.msra.mxu0 %v1828
    %2623 = vmatprep.subr.bf16.mxu0 %v1827
    %2624 = vmatpush1.bf16.msra.mxu0 %v1826
    %2625 = vmatprep.subr.bf16.mxu0 %v1825
    %2626 = vmatpush1.bf16.msra.mxu0 %v1824
    %2627 = vmatprep.subr.bf16.mxu0 %v1823
    %2628 = vmatpush1.bf16.msra.mxu0 %v1822
    %2629 = vmatprep.subr.bf16.mxu0 %v1821
    %2630 = vmatpush1.bf16.msra.mxu0 %v1820
    %2631 = vmatprep.subr.bf16.mxu0 %v1851
    %2632 = vmatpush2.bf16.msra.mxu0 %v1850
    %2633 = vmatprep.subr.bf16.mxu0 %v1849
    %2634 = vmatpush2.bf16.msra.mxu0 %v1848
    %2635 = vmatprep.subr.bf16.mxu0 %v1847
    %2636 = vmatpush2.bf16.msra.mxu0 %v1846
    %2637 = vmatprep.subr.bf16.mxu0 %v1845
    %2638 = vmatpush2.bf16.msra.mxu0 %v1844
    %2639 = vmatprep.subr.bf16.mxu0 %v1843
    %2640 = vmatpush2.bf16.msra.mxu0 %v1842
    %2641 = vmatprep.subr.bf16.mxu0 %v1841
    %2642 = vmatpush2.bf16.msra.mxu0 %v1840
    %2643 = vmatprep.subr.bf16.mxu0 %v1839
    %2644 = vmatpush2.bf16.msra.mxu0 %v1838
    %2645 = vmatprep.subr.bf16.mxu0 %v1837
    %2646 = vmatpush2.bf16.msra.mxu0 %v1836
    %2647 = vmatprep.mubr.bf16.mxu0 %v2614
    %2648 = vmatmul.mubr.bf16.gmra.mxu0 %v2613
    %v2649 = vpop.f32.mrf.mxu0
    %v2650 = vadd.f32 0.0, %v2649
    %v2651 = vpop.f32.mrf.mxu0
    %v2652 = vadd.f32 0.0, %v2651
    %v2653 = vpop.f32.mrf.mxu0
    %v2654 = vpop.f32.mrf.mxu0
    %2655 = vdwg.mxu0
    %v2656 = vmul.f32 %v2562, 0.9045105
    %v2657 = vmul.f32 %v2563, 0.9045105
    %v2658 = vmul.f32 %v2650, 0.15450689
    %v2659 = vmul.f32 %v2652, 0.15450689
    %v2660 = vadd.f32 %v2656, %v2658
    %v2661 = vadd.f32 %v2657, %v2659
    %v2662 = vmax.f32 %v2660, -1.0
    %v2663 = vmax.f32 %v2661, -1.0
    %v2664 = vmin.f32 %v2662, 1.0
    %v2665 = vmin.f32 %v2663, 1.0
    %v2666 = vsub.f32 %v2562, %v2664
    %v2667 = vsub.f32 %v2563, %v2665
    %v2668 = vmul.f32 %v2666, 6.155438
    %v2669 = vmul.f32 %v2667, 6.155438
    %v2670 = vmul.f32 %v2668, -0.08122591
    %v2671 = vmul.f32 %v2669, -0.08122591
    %v2672 = vadd.f32 %v2562, %v2670
    %v2673 = vadd.f32 %v2563, %v2671
    %v2674 = vmul.f32 %v2672, 1.9741167
    %v2675 = vmul.f32 %v2673, 1.9741167
    %v2676 = vpack.c.bf16 %v2674, %v2674
    %v2677 = vpack.c.bf16 %v2675, %v2675
    %2678 = vmatprep.subr.bf16.mxu0 %v1598
    %2679 = vmatpush1.bf16.msra.mxu0 %v1597
    %2680 = vmatprep.subr.bf16.mxu0 %v1596
    %2681 = vmatpush1.bf16.msra.mxu0 %v1595
    %2682 = vmatprep.subr.bf16.mxu0 %v1594
    %2683 = vmatpush1.bf16.msra.mxu0 %v1593
    %2684 = vmatprep.subr.bf16.mxu0 %v1592
    %2685 = vmatpush1.bf16.msra.mxu0 %v1591
    %2686 = vmatprep.subr.bf16.mxu0 %v1590
    %2687 = vmatpush1.bf16.msra.mxu0 %v1589
    %2688 = vmatprep.subr.bf16.mxu0 %v1588
    %2689 = vmatpush1.bf16.msra.mxu0 %v1587
    %2690 = vmatprep.subr.bf16.mxu0 %v1586
    %2691 = vmatpush1.bf16.msra.mxu0 %v1585
    %2692 = vmatprep.subr.bf16.mxu0 %v1584
    %2693 = vmatpush1.bf16.msra.mxu0 %v1583
    %2694 = vmatprep.subr.bf16.mxu0 %v1614
    %2695 = vmatpush2.bf16.msra.mxu0 %v1613
    %2696 = vmatprep.subr.bf16.mxu0 %v1612
    %2697 = vmatpush2.bf16.msra.mxu0 %v1611
    %2698 = vmatprep.subr.bf16.mxu0 %v1610
    %2699 = vmatpush2.bf16.msra.mxu0 %v1609
    %2700 = vmatprep.subr.bf16.mxu0 %v1608
    %2701 = vmatpush2.bf16.msra.mxu0 %v1607
    %2702 = vmatprep.subr.bf16.mxu0 %v1606
    %2703 = vmatpush2.bf16.msra.mxu0 %v1605
    %2704 = vmatprep.subr.bf16.mxu0 %v1604
    %2705 = vmatpush2.bf16.msra.mxu0 %v1603
    %2706 = vmatprep.subr.bf16.mxu0 %v1602
    %2707 = vmatpush2.bf16.msra.mxu0 %v1601
    %2708 = vmatprep.subr.bf16.mxu0 %v1600
    %2709 = vmatpush2.bf16.msra.mxu0 %v1599
    %2710 = vmatprep.mubr.bf16.mxu0 %v2677
    %2711 = vmatmul.mubr.bf16.gmra.mxu0 %v2676
    %v2712 = vpop.f32.mrf.mxu0
    %v2713 = vadd.f32 %v2440, %v2712
    %v2714 = vpop.f32.mrf.mxu0
    %v2715 = vadd.f32 %v2444, %v2714
    %v2716 = vpop.f32.mrf.mxu0
    %v2717 = vpop.f32.mrf.mxu0
    %2718 = vdwg.mxu0
    %v2719 = vtanh.pop %v2713
    %v2720 = vtanh.pop %v2715
    %v2721 = vpack.c.bf16 %v2719, %v2719
    %v2722 = vpack.c.bf16 %v2720, %v2720
    %2723 = vmatprep.subr.bf16.mxu0 %v1835
    %2724 = vmatpush1.bf16.msra.mxu0 %v1834
    %2725 = vmatprep.subr.bf16.mxu0 %v1833
    %2726 = vmatpush1.bf16.msra.mxu0 %v1832
    %2727 = vmatprep.subr.bf16.mxu0 %v1831
    %2728 = vmatpush1.bf16.msra.mxu0 %v1830
    %2729 = vmatprep.subr.bf16.mxu0 %v1829
    %2730 = vmatpush1.bf16.msra.mxu0 %v1828
    %2731 = vmatprep.subr.bf16.mxu0 %v1827
    %2732 = vmatpush1.bf16.msra.mxu0 %v1826
    %2733 = vmatprep.subr.bf16.mxu0 %v1825
    %2734 = vmatpush1.bf16.msra.mxu0 %v1824
    %2735 = vmatprep.subr.bf16.mxu0 %v1823
    %2736 = vmatpush1.bf16.msra.mxu0 %v1822
    %2737 = vmatprep.subr.bf16.mxu0 %v1821
    %2738 = vmatpush1.bf16.msra.mxu0 %v1820
    %2739 = vmatprep.subr.bf16.mxu0 %v1851
    %2740 = vmatpush2.bf16.msra.mxu0 %v1850
    %2741 = vmatprep.subr.bf16.mxu0 %v1849
    %2742 = vmatpush2.bf16.msra.mxu0 %v1848
    %2743 = vmatprep.subr.bf16.mxu0 %v1847
    %2744 = vmatpush2.bf16.msra.mxu0 %v1846
    %2745 = vmatprep.subr.bf16.mxu0 %v1845
    %2746 = vmatpush2.bf16.msra.mxu0 %v1844
    %2747 = vmatprep.subr.bf16.mxu0 %v1843
    %2748 = vmatpush2.bf16.msra.mxu0 %v1842
    %2749 = vmatprep.subr.bf16.mxu0 %v1841
    %2750 = vmatpush2.bf16.msra.mxu0 %v1840
    %2751 = vmatprep.subr.bf16.mxu0 %v1839
    %2752 = vmatpush2.bf16.msra.mxu0 %v1838
    %2753 = vmatprep.subr.bf16.mxu0 %v1837
    %2754 = vmatpush2.bf16.msra.mxu0 %v1836
    %2755 = vmatprep.mubr.bf16.mxu0 %v2722
    %2756 = vmatmul.mubr.bf16.gmra.mxu0 %v2721
    %v2757 = vpop.f32.mrf.mxu0
    %v2758 = vpop.f32.mrf.mxu0
    %v2759 = vadd.f32 0.0, %v2758
    %v2760 = vpop.f32.mrf.mxu0
    %v2761 = vpop.f32.mrf.mxu0
    %2762 = vdwg.mxu0
    %v2763 = vmul.f32 %v2673, 0.9742842
    %v2764 = vmul.f32 %v2759, 0.08018079
    %v2765 = vadd.f32 %v2763, %v2764
    %v2766 = vmax.f32 %v2765, -1.0
    %v2767 = vmin.f32 %v2766, 1.0
    %v2768 = vsub.f32 %v2673, %v2767
    %v2769 = vmul.f32 %v2768, 12.31041
    %v2770 = vmul.f32 %v2769, -0.16245182
    %v2771 = vadd.f32 %v2563, %v2770
    %v2772 = vmul.f32 %v2565, 0.0009999811
    %v2773 = vadd.f32 %v2771, %v2772
    %2774 = vst [vmem:[%s5 + $0x8] sm:$0xff] %v2773
    %s2775 = scalar_lea.vmem [#allocation2], 288
    %v2776 = vld [vmem:[%s2775] sm:$0xff]
    %v2777 = vld [vmem:[%s2775 + $0x8] sm:$0xff]
    %v2778 = vmul.f32 %v2776, 3.0
    %v2779 = vmul.f32 %v2777, 3.0
    %s2780 = scalar_lea.vmem [#allocation2], 304
    %v2781 = vld [vmem:[%s2780] sm:$0xff]
    %v2782 = vld [vmem:[%s2780 + $0x8] sm:$0xff]
    %v2783 = vmul.f32 %v2781, 3.0
    %v2784 = vmul.f32 %v2782, 3.0
    %v2785 = vadd.f32 %v2773, %v2783
    %v2786 = vadd.f32 %v2784, 0.0
    %v2787 = vsel %vm64, %v2785, %v2778
    %v2788 = vsel %vm65, %v2786, %v2779
    %s2789 = scalar_lea.vmem [#allocation2], 320
    %v2790 = vld [vmem:[%s2789] sm:$0xff]
    %v2791 = vld [vmem:[%s2789 + $0x8] sm:$0xff]
    %v2792 = vmul.f32 %v2787, 0.32879797
    %v2793 = vmul.f32 %v2788, 0.32879797
    %v2794 = vpack.c.bf16 %v2792, %v2792
    %v2795 = vpack.c.bf16 %v2793, %v2793
    %v2796 = vld [vmem:[#allocation4] sm:$0xff]
    %v2797 = vld [vmem:[#allocation4 + $0x8] sm:$0xff]
    %v2798 = vld [vmem:[#allocation4 + $0x10] sm:$0xff]
    %v2799 = vld [vmem:[#allocation4 + $0x18] sm:$0xff]
    %v2800 = vld [vmem:[#allocation4 + $0x20] sm:$0xff]
    %v2801 = vld [vmem:[#allocation4 + $0x28] sm:$0xff]
    %v2802 = vld [vmem:[#allocation4 + $0x30] sm:$0xff]
    %v2803 = vld [vmem:[#allocation4 + $0x38] sm:$0xff]
    %v2804 = vld [vmem:[#allocation4 + $0x40] sm:$0xff]
    %v2805 = vld [vmem:[#allocation4 + $0x48] sm:$0xff]
    %v2806 = vld [vmem:[#allocation4 + $0x50] sm:$0xff]
    %v2807 = vld [vmem:[#allocation4 + $0x58] sm:$0xff]
    %v2808 = vld [vmem:[#allocation4 + $0x60] sm:$0xff]
    %v2809 = vld [vmem:[#allocation4 + $0x68] sm:$0xff]
    %v2810 = vld [vmem:[#allocation4 + $0x70] sm:$0xff]
    %v2811 = vld [vmem:[#allocation4 + $0x78] sm:$0xff]
    %v2812 = vld [vmem:[#allocation4 + $0x80] sm:$0xff]
    %v2813 = vld [vmem:[#allocation4 + $0x88] sm:$0xff]
    %v2814 = vld [vmem:[#allocation4 + $0x90] sm:$0xff]
    %v2815 = vld [vmem:[#allocation4 + $0x98] sm:$0xff]
    %v2816 = vld [vmem:[#allocation4 + $0xa0] sm:$0xff]
    %v2817 = vld [vmem:[#allocation4 + $0xa8] sm:$0xff]
    %v2818 = vld [vmem:[#allocation4 + $0xb0] sm:$0xff]
    %v2819 = vld [vmem:[#allocation4 + $0xb8] sm:$0xff]
    %v2820 = vld [vmem:[#allocation4 + $0xc0] sm:$0xff]
    %v2821 = vld [vmem:[#allocation4 + $0xc8] sm:$0xff]
    %v2822 = vld [vmem:[#allocation4 + $0xd0] sm:$0xff]
    %v2823 = vld [vmem:[#allocation4 + $0xd8] sm:$0xff]
    %v2824 = vld [vmem:[#allocation4 + $0xe0] sm:$0xff]
    %v2825 = vld [vmem:[#allocation4 + $0xe8] sm:$0xff]
    %v2826 = vld [vmem:[#allocation4 + $0xf0] sm:$0xff]
    %v2827 = vld [vmem:[#allocation4 + $0xf8] sm:$0xff]
    %v2828 = vld [vmem:[%s4] ss:$4 sm:$0x3]
    %v2830 = vlaneseq
    %v2831 = vshrl.u32 %v2830, 7
    %v2832 = vsub.s32 0, %v2831
    %v2833 = vrot.slane %v2828, %v2832
    %v2834 = vlaneseq
    %v2835 = vshrl.u32 %v2834, 7
    %v2836 = vsub.s32 1, %v2835
    %v2837 = vrot.slane %v2828, %v2836
    %v2872 = vunpack.c.l.b16 %v2796
    %v2873 = vunpack.c.h.b16 %v2796
    %v2874 = vunpack.c.l.b16 %v2797
    %v2875 = vunpack.c.h.b16 %v2797
    %v2876 = vunpack.c.l.b16 %v2798
    %v2877 = vunpack.c.h.b16 %v2798
    %v2878 = vunpack.c.l.b16 %v2799
    %v2879 = vunpack.c.h.b16 %v2799
    %v2880 = vunpack.c.l.b16 %v2800
    %v2881 = vunpack.c.h.b16 %v2800
    %v2882 = vunpack.c.l.b16 %v2801
    %v2883 = vunpack.c.h.b16 %v2801
    %v2884 = vunpack.c.l.b16 %v2802
    %v2885 = vunpack.c.h.b16 %v2802
    %v2886 = vunpack.c.l.b16 %v2803
    %v2887 = vunpack.c.h.b16 %v2803
    %v2888 = vunpack.c.l.b16 %v2804
    %v2889 = vunpack.c.h.b16 %v2804
    %v2890 = vunpack.c.l.b16 %v2805
    %v2891 = vunpack.c.h.b16 %v2805
    %v2892 = vunpack.c.l.b16 %v2806
    %v2893 = vunpack.c.h.b16 %v2806
    %v2894 = vunpack.c.l.b16 %v2807
    %v2895 = vunpack.c.h.b16 %v2807
    %v2896 = vunpack.c.l.b16 %v2808
    %v2897 = vunpack.c.h.b16 %v2808
    %v2898 = vunpack.c.l.b16 %v2809
    %v2899 = vunpack.c.h.b16 %v2809
    %v2900 = vunpack.c.l.b16 %v2810
    %v2901 = vunpack.c.h.b16 %v2810
    %v2902 = vunpack.c.l.b16 %v2811
    %v2903 = vunpack.c.h.b16 %v2811
    %v2904 = vunpack.c.l.b16 %v2812
    %v2905 = vunpack.c.h.b16 %v2812
    %v2906 = vunpack.c.l.b16 %v2813
    %v2907 = vunpack.c.h.b16 %v2813
    %v2908 = vunpack.c.l.b16 %v2814
    %v2909 = vunpack.c.h.b16 %v2814
    %v2910 = vunpack.c.l.b16 %v2815
    %v2911 = vunpack.c.h.b16 %v2815
    %v2912 = vunpack.c.l.b16 %v2816
    %v2913 = vunpack.c.h.b16 %v2816
    %v2914 = vunpack.c.l.b16 %v2817
    %v2915 = vunpack.c.h.b16 %v2817
    %v2916 = vunpack.c.l.b16 %v2818
    %v2917 = vunpack.c.h.b16 %v2818
    %v2918 = vunpack.c.l.b16 %v2819
    %v2919 = vunpack.c.h.b16 %v2819
    %v2920 = vunpack.c.l.b16 %v2820
    %v2921 = vunpack.c.h.b16 %v2820
    %v2922 = vunpack.c.l.b16 %v2821
    %v2923 = vunpack.c.h.b16 %v2821
    %v2924 = vunpack.c.l.b16 %v2822
    %v2925 = vunpack.c.h.b16 %v2822
    %v2926 = vunpack.c.l.b16 %v2823
    %v2927 = vunpack.c.h.b16 %v2823
    %v2928 = vunpack.c.l.b16 %v2824
    %v2929 = vunpack.c.h.b16 %v2824
    %v2930 = vunpack.c.l.b16 %v2825
    %v2931 = vunpack.c.h.b16 %v2825
    %v2932 = vunpack.c.l.b16 %v2826
    %v2933 = vunpack.c.h.b16 %v2826
    %v2934 = vunpack.c.l.b16 %v2827
    %v2935 = vunpack.c.h.b16 %v2827
    %v2936 = vpack.c.b16 %v2874, %v2872
    %v2937 = vpack.c.b16 %v2875, %v2873
    %v2938 = vpack.c.b16 %v2878, %v2876
    %v2939 = vpack.c.b16 %v2879, %v2877
    %v2940 = vpack.c.b16 %v2882, %v2880
    %v2941 = vpack.c.b16 %v2883, %v2881
    %v2942 = vpack.c.b16 %v2886, %v2884
    %v2943 = vpack.c.b16 %v2887, %v2885
    %v2944 = vpack.c.b16 %v2890, %v2888
    %v2945 = vpack.c.b16 %v2891, %v2889
    %v2946 = vpack.c.b16 %v2894, %v2892
    %v2947 = vpack.c.b16 %v2895, %v2893
    %v2948 = vpack.c.b16 %v2898, %v2896
    %v2949 = vpack.c.b16 %v2899, %v2897
    %v2950 = vpack.c.b16 %v2902, %v2900
    %v2951 = vpack.c.b16 %v2903, %v2901
    %v2952 = vpack.c.b16 %v2906, %v2904
    %v2953 = vpack.c.b16 %v2907, %v2905
    %v2954 = vpack.c.b16 %v2910, %v2908
    %v2955 = vpack.c.b16 %v2911, %v2909
    %v2956 = vpack.c.b16 %v2914, %v2912
    %v2957 = vpack.c.b16 %v2915, %v2913
    %v2958 = vpack.c.b16 %v2918, %v2916
    %v2959 = vpack.c.b16 %v2919, %v2917
    %v2960 = vpack.c.b16 %v2922, %v2920
    %v2961 = vpack.c.b16 %v2923, %v2921
    %v2962 = vpack.c.b16 %v2926, %v2924
    %v2963 = vpack.c.b16 %v2927, %v2925
    %v2964 = vpack.c.b16 %v2930, %v2928
    %v2965 = vpack.c.b16 %v2931, %v2929
    %v2966 = vpack.c.b16 %v2934, %v2932
    %v2967 = vpack.c.b16 %v2935, %v2933
    %3000 = vmatprep.subr.bf16.mxu0 %v2951
    %3001 = vmatpush1.bf16.msra.mxu0 %v2950
    %3002 = vmatprep.subr.bf16.mxu0 %v2949
    %3003 = vmatpush1.bf16.msra.mxu0 %v2948
    %3004 = vmatprep.subr.bf16.mxu0 %v2947
    %3005 = vmatpush1.bf16.msra.mxu0 %v2946
    %3006 = vmatprep.subr.bf16.mxu0 %v2945
    %3007 = vmatpush1.bf16.msra.mxu0 %v2944
    %3008 = vmatprep.subr.bf16.mxu0 %v2943
    %3009 = vmatpush1.bf16.msra.mxu0 %v2942
    %3010 = vmatprep.subr.bf16.mxu0 %v2941
    %3011 = vmatpush1.bf16.msra.mxu0 %v2940
    %3012 = vmatprep.subr.bf16.mxu0 %v2939
    %3013 = vmatpush1.bf16.msra.mxu0 %v2938
    %3014 = vmatprep.subr.bf16.mxu0 %v2937
    %3015 = vmatpush1.bf16.msra.mxu0 %v2936
    %3016 = vmatprep.subr.bf16.mxu0 %v2967
    %3017 = vmatpush2.bf16.msra.mxu0 %v2966
    %3018 = vmatprep.subr.bf16.mxu0 %v2965
    %3019 = vmatpush2.bf16.msra.mxu0 %v2964
    %3020 = vmatprep.subr.bf16.mxu0 %v2963
    %3021 = vmatpush2.bf16.msra.mxu0 %v2962
    %3022 = vmatprep.subr.bf16.mxu0 %v2961
    %3023 = vmatpush2.bf16.msra.mxu0 %v2960
    %3024 = vmatprep.subr.bf16.mxu0 %v2959
    %3025 = vmatpush2.bf16.msra.mxu0 %v2958
    %3026 = vmatprep.subr.bf16.mxu0 %v2957
    %3027 = vmatpush2.bf16.msra.mxu0 %v2956
    %3028 = vmatprep.subr.bf16.mxu0 %v2955
    %3029 = vmatpush2.bf16.msra.mxu0 %v2954
    %3030 = vmatprep.subr.bf16.mxu0 %v2953
    %3031 = vmatpush2.bf16.msra.mxu0 %v2952
    %3032 = vmatprep.mubr.bf16.mxu0 %v2795
    %3033 = vmatmul.mubr.bf16.gmra.mxu0 %v2794
    %v3034 = vpop.f32.mrf.mxu0
    %v3035 = vadd.f32 %v2833, %v3034
    %v3036 = vpop.f32.mrf.mxu0
    %v3037 = vadd.f32 %v2837, %v3036
    %v3038 = vpop.f32.mrf.mxu0
    %v3039 = vpop.f32.mrf.mxu0
    %3040 = vdwg.mxu0
    %v3041 = vtanh.pop %v3035
    %v3042 = vtanh.pop %v3037
    %v3043 = vpack.c.bf16 %v3041, %v3041
    %v3044 = vpack.c.bf16 %v3042, %v3042
    %v3045 = vld [vmem:[#allocation6] sm:$0xff]
    %v3046 = vld [vmem:[#allocation6 + $0x8] sm:$0xff]
    %v3047 = vld [vmem:[#allocation6 + $0x10] sm:$0xff]
    %v3048 = vld [vmem:[#allocation6 + $0x18] sm:$0xff]
    %v3049 = vld [vmem:[#allocation6 + $0x20] sm:$0xff]
    %v3050 = vld [vmem:[#allocation6 + $0x28] sm:$0xff]
    %v3051 = vld [vmem:[#allocation6 + $0x30] sm:$0xff]
    %v3052 = vld [vmem:[#allocation6 + $0x38] sm:$0xff]
    %v3053 = vld [vmem:[#allocation6 + $0x40] sm:$0xff]
    %v3054 = vld [vmem:[#allocation6 + $0x48] sm:$0xff]
    %v3055 = vld [vmem:[#allocation6 + $0x50] sm:$0xff]
    %v3056 = vld [vmem:[#allocation6 + $0x58] sm:$0xff]
    %v3057 = vld [vmem:[#allocation6 + $0x60] sm:$0xff]
    %v3058 = vld [vmem:[#allocation6 + $0x68] sm:$0xff]
    %v3059 = vld [vmem:[#allocation6 + $0x70] sm:$0xff]
    %v3060 = vld [vmem:[#allocation6 + $0x78] sm:$0xff]
    %v3061 = vld [vmem:[#allocation6 + $0x80] sm:$0xff]
    %v3062 = vld [vmem:[#allocation6 + $0x88] sm:$0xff]
    %v3063 = vld [vmem:[#allocation6 + $0x90] sm:$0xff]
    %v3064 = vld [vmem:[#allocation6 + $0x98] sm:$0xff]
    %v3065 = vld [vmem:[#allocation6 + $0xa0] sm:$0xff]
    %v3066 = vld [vmem:[#allocation6 + $0xa8] sm:$0xff]
    %v3067 = vld [vmem:[#allocation6 + $0xb0] sm:$0xff]
    %v3068 = vld [vmem:[#allocation6 + $0xb8] sm:$0xff]
    %v3069 = vld [vmem:[#allocation6 + $0xc0] sm:$0xff]
    %v3070 = vld [vmem:[#allocation6 + $0xc8] sm:$0xff]
    %v3071 = vld [vmem:[#allocation6 + $0xd0] sm:$0xff]
    %v3072 = vld [vmem:[#allocation6 + $0xd8] sm:$0xff]
    %v3073 = vld [vmem:[#allocation6 + $0xe0] sm:$0xff]
    %v3074 = vld [vmem:[#allocation6 + $0xe8] sm:$0xff]
    %v3075 = vld [vmem:[#allocation6 + $0xf0] sm:$0xff]
    %v3076 = vld [vmem:[#allocation6 + $0xf8] sm:$0xff]
    %v3109 = vunpack.c.l.b16 %v3045
    %v3110 = vunpack.c.h.b16 %v3045
    %v3111 = vunpack.c.l.b16 %v3046
    %v3112 = vunpack.c.h.b16 %v3046
    %v3113 = vunpack.c.l.b16 %v3047
    %v3114 = vunpack.c.h.b16 %v3047
    %v3115 = vunpack.c.l.b16 %v3048
    %v3116 = vunpack.c.h.b16 %v3048
    %v3117 = vunpack.c.l.b16 %v3049
    %v3118 = vunpack.c.h.b16 %v3049
    %v3119 = vunpack.c.l.b16 %v3050
    %v3120 = vunpack.c.h.b16 %v3050
    %v3121 = vunpack.c.l.b16 %v3051
    %v3122 = vunpack.c.h.b16 %v3051
    %v3123 = vunpack.c.l.b16 %v3052
    %v3124 = vunpack.c.h.b16 %v3052
    %v3125 = vunpack.c.l.b16 %v3053
    %v3126 = vunpack.c.h.b16 %v3053
    %v3127 = vunpack.c.l.b16 %v3054
    %v3128 = vunpack.c.h.b16 %v3054
    %v3129 = vunpack.c.l.b16 %v3055
    %v3130 = vunpack.c.h.b16 %v3055
    %v3131 = vunpack.c.l.b16 %v3056
    %v3132 = vunpack.c.h.b16 %v3056
    %v3133 = vunpack.c.l.b16 %v3057
    %v3134 = vunpack.c.h.b16 %v3057
    %v3135 = vunpack.c.l.b16 %v3058
    %v3136 = vunpack.c.h.b16 %v3058
    %v3137 = vunpack.c.l.b16 %v3059
    %v3138 = vunpack.c.h.b16 %v3059
    %v3139 = vunpack.c.l.b16 %v3060
    %v3140 = vunpack.c.h.b16 %v3060
    %v3141 = vunpack.c.l.b16 %v3061
    %v3142 = vunpack.c.h.b16 %v3061
    %v3143 = vunpack.c.l.b16 %v3062
    %v3144 = vunpack.c.h.b16 %v3062
    %v3145 = vunpack.c.l.b16 %v3063
    %v3146 = vunpack.c.h.b16 %v3063
    %v3147 = vunpack.c.l.b16 %v3064
    %v3148 = vunpack.c.h.b16 %v3064
    %v3149 = vunpack.c.l.b16 %v3065
    %v3150 = vunpack.c.h.b16 %v3065
    %v3151 = vunpack.c.l.b16 %v3066
    %v3152 = vunpack.c.h.b16 %v3066
    %v3153 = vunpack.c.l.b16 %v3067
    %v3154 = vunpack.c.h.b16 %v3067
    %v3155 = vunpack.c.l.b16 %v3068
    %v3156 = vunpack.c.h.b16 %v3068
    %v3157 = vunpack.c.l.b16 %v3069
    %v3158 = vunpack.c.h.b16 %v3069
    %v3159 = vunpack.c.l.b16 %v3070
    %v3160 = vunpack.c.h.b16 %v3070
    %v3161 = vunpack.c.l.b16 %v3071
    %v3162 = vunpack.c.h.b16 %v3071
    %v3163 = vunpack.c.l.b16 %v3072
    %v3164 = vunpack.c.h.b16 %v3072
    %v3165 = vunpack.c.l.b16 %v3073
    %v3166 = vunpack.c.h.b16 %v3073
    %v3167 = vunpack.c.l.b16 %v3074
    %v3168 = vunpack.c.h.b16 %v3074
    %v3169 = vunpack.c.l.b16 %v3075
    %v3170 = vunpack.c.h.b16 %v3075
    %v3171 = vunpack.c.l.b16 %v3076
    %v3172 = vunpack.c.h.b16 %v3076
    %v3173 = vpack.c.b16 %v3111, %v3109
    %v3174 = vpack.c.b16 %v3112, %v3110
    %v3175 = vpack.c.b16 %v3115, %v3113
    %v3176 = vpack.c.b16 %v3116, %v3114
    %v3177 = vpack.c.b16 %v3119, %v3117
    %v3178 = vpack.c.b16 %v3120, %v3118
    %v3179 = vpack.c.b16 %v3123, %v3121
    %v3180 = vpack.c.b16 %v3124, %v3122
    %v3181 = vpack.c.b16 %v3127, %v3125
    %v3182 = vpack.c.b16 %v3128, %v3126
    %v3183 = vpack.c.b16 %v3131, %v3129
    %v3184 = vpack.c.b16 %v3132, %v3130
    %v3185 = vpack.c.b16 %v3135, %v3133
    %v3186 = vpack.c.b16 %v3136, %v3134
    %v3187 = vpack.c.b16 %v3139, %v3137
    %v3188 = vpack.c.b16 %v3140, %v3138
    %v3189 = vpack.c.b16 %v3143, %v3141
    %v3190 = vpack.c.b16 %v3144, %v3142
    %v3191 = vpack.c.b16 %v3147, %v3145
    %v3192 = vpack.c.b16 %v3148, %v3146
    %v3193 = vpack.c.b16 %v3151, %v3149
    %v3194 = vpack.c.b16 %v3152, %v3150
    %v3195 = vpack.c.b16 %v3155, %v3153
    %v3196 = vpack.c.b16 %v3156, %v3154
    %v3197 = vpack.c.b16 %v3159, %v3157
    %v3198 = vpack.c.b16 %v3160, %v3158
    %v3199 = vpack.c.b16 %v3163, %v3161
    %v3200 = vpack.c.b16 %v3164, %v3162
    %v3201 = vpack.c.b16 %v3167, %v3165
    %v3202 = vpack.c.b16 %v3168, %v3166
    %v3203 = vpack.c.b16 %v3171, %v3169
    %v3204 = vpack.c.b16 %v3172, %v3170
    %3237 = vmatprep.subr.bf16.mxu0 %v3188
    %3238 = vmatpush1.bf16.msra.mxu0 %v3187
    %3239 = vmatprep.subr.bf16.mxu0 %v3186
    %3240 = vmatpush1.bf16.msra.mxu0 %v3185
    %3241 = vmatprep.subr.bf16.mxu0 %v3184
    %3242 = vmatpush1.bf16.msra.mxu0 %v3183
    %3243 = vmatprep.subr.bf16.mxu0 %v3182
    %3244 = vmatpush1.bf16.msra.mxu0 %v3181
    %3245 = vmatprep.subr.bf16.mxu0 %v3180
    %3246 = vmatpush1.bf16.msra.mxu0 %v3179
    %3247 = vmatprep.subr.bf16.mxu0 %v3178
    %3248 = vmatpush1.bf16.msra.mxu0 %v3177
    %3249 = vmatprep.subr.bf16.mxu0 %v3176
    %3250 = vmatpush1.bf16.msra.mxu0 %v3175
    %3251 = vmatprep.subr.bf16.mxu0 %v3174
    %3252 = vmatpush1.bf16.msra.mxu0 %v3173
    %3253 = vmatprep.subr.bf16.mxu0 %v3204
    %3254 = vmatpush2.bf16.msra.mxu0 %v3203
    %3255 = vmatprep.subr.bf16.mxu0 %v3202
    %3256 = vmatpush2.bf16.msra.mxu0 %v3201
    %3257 = vmatprep.subr.bf16.mxu0 %v3200
    %3258 = vmatpush2.bf16.msra.mxu0 %v3199
    %3259 = vmatprep.subr.bf16.mxu0 %v3198
    %3260 = vmatpush2.bf16.msra.mxu0 %v3197
    %3261 = vmatprep.subr.bf16.mxu0 %v3196
    %3262 = vmatpush2.bf16.msra.mxu0 %v3195
    %3263 = vmatprep.subr.bf16.mxu0 %v3194
    %3264 = vmatpush2.bf16.msra.mxu0 %v3193
    %3265 = vmatprep.subr.bf16.mxu0 %v3192
    %3266 = vmatpush2.bf16.msra.mxu0 %v3191
    %3267 = vmatprep.subr.bf16.mxu0 %v3190
    %3268 = vmatpush2.bf16.msra.mxu0 %v3189
    %3269 = vmatprep.mubr.bf16.mxu0 %v3044
    %3270 = vmatmul.mubr.bf16.gmra.mxu0 %v3043
    %v3271 = vpop.f32.mrf.mxu0
    %v3272 = vadd.f32 0.0, %v3271
    %v3273 = vpop.f32.mrf.mxu0
    %v3274 = vadd.f32 0.0, %v3273
    %v3275 = vpop.f32.mrf.mxu0
    %v3276 = vpop.f32.mrf.mxu0
    %3277 = vdwg.mxu0
    %v3278 = vmul.f32 %v2787, 0.027027028
    %v3279 = vmul.f32 %v2788, 0.027027028
    %v3280 = vmul.f32 %v3272, 0.49319696
    %v3281 = vmul.f32 %v3274, 0.49319696
    %v3282 = vadd.f32 %v3278, %v3280
    %v3283 = vadd.f32 %v3279, %v3281
    %v3284 = vmax.f32 %v3282, -1.0
    %v3285 = vmax.f32 %v3283, -1.0
    %v3286 = vmin.f32 %v3284, 1.0
    %v3287 = vmin.f32 %v3285, 1.0
    %v3288 = vsub.f32 %v2787, %v3286
    %v3289 = vsub.f32 %v2788, %v3287
    %v3290 = vmul.f32 %v3288, 0.33333334
    %v3291 = vmul.f32 %v3289, 0.33333334
    %v3292 = vmul.f32 %v3290, -1.4956012
    %v3293 = vmul.f32 %v3291, -1.4956012
    %v3294 = vadd.f32 %v2787, %v3292
    %v3295 = vadd.f32 %v2788, %v3293
    %v3296 = vmul.f32 %v3294, 0.6307905
    %v3297 = vmul.f32 %v3295, 0.6307905
    %v3298 = vpack.c.bf16 %v3296, %v3296
    %v3299 = vpack.c.bf16 %v3297, %v3297
    %v3300 = vld [vmem:[%s591] ss:$4 sm:$0x3]
    %v3302 = vlaneseq
    %v3303 = vshrl.u32 %v3302, 7
    %v3304 = vsub.s32 0, %v3303
    %v3305 = vrot.slane %v3300, %v3304
    %v3306 = vlaneseq
    %v3307 = vshrl.u32 %v3306, 7
    %v3308 = vsub.s32 1, %v3307
    %v3309 = vrot.slane %v3300, %v3308
    %3312 = vmatprep.subr.bf16.mxu0 %v2951
    %3313 = vmatpush1.bf16.msra.mxu0 %v2950
    %3314 = vmatprep.subr.bf16.mxu0 %v2949
    %3315 = vmatpush1.bf16.msra.mxu0 %v2948
    %3316 = vmatprep.subr.bf16.mxu0 %v2947
    %3317 = vmatpush1.bf16.msra.mxu0 %v2946
    %3318 = vmatprep.subr.bf16.mxu0 %v2945
    %3319 = vmatpush1.bf16.msra.mxu0 %v2944
    %3320 = vmatprep.subr.bf16.mxu0 %v2943
    %3321 = vmatpush1.bf16.msra.mxu0 %v2942
    %3322 = vmatprep.subr.bf16.mxu0 %v2941
    %3323 = vmatpush1.bf16.msra.mxu0 %v2940
    %3324 = vmatprep.subr.bf16.mxu0 %v2939
    %3325 = vmatpush1.bf16.msra.mxu0 %v2938
    %3326 = vmatprep.subr.bf16.mxu0 %v2937
    %3327 = vmatpush1.bf16.msra.mxu0 %v2936
    %3328 = vmatprep.subr.bf16.mxu0 %v2967
    %3329 = vmatpush2.bf16.msra.mxu0 %v2966
    %3330 = vmatprep.subr.bf16.mxu0 %v2965
    %3331 = vmatpush2.bf16.msra.mxu0 %v2964
    %3332 = vmatprep.subr.bf16.mxu0 %v2963
    %3333 = vmatpush2.bf16.msra.mxu0 %v2962
    %3334 = vmatprep.subr.bf16.mxu0 %v2961
    %3335 = vmatpush2.bf16.msra.mxu0 %v2960
    %3336 = vmatprep.subr.bf16.mxu0 %v2959
    %3337 = vmatpush2.bf16.msra.mxu0 %v2958
    %3338 = vmatprep.subr.bf16.mxu0 %v2957
    %3339 = vmatpush2.bf16.msra.mxu0 %v2956
    %3340 = vmatprep.subr.bf16.mxu0 %v2955
    %3341 = vmatpush2.bf16.msra.mxu0 %v2954
    %3342 = vmatprep.subr.bf16.mxu0 %v2953
    %3343 = vmatpush2.bf16.msra.mxu0 %v2952
    %3344 = vmatprep.mubr.bf16.mxu0 %v3299
    %3345 = vmatmul.mubr.bf16.gmra.mxu0 %v3298
    %v3346 = vpop.f32.mrf.mxu0
    %v3347 = vadd.f32 %v3305, %v3346
    %v3348 = vpop.f32.mrf.mxu0
    %v3349 = vadd.f32 %v3309, %v3348
    %v3350 = vpop.f32.mrf.mxu0
    %v3351 = vpop.f32.mrf.mxu0
    %3352 = vdwg.mxu0
    %v3353 = vtanh.pop %v3347
    %v3354 = vtanh.pop %v3349
    %v3355 = vpack.c.bf16 %v3353, %v3353
    %v3356 = vpack.c.bf16 %v3354, %v3354
    %3357 = vmatprep.subr.bf16.mxu0 %v3188
    %3358 = vmatpush1.bf16.msra.mxu0 %v3187
    %3359 = vmatprep.subr.bf16.mxu0 %v3186
    %3360 = vmatpush1.bf16.msra.mxu0 %v3185
    %3361 = vmatprep.subr.bf16.mxu0 %v3184
    %3362 = vmatpush1.bf16.msra.mxu0 %v3183
    %3363 = vmatprep.subr.bf16.mxu0 %v3182
    %3364 = vmatpush1.bf16.msra.mxu0 %v3181
    %3365 = vmatprep.subr.bf16.mxu0 %v3180
    %3366 = vmatpush1.bf16.msra.mxu0 %v3179
    %3367 = vmatprep.subr.bf16.mxu0 %v3178
    %3368 = vmatpush1.bf16.msra.mxu0 %v3177
    %3369 = vmatprep.subr.bf16.mxu0 %v3176
    %3370 = vmatpush1.bf16.msra.mxu0 %v3175
    %3371 = vmatprep.subr.bf16.mxu0 %v3174
    %3372 = vmatpush1.bf16.msra.mxu0 %v3173
    %3373 = vmatprep.subr.bf16.mxu0 %v3204
    %3374 = vmatpush2.bf16.msra.mxu0 %v3203
    %3375 = vmatprep.subr.bf16.mxu0 %v3202
    %3376 = vmatpush2.bf16.msra.mxu0 %v3201
    %3377 = vmatprep.subr.bf16.mxu0 %v3200
    %3378 = vmatpush2.bf16.msra.mxu0 %v3199
    %3379 = vmatprep.subr.bf16.mxu0 %v3198
    %3380 = vmatpush2.bf16.msra.mxu0 %v3197
    %3381 = vmatprep.subr.bf16.mxu0 %v3196
    %3382 = vmatpush2.bf16.msra.mxu0 %v3195
    %3383 = vmatprep.subr.bf16.mxu0 %v3194
    %3384 = vmatpush2.bf16.msra.mxu0 %v3193
    %3385 = vmatprep.subr.bf16.mxu0 %v3192
    %3386 = vmatpush2.bf16.msra.mxu0 %v3191
    %3387 = vmatprep.subr.bf16.mxu0 %v3190
    %3388 = vmatpush2.bf16.msra.mxu0 %v3189
    %3389 = vmatprep.mubr.bf16.mxu0 %v3356
    %3390 = vmatmul.mubr.bf16.gmra.mxu0 %v3355
    %v3391 = vpop.f32.mrf.mxu0
    %v3392 = vadd.f32 0.0, %v3391
    %v3393 = vpop.f32.mrf.mxu0
    %v3394 = vadd.f32 0.0, %v3393
    %v3395 = vpop.f32.mrf.mxu0
    %v3396 = vpop.f32.mrf.mxu0
    %3397 = vdwg.mxu0
    %v3398 = vmul.f32 %v3294, 0.099474154
    %v3399 = vmul.f32 %v3295, 0.099474154
    %v3400 = vmul.f32 %v3392, 0.4744802
    %v3401 = vmul.f32 %v3394, 0.4744802
    %v3402 = vadd.f32 %v3398, %v3400
    %v3403 = vadd.f32 %v3399, %v3401
    %v3404 = vmax.f32 %v3402, -1.0
    %v3405 = vmax.f32 %v3403, -1.0
    %v3406 = vmin.f32 %v3404, 1.0
    %v3407 = vmin.f32 %v3405, 1.0
    %v3408 = vsub.f32 %v3294, %v3406
    %v3409 = vsub.f32 %v3295, %v3407
    %v3410 = vmul.f32 %v3408, 0.6647174
    %v3411 = vmul.f32 %v3409, 0.6647174
    %v3412 = vmul.f32 %v3410, -2.9912024
    %v3413 = vmul.f32 %v3411, -2.9912024
    %v3414 = vadd.f32 %v2787, %v3412
    %v3415 = vadd.f32 %v2788, %v3413
    %v3416 = vmul.f32 %v2790, 0.1622196
    %v3417 = vmul.f32 %v2791, 0.1622196
    %v3418 = vadd.f32 %v3414, %v3416
    %v3419 = vadd.f32 %v3415, %v3417
    %s3420 = scalar_lea.vmem [#allocation2], 336
    %v3421 = vld [vmem:[%s3420] sm:$0xff]
    %v3422 = vld [vmem:[%s3420 + $0x8] sm:$0xff]
    %v3423 = vmul.f32 %v3421, 2.995598
    %v3424 = vmul.f32 %v3422, 2.995598
    %v3425 = vadd.f32 %v3418, %v3423
    %v3426 = vadd.f32 %v3419, %v3424
    %v3427 = vsel %vm64, %v2785, %v3425
    %v3428 = vsel %vm65, %v2786, %v3426
    %s3429 = scalar_lea.vmem [#allocation2], 352
    %v3430 = vld [vmem:[%s3429] sm:$0xff]
    %v3431 = vld [vmem:[%s3429 + $0x8] sm:$0xff]
    %v3432 = vmul.f32 %v3427, 0.32879797
    %v3433 = vmul.f32 %v3428, 0.32879797
    %v3434 = vpack.c.bf16 %v3432, %v3432
    %v3435 = vpack.c.bf16 %v3433, %v3433
    %3436 = vmatprep.subr.bf16.mxu0 %v2951
    %3437 = vmatpush1.bf16.msra.mxu0 %v2950
    %3438 = vmatprep.subr.bf16.mxu0 %v2949
    %3439 = vmatpush1.bf16.msra.mxu0 %v2948
    %3440 = vmatprep.subr.bf16.mxu0 %v2947
    %3441 = vmatpush1.bf16.msra.mxu0 %v2946
    %3442 = vmatprep.subr.bf16.mxu0 %v2945
    %3443 = vmatpush1.bf16.msra.mxu0 %v2944
    %3444 = vmatprep.subr.bf16.mxu0 %v2943
    %3445 = vmatpush1.bf16.msra.mxu0 %v2942
    %3446 = vmatprep.subr.bf16.mxu0 %v2941
    %3447 = vmatpush1.bf16.msra.mxu0 %v2940
    %3448 = vmatprep.subr.bf16.mxu0 %v2939
    %3449 = vmatpush1.bf16.msra.mxu0 %v2938
    %3450 = vmatprep.subr.bf16.mxu0 %v2937
    %3451 = vmatpush1.bf16.msra.mxu0 %v2936
    %3452 = vmatprep.subr.bf16.mxu0 %v2967
    %3453 = vmatpush2.bf16.msra.mxu0 %v2966
    %3454 = vmatprep.subr.bf16.mxu0 %v2965
    %3455 = vmatpush2.bf16.msra.mxu0 %v2964
    %3456 = vmatprep.subr.bf16.mxu0 %v2963
    %3457 = vmatpush2.bf16.msra.mxu0 %v2962
    %3458 = vmatprep.subr.bf16.mxu0 %v2961
    %3459 = vmatpush2.bf16.msra.mxu0 %v2960
    %3460 = vmatprep.subr.bf16.mxu0 %v2959
    %3461 = vmatpush2.bf16.msra.mxu0 %v2958
    %3462 = vmatprep.subr.bf16.mxu0 %v2957
    %3463 = vmatpush2.bf16.msra.mxu0 %v2956
    %3464 = vmatprep.subr.bf16.mxu0 %v2955
    %3465 = vmatpush2.bf16.msra.mxu0 %v2954
    %3466 = vmatprep.subr.bf16.mxu0 %v2953
    %3467 = vmatpush2.bf16.msra.mxu0 %v2952
    %3468 = vmatprep.mubr.bf16.mxu0 %v3435
    %3469 = vmatmul.mubr.bf16.gmra.mxu0 %v3434
    %v3470 = vpop.f32.mrf.mxu0
    %v3471 = vadd.f32 %v2833, %v3470
    %v3472 = vpop.f32.mrf.mxu0
    %v3473 = vadd.f32 %v2837, %v3472
    %v3474 = vpop.f32.mrf.mxu0
    %v3475 = vpop.f32.mrf.mxu0
    %3476 = vdwg.mxu0
    %v3477 = vtanh.pop %v3471
    %v3478 = vtanh.pop %v3473
    %v3479 = vpack.c.bf16 %v3477, %v3477
    %v3480 = vpack.c.bf16 %v3478, %v3478
    %3481 = vmatprep.subr.bf16.mxu0 %v3188
    %3482 = vmatpush1.bf16.msra.mxu0 %v3187
    %3483 = vmatprep.subr.bf16.mxu0 %v3186
    %3484 = vmatpush1.bf16.msra.mxu0 %v3185
    %3485 = vmatprep.subr.bf16.mxu0 %v3184
    %3486 = vmatpush1.bf16.msra.mxu0 %v3183
    %3487 = vmatprep.subr.bf16.mxu0 %v3182
    %3488 = vmatpush1.bf16.msra.mxu0 %v3181
    %3489 = vmatprep.subr.bf16.mxu0 %v3180
    %3490 = vmatpush1.bf16.msra.mxu0 %v3179
    %3491 = vmatprep.subr.bf16.mxu0 %v3178
    %3492 = vmatpush1.bf16.msra.mxu0 %v3177
    %3493 = vmatprep.subr.bf16.mxu0 %v3176
    %3494 = vmatpush1.bf16.msra.mxu0 %v3175
    %3495 = vmatprep.subr.bf16.mxu0 %v3174
    %3496 = vmatpush1.bf16.msra.mxu0 %v3173
    %3497 = vmatprep.subr.bf16.mxu0 %v3204
    %3498 = vmatpush2.bf16.msra.mxu0 %v3203
    %3499 = vmatprep.subr.bf16.mxu0 %v3202
    %3500 = vmatpush2.bf16.msra.mxu0 %v3201
    %3501 = vmatprep.subr.bf16.mxu0 %v3200
    %3502 = vmatpush2.bf16.msra.mxu0 %v3199
    %3503 = vmatprep.subr.bf16.mxu0 %v3198
    %3504 = vmatpush2.bf16.msra.mxu0 %v3197
    %3505 = vmatprep.subr.bf16.mxu0 %v3196
    %3506 = vmatpush2.bf16.msra.mxu0 %v3195
    %3507 = vmatprep.subr.bf16.mxu0 %v3194
    %3508 = vmatpush2.bf16.msra.mxu0 %v3193
    %3509 = vmatprep.subr.bf16.mxu0 %v3192
    %3510 = vmatpush2.bf16.msra.mxu0 %v3191
    %3511 = vmatprep.subr.bf16.mxu0 %v3190
    %3512 = vmatpush2.bf16.msra.mxu0 %v3189
    %3513 = vmatprep.mubr.bf16.mxu0 %v3480
    %3514 = vmatmul.mubr.bf16.gmra.mxu0 %v3479
    %v3515 = vpop.f32.mrf.mxu0
    %v3516 = vadd.f32 0.0, %v3515
    %v3517 = vpop.f32.mrf.mxu0
    %v3518 = vadd.f32 0.0, %v3517
    %v3519 = vpop.f32.mrf.mxu0
    %v3520 = vpop.f32.mrf.mxu0
    %3521 = vdwg.mxu0
    %v3522 = vmul.f32 %v3427, 0.027027028
    %v3523 = vmul.f32 %v3428, 0.027027028
    %v3524 = vmul.f32 %v3516, 0.49319696
    %v3525 = vmul.f32 %v3518, 0.49319696
    %v3526 = vadd.f32 %v3522, %v3524
    %v3527 = vadd.f32 %v3523, %v3525
    %v3528 = vmax.f32 %v3526, -1.0
    %v3529 = vmax.f32 %v3527, -1.0
    %v3530 = vmin.f32 %v3528, 1.0
    %v3531 = vmin.f32 %v3529, 1.0
    %v3532 = vsub.f32 %v3427, %v3530
    %v3533 = vsub.f32 %v3428, %v3531
    %v3534 = vmul.f32 %v3532, 0.33333334
    %v3535 = vmul.f32 %v3533, 0.33333334
    %v3536 = vmul.f32 %v3534, -1.4956012
    %v3537 = vmul.f32 %v3535, -1.4956012
    %v3538 = vadd.f32 %v3427, %v3536
    %v3539 = vadd.f32 %v3428, %v3537
    %v3540 = vmul.f32 %v3538, 0.6307905
    %v3541 = vmul.f32 %v3539, 0.6307905
    %v3542 = vpack.c.bf16 %v3540, %v3540
    %v3543 = vpack.c.bf16 %v3541, %v3541
    %3544 = vmatprep.subr.bf16.mxu0 %v2951
    %3545 = vmatpush1.bf16.msra.mxu0 %v2950
    %3546 = vmatprep.subr.bf16.mxu0 %v2949
    %3547 = vmatpush1.bf16.msra.mxu0 %v2948
    %3548 = vmatprep.subr.bf16.mxu0 %v2947
    %3549 = vmatpush1.bf16.msra.mxu0 %v2946
    %3550 = vmatprep.subr.bf16.mxu0 %v2945
    %3551 = vmatpush1.bf16.msra.mxu0 %v2944
    %3552 = vmatprep.subr.bf16.mxu0 %v2943
    %3553 = vmatpush1.bf16.msra.mxu0 %v2942
    %3554 = vmatprep.subr.bf16.mxu0 %v2941
    %3555 = vmatpush1.bf16.msra.mxu0 %v2940
    %3556 = vmatprep.subr.bf16.mxu0 %v2939
    %3557 = vmatpush1.bf16.msra.mxu0 %v2938
    %3558 = vmatprep.subr.bf16.mxu0 %v2937
    %3559 = vmatpush1.bf16.msra.mxu0 %v2936
    %3560 = vmatprep.subr.bf16.mxu0 %v2967
    %3561 = vmatpush2.bf16.msra.mxu0 %v2966
    %3562 = vmatprep.subr.bf16.mxu0 %v2965
    %3563 = vmatpush2.bf16.msra.mxu0 %v2964
    %3564 = vmatprep.subr.bf16.mxu0 %v2963
    %3565 = vmatpush2.bf16.msra.mxu0 %v2962
    %3566 = vmatprep.subr.bf16.mxu0 %v2961
    %3567 = vmatpush2.bf16.msra.mxu0 %v2960
    %3568 = vmatprep.subr.bf16.mxu0 %v2959
    %3569 = vmatpush2.bf16.msra.mxu0 %v2958
    %3570 = vmatprep.subr.bf16.mxu0 %v2957
    %3571 = vmatpush2.bf16.msra.mxu0 %v2956
    %3572 = vmatprep.subr.bf16.mxu0 %v2955
    %3573 = vmatpush2.bf16.msra.mxu0 %v2954
    %3574 = vmatprep.subr.bf16.mxu0 %v2953
    %3575 = vmatpush2.bf16.msra.mxu0 %v2952
    %3576 = vmatprep.mubr.bf16.mxu0 %v3543
    %3577 = vmatmul.mubr.bf16.gmra.mxu0 %v3542
    %v3578 = vpop.f32.mrf.mxu0
    %v3579 = vadd.f32 %v3305, %v3578
    %v3580 = vpop.f32.mrf.mxu0
    %v3581 = vadd.f32 %v3309, %v3580
    %v3582 = vpop.f32.mrf.mxu0
    %v3583 = vpop.f32.mrf.mxu0
    %3584 = vdwg.mxu0
    %v3585 = vtanh.pop %v3579
    %v3586 = vtanh.pop %v3581
    %v3587 = vpack.c.bf16 %v3585, %v3585
    %v3588 = vpack.c.bf16 %v3586, %v3586
    %3589 = vmatprep.subr.bf16.mxu0 %v3188
    %3590 = vmatpush1.bf16.msra.mxu0 %v3187
    %3591 = vmatprep.subr.bf16.mxu0 %v3186
    %3592 = vmatpush1.bf16.msra.mxu0 %v3185
    %3593 = vmatprep.subr.bf16.mxu0 %v3184
    %3594 = vmatpush1.bf16.msra.mxu0 %v3183
    %3595 = vmatprep.subr.bf16.mxu0 %v3182
    %3596 = vmatpush1.bf16.msra.mxu0 %v3181
    %3597 = vmatprep.subr.bf16.mxu0 %v3180
    %3598 = vmatpush1.bf16.msra.mxu0 %v3179
    %3599 = vmatprep.subr.bf16.mxu0 %v3178
    %3600 = vmatpush1.bf16.msra.mxu0 %v3177
    %3601 = vmatprep.subr.bf16.mxu0 %v3176
    %3602 = vmatpush1.bf16.msra.mxu0 %v3175
    %3603 = vmatprep.subr.bf16.mxu0 %v3174
    %3604 = vmatpush1.bf16.msra.mxu0 %v3173
    %3605 = vmatprep.subr.bf16.mxu0 %v3204
    %3606 = vmatpush2.bf16.msra.mxu0 %v3203
    %3607 = vmatprep.subr.bf16.mxu0 %v3202
    %3608 = vmatpush2.bf16.msra.mxu0 %v3201
    %3609 = vmatprep.subr.bf16.mxu0 %v3200
    %3610 = vmatpush2.bf16.msra.mxu0 %v3199
    %3611 = vmatprep.subr.bf16.mxu0 %v3198
    %3612 = vmatpush2.bf16.msra.mxu0 %v3197
    %3613 = vmatprep.subr.bf16.mxu0 %v3196
    %3614 = vmatpush2.bf16.msra.mxu0 %v3195
    %3615 = vmatprep.subr.bf16.mxu0 %v3194
    %3616 = vmatpush2.bf16.msra.mxu0 %v3193
    %3617 = vmatprep.subr.bf16.mxu0 %v3192
    %3618 = vmatpush2.bf16.msra.mxu0 %v3191
    %3619 = vmatprep.subr.bf16.mxu0 %v3190
    %3620 = vmatpush2.bf16.msra.mxu0 %v3189
    %3621 = vmatprep.mubr.bf16.mxu0 %v3588
    %3622 = vmatmul.mubr.bf16.gmra.mxu0 %v3587
    %v3623 = vpop.f32.mrf.mxu0
    %v3624 = vadd.f32 0.0, %v3623
    %v3625 = vpop.f32.mrf.mxu0
    %v3626 = vadd.f32 0.0, %v3625
    %v3627 = vpop.f32.mrf.mxu0
    %v3628 = vpop.f32.mrf.mxu0
    %3629 = vdwg.mxu0
    %v3630 = vmul.f32 %v3538, 0.099474154
    %v3631 = vmul.f32 %v3539, 0.099474154
    %v3632 = vmul.f32 %v3624, 0.4744802
    %v3633 = vmul.f32 %v3626, 0.4744802
    %v3634 = vadd.f32 %v3630, %v3632
    %v3635 = vadd.f32 %v3631, %v3633
    %v3636 = vmax.f32 %v3634, -1.0
    %v3637 = vmax.f32 %v3635, -1.0
    %v3638 = vmin.f32 %v3636, 1.0
    %v3639 = vmin.f32 %v3637, 1.0
    %v3640 = vsub.f32 %v3538, %v3638
    %v3641 = vsub.f32 %v3539, %v3639
    %v3642 = vmul.f32 %v3640, 0.6647174
    %v3643 = vmul.f32 %v3641, 0.6647174
    %v3644 = vmul.f32 %v3642, -2.9912024
    %v3645 = vmul.f32 %v3643, -2.9912024
    %v3646 = vadd.f32 %v3427, %v3644
    %v3647 = vadd.f32 %v3428, %v3645
    %v3648 = vmul.f32 %v3430, 0.1622196
    %v3649 = vmul.f32 %v3431, 0.1622196
    %v3650 = vadd.f32 %v3646, %v3648
    %v3651 = vadd.f32 %v3647, %v3649
    %s3652 = scalar_lea.vmem [#allocation2], 368
    %v3653 = vld [vmem:[%s3652] sm:$0xff]
    %v3654 = vld [vmem:[%s3652 + $0x8] sm:$0xff]
    %v3655 = vmul.f32 %v3653, 0.16245797
    %v3656 = vmul.f32 %v3654, 0.16245797
    %v3657 = vadd.f32 %v2773, %v3655
    %v3658 = vadd.f32 %v3656, 0.0
    %v3659 = vsel %vm64, %v3657, %v3650
    %v3660 = vsel %vm65, %v3658, %v3651
    %s3661 = scalar_lea.vmem [#allocation2], 384
    %v3662 = vld [vmem:[%s3661] sm:$0xff]
    %v3663 = vld [vmem:[%s3661 + $0x8] sm:$0xff]
    %v3664 = vmul.f32 %v3659, 1.9021151
    %v3665 = vmul.f32 %v3660, 1.9021151
    %v3666 = vpack.c.bf16 %v3664, %v3664
    %v3667 = vpack.c.bf16 %v3665, %v3665
    %v3668 = vld [vmem:[%s960] ss:$4 sm:$0x3]
    %v3670 = vlaneseq
    %v3671 = vshrl.u32 %v3670, 7
    %v3672 = vsub.s32 0, %v3671
    %v3673 = vrot.slane %v3668, %v3672
    %v3674 = vlaneseq
    %v3675 = vshrl.u32 %v3674, 7
    %v3676 = vsub.s32 1, %v3675
    %v3677 = vrot.slane %v3668, %v3676
    %3680 = vmatprep.subr.bf16.mxu0 %v2951
    %3681 = vmatpush1.bf16.msra.mxu0 %v2950
    %3682 = vmatprep.subr.bf16.mxu0 %v2949
    %3683 = vmatpush1.bf16.msra.mxu0 %v2948
    %3684 = vmatprep.subr.bf16.mxu0 %v2947
    %3685 = vmatpush1.bf16.msra.mxu0 %v2946
    %3686 = vmatprep.subr.bf16.mxu0 %v2945
    %3687 = vmatpush1.bf16.msra.mxu0 %v2944
    %3688 = vmatprep.subr.bf16.mxu0 %v2943
    %3689 = vmatpush1.bf16.msra.mxu0 %v2942
    %3690 = vmatprep.subr.bf16.mxu0 %v2941
    %3691 = vmatpush1.bf16.msra.mxu0 %v2940
    %3692 = vmatprep.subr.bf16.mxu0 %v2939
    %3693 = vmatpush1.bf16.msra.mxu0 %v2938
    %3694 = vmatprep.subr.bf16.mxu0 %v2937
    %3695 = vmatpush1.bf16.msra.mxu0 %v2936
    %3696 = vmatprep.subr.bf16.mxu0 %v2967
    %3697 = vmatpush2.bf16.msra.mxu0 %v2966
    %3698 = vmatprep.subr.bf16.mxu0 %v2965
    %3699 = vmatpush2.bf16.msra.mxu0 %v2964
    %3700 = vmatprep.subr.bf16.mxu0 %v2963
    %3701 = vmatpush2.bf16.msra.mxu0 %v2962
    %3702 = vmatprep.subr.bf16.mxu0 %v2961
    %3703 = vmatpush2.bf16.msra.mxu0 %v2960
    %3704 = vmatprep.subr.bf16.mxu0 %v2959
    %3705 = vmatpush2.bf16.msra.mxu0 %v2958
    %3706 = vmatprep.subr.bf16.mxu0 %v2957
    %3707 = vmatpush2.bf16.msra.mxu0 %v2956
    %3708 = vmatprep.subr.bf16.mxu0 %v2955
    %3709 = vmatpush2.bf16.msra.mxu0 %v2954
    %3710 = vmatprep.subr.bf16.mxu0 %v2953
    %3711 = vmatpush2.bf16.msra.mxu0 %v2952
    %3712 = vmatprep.mubr.bf16.mxu0 %v3667
    %3713 = vmatmul.mubr.bf16.gmra.mxu0 %v3666
    %v3714 = vpop.f32.mrf.mxu0
    %v3715 = vadd.f32 %v3673, %v3714
    %v3716 = vpop.f32.mrf.mxu0
    %v3717 = vadd.f32 %v3677, %v3716
    %v3718 = vpop.f32.mrf.mxu0
    %v3719 = vpop.f32.mrf.mxu0
    %3720 = vdwg.mxu0
    %v3721 = vtanh.pop %v3715
    %v3722 = vtanh.pop %v3717
    %v3723 = vpack.c.bf16 %v3721, %v3721
    %v3724 = vpack.c.bf16 %v3722, %v3722
    %3725 = vmatprep.subr.bf16.mxu0 %v3188
    %3726 = vmatpush1.bf16.msra.mxu0 %v3187
    %3727 = vmatprep.subr.bf16.mxu0 %v3186
    %3728 = vmatpush1.bf16.msra.mxu0 %v3185
    %3729 = vmatprep.subr.bf16.mxu0 %v3184
    %3730 = vmatpush1.bf16.msra.mxu0 %v3183
    %3731 = vmatprep.subr.bf16.mxu0 %v3182
    %3732 = vmatpush1.bf16.msra.mxu0 %v3181
    %3733 = vmatprep.subr.bf16.mxu0 %v3180
    %3734 = vmatpush1.bf16.msra.mxu0 %v3179
    %3735 = vmatprep.subr.bf16.mxu0 %v3178
    %3736 = vmatpush1.bf16.msra.mxu0 %v3177
    %3737 = vmatprep.subr.bf16.mxu0 %v3176
    %3738 = vmatpush1.bf16.msra.mxu0 %v3175
    %3739 = vmatprep.subr.bf16.mxu0 %v3174
    %3740 = vmatpush1.bf16.msra.mxu0 %v3173
    %3741 = vmatprep.subr.bf16.mxu0 %v3204
    %3742 = vmatpush2.bf16.msra.mxu0 %v3203
    %3743 = vmatprep.subr.bf16.mxu0 %v3202
    %3744 = vmatpush2.bf16.msra.mxu0 %v3201
    %3745 = vmatprep.subr.bf16.mxu0 %v3200
    %3746 = vmatpush2.bf16.msra.mxu0 %v3199
    %3747 = vmatprep.subr.bf16.mxu0 %v3198
    %3748 = vmatpush2.bf16.msra.mxu0 %v3197
    %3749 = vmatprep.subr.bf16.mxu0 %v3196
    %3750 = vmatpush2.bf16.msra.mxu0 %v3195
    %3751 = vmatprep.subr.bf16.mxu0 %v3194
    %3752 = vmatpush2.bf16.msra.mxu0 %v3193
    %3753 = vmatprep.subr.bf16.mxu0 %v3192
    %3754 = vmatpush2.bf16.msra.mxu0 %v3191
    %3755 = vmatprep.subr.bf16.mxu0 %v3190
    %3756 = vmatpush2.bf16.msra.mxu0 %v3189
    %3757 = vmatprep.mubr.bf16.mxu0 %v3724
    %3758 = vmatmul.mubr.bf16.gmra.mxu0 %v3723
    %v3759 = vpop.f32.mrf.mxu0
    %v3760 = vadd.f32 0.0, %v3759
    %v3761 = vpop.f32.mrf.mxu0
    %v3762 = vadd.f32 0.0, %v3761
    %v3763 = vpop.f32.mrf.mxu0
    %v3764 = vpop.f32.mrf.mxu0
    %3765 = vdwg.mxu0
    %v3766 = vmul.f32 %v3659, 0.9045105
    %v3767 = vmul.f32 %v3660, 0.9045105
    %v3768 = vmul.f32 %v3760, 0.15450689
    %v3769 = vmul.f32 %v3762, 0.15450689
    %v3770 = vadd.f32 %v3766, %v3768
    %v3771 = vadd.f32 %v3767, %v3769
    %v3772 = vmax.f32 %v3770, -1.0
    %v3773 = vmax.f32 %v3771, -1.0
    %v3774 = vmin.f32 %v3772, 1.0
    %v3775 = vmin.f32 %v3773, 1.0
    %v3776 = vsub.f32 %v3659, %v3774
    %v3777 = vsub.f32 %v3660, %v3775
    %v3778 = vmul.f32 %v3776, 6.155438
    %v3779 = vmul.f32 %v3777, 6.155438
    %v3780 = vmul.f32 %v3778, -0.08122591
    %v3781 = vmul.f32 %v3779, -0.08122591
    %v3782 = vadd.f32 %v3659, %v3780
    %v3783 = vadd.f32 %v3660, %v3781
    %v3784 = vmul.f32 %v3782, 1.9741167
    %v3785 = vmul.f32 %v3783, 1.9741167
    %v3786 = vpack.c.bf16 %v3784, %v3784
    %v3787 = vpack.c.bf16 %v3785, %v3785
    %v3788 = vld [vmem:[%s1081] ss:$4 sm:$0x3]
    %v3790 = vlaneseq
    %v3791 = vshrl.u32 %v3790, 7
    %v3792 = vsub.s32 0, %v3791
    %v3793 = vrot.slane %v3788, %v3792
    %v3794 = vlaneseq
    %v3795 = vshrl.u32 %v3794, 7
    %v3796 = vsub.s32 1, %v3795
    %v3797 = vrot.slane %v3788, %v3796
    %3800 = vmatprep.subr.bf16.mxu0 %v2951
    %3801 = vmatpush1.bf16.msra.mxu0 %v2950
    %3802 = vmatprep.subr.bf16.mxu0 %v2949
    %3803 = vmatpush1.bf16.msra.mxu0 %v2948
    %3804 = vmatprep.subr.bf16.mxu0 %v2947
    %3805 = vmatpush1.bf16.msra.mxu0 %v2946
    %3806 = vmatprep.subr.bf16.mxu0 %v2945
    %3807 = vmatpush1.bf16.msra.mxu0 %v2944
    %3808 = vmatprep.subr.bf16.mxu0 %v2943
    %3809 = vmatpush1.bf16.msra.mxu0 %v2942
    %3810 = vmatprep.subr.bf16.mxu0 %v2941
    %3811 = vmatpush1.bf16.msra.mxu0 %v2940
    %3812 = vmatprep.subr.bf16.mxu0 %v2939
    %3813 = vmatpush1.bf16.msra.mxu0 %v2938
    %3814 = vmatprep.subr.bf16.mxu0 %v2937
    %3815 = vmatpush1.bf16.msra.mxu0 %v2936
    %3816 = vmatprep.subr.bf16.mxu0 %v2967
    %3817 = vmatpush2.bf16.msra.mxu0 %v2966
    %3818 = vmatprep.subr.bf16.mxu0 %v2965
    %3819 = vmatpush2.bf16.msra.mxu0 %v2964
    %3820 = vmatprep.subr.bf16.mxu0 %v2963
    %3821 = vmatpush2.bf16.msra.mxu0 %v2962
    %3822 = vmatprep.subr.bf16.mxu0 %v2961
    %3823 = vmatpush2.bf16.msra.mxu0 %v2960
    %3824 = vmatprep.subr.bf16.mxu0 %v2959
    %3825 = vmatpush2.bf16.msra.mxu0 %v2958
    %3826 = vmatprep.subr.bf16.mxu0 %v2957
    %3827 = vmatpush2.bf16.msra.mxu0 %v2956
    %3828 = vmatprep.subr.bf16.mxu0 %v2955
    %3829 = vmatpush2.bf16.msra.mxu0 %v2954
    %3830 = vmatprep.subr.bf16.mxu0 %v2953
    %3831 = vmatpush2.bf16.msra.mxu0 %v2952
    %3832 = vmatprep.mubr.bf16.mxu0 %v3787
    %3833 = vmatmul.mubr.bf16.gmra.mxu0 %v3786
    %v3834 = vpop.f32.mrf.mxu0
    %v3835 = vadd.f32 %v3793, %v3834
    %v3836 = vpop.f32.mrf.mxu0
    %v3837 = vadd.f32 %v3797, %v3836
    %v3838 = vpop.f32.mrf.mxu0
    %v3839 = vpop.f32.mrf.mxu0
    %3840 = vdwg.mxu0
    %v3841 = vtanh.pop %v3835
    %v3842 = vtanh.pop %v3837
    %v3843 = vpack.c.bf16 %v3841, %v3841
    %v3844 = vpack.c.bf16 %v3842, %v3842
    %3845 = vmatprep.subr.bf16.mxu0 %v3188
    %3846 = vmatpush1.bf16.msra.mxu0 %v3187
    %3847 = vmatprep.subr.bf16.mxu0 %v3186
    %3848 = vmatpush1.bf16.msra.mxu0 %v3185
    %3849 = vmatprep.subr.bf16.mxu0 %v3184
    %3850 = vmatpush1.bf16.msra.mxu0 %v3183
    %3851 = vmatprep.subr.bf16.mxu0 %v3182
    %3852 = vmatpush1.bf16.msra.mxu0 %v3181
    %3853 = vmatprep.subr.bf16.mxu0 %v3180
    %3854 = vmatpush1.bf16.msra.mxu0 %v3179
    %3855 = vmatprep.subr.bf16.mxu0 %v3178
    %3856 = vmatpush1.bf16.msra.mxu0 %v3177
    %3857 = vmatprep.subr.bf16.mxu0 %v3176
    %3858 = vmatpush1.bf16.msra.mxu0 %v3175
    %3859 = vmatprep.subr.bf16.mxu0 %v3174
    %3860 = vmatpush1.bf16.msra.mxu0 %v3173
    %3861 = vmatprep.subr.bf16.mxu0 %v3204
    %3862 = vmatpush2.bf16.msra.mxu0 %v3203
    %3863 = vmatprep.subr.bf16.mxu0 %v3202
    %3864 = vmatpush2.bf16.msra.mxu0 %v3201
    %3865 = vmatprep.subr.bf16.mxu0 %v3200
    %3866 = vmatpush2.bf16.msra.mxu0 %v3199
    %3867 = vmatprep.subr.bf16.mxu0 %v3198
    %3868 = vmatpush2.bf16.msra.mxu0 %v3197
    %3869 = vmatprep.subr.bf16.mxu0 %v3196
    %3870 = vmatpush2.bf16.msra.mxu0 %v3195
    %3871 = vmatprep.subr.bf16.mxu0 %v3194
    %3872 = vmatpush2.bf16.msra.mxu0 %v3193
    %3873 = vmatprep.subr.bf16.mxu0 %v3192
    %3874 = vmatpush2.bf16.msra.mxu0 %v3191
    %3875 = vmatprep.subr.bf16.mxu0 %v3190
    %3876 = vmatpush2.bf16.msra.mxu0 %v3189
    %3877 = vmatprep.mubr.bf16.mxu0 %v3844
    %3878 = vmatmul.mubr.bf16.gmra.mxu0 %v3843
    %v3879 = vpop.f32.mrf.mxu0
    %v3880 = vadd.f32 0.0, %v3879
    %v3881 = vpop.f32.mrf.mxu0
    %v3882 = vadd.f32 0.0, %v3881
    %v3883 = vpop.f32.mrf.mxu0
    %v3884 = vpop.f32.mrf.mxu0
    %3885 = vdwg.mxu0
    %v3886 = vmul.f32 %v3782, 0.9742842
    %v3887 = vmul.f32 %v3783, 0.9742842
    %v3888 = vmul.f32 %v3880, 0.08018079
    %v3889 = vmul.f32 %v3882, 0.08018079
    %v3890 = vadd.f32 %v3886, %v3888
    %v3891 = vadd.f32 %v3887, %v3889
    %v3892 = vmax.f32 %v3890, -1.0
    %v3893 = vmax.f32 %v3891, -1.0
    %v3894 = vmin.f32 %v3892, 1.0
    %v3895 = vmin.f32 %v3893, 1.0
    %v3896 = vsub.f32 %v3782, %v3894
    %v3897 = vsub.f32 %v3783, %v3895
    %v3898 = vmul.f32 %v3896, 12.31041
    %v3899 = vmul.f32 %v3897, 12.31041
    %v3900 = vmul.f32 %v3898, -0.16245182
    %v3901 = vmul.f32 %v3899, -0.16245182
    %v3902 = vadd.f32 %v3659, %v3900
    %v3903 = vadd.f32 %v3660, %v3901
    %v3904 = vmul.f32 %v3662, 0.0009999811
    %v3905 = vmul.f32 %v3663, 0.0009999811
    %v3906 = vadd.f32 %v3902, %v3904
    %v3907 = vadd.f32 %v3903, %v3905
    %s3908 = scalar_lea.vmem [#allocation2], 400
    %v3909 = vld [vmem:[%s3908] sm:$0xff]
    %v3910 = vld [vmem:[%s3908 + $0x8] sm:$0xff]
    %v3911 = vmul.f32 %v3909, 0.1624549
    %v3912 = vmul.f32 %v3910, 0.1624549
    %v3913 = vadd.f32 %v3906, %v3911
    %v3914 = vadd.f32 %v3907, %v3912
    %v3915 = vsel %vm64, %v3657, %v3913
    %v3916 = vsel %vm65, %v3658, %v3914
    %s3917 = scalar_lea.vmem [#allocation2], 416
    %v3918 = vld [vmem:[%s3917 + $0x8] sm:$0xff]
    %v3919 = vmul.f32 %v3915, 1.9021151
    %v3920 = vmul.f32 %v3916, 1.9021151
    %v3921 = vpack.c.bf16 %v3919, %v3919
    %v3922 = vpack.c.bf16 %v3920, %v3920
    %3923 = vmatprep.subr.bf16.mxu0 %v2951
    %3924 = vmatpush1.bf16.msra.mxu0 %v2950
    %3925 = vmatprep.subr.bf16.mxu0 %v2949
    %3926 = vmatpush1.bf16.msra.mxu0 %v2948
    %3927 = vmatprep.subr.bf16.mxu0 %v2947
    %3928 = vmatpush1.bf16.msra.mxu0 %v2946
    %3929 = vmatprep.subr.bf16.mxu0 %v2945
    %3930 = vmatpush1.bf16.msra.mxu0 %v2944
    %3931 = vmatprep.subr.bf16.mxu0 %v2943
    %3932 = vmatpush1.bf16.msra.mxu0 %v2942
    %3933 = vmatprep.subr.bf16.mxu0 %v2941
    %3934 = vmatpush1.bf16.msra.mxu0 %v2940
    %3935 = vmatprep.subr.bf16.mxu0 %v2939
    %3936 = vmatpush1.bf16.msra.mxu0 %v2938
    %3937 = vmatprep.subr.bf16.mxu0 %v2937
    %3938 = vmatpush1.bf16.msra.mxu0 %v2936
    %3939 = vmatprep.subr.bf16.mxu0 %v2967
    %3940 = vmatpush2.bf16.msra.mxu0 %v2966
    %3941 = vmatprep.subr.bf16.mxu0 %v2965
    %3942 = vmatpush2.bf16.msra.mxu0 %v2964
    %3943 = vmatprep.subr.bf16.mxu0 %v2963
    %3944 = vmatpush2.bf16.msra.mxu0 %v2962
    %3945 = vmatprep.subr.bf16.mxu0 %v2961
    %3946 = vmatpush2.bf16.msra.mxu0 %v2960
    %3947 = vmatprep.subr.bf16.mxu0 %v2959
    %3948 = vmatpush2.bf16.msra.mxu0 %v2958
    %3949 = vmatprep.subr.bf16.mxu0 %v2957
    %3950 = vmatpush2.bf16.msra.mxu0 %v2956
    %3951 = vmatprep.subr.bf16.mxu0 %v2955
    %3952 = vmatpush2.bf16.msra.mxu0 %v2954
    %3953 = vmatprep.subr.bf16.mxu0 %v2953
    %3954 = vmatpush2.bf16.msra.mxu0 %v2952
    %3955 = vmatprep.mubr.bf16.mxu0 %v3922
    %3956 = vmatmul.mubr.bf16.gmra.mxu0 %v3921
    %v3957 = vpop.f32.mrf.mxu0
    %v3958 = vadd.f32 %v3673, %v3957
    %v3959 = vpop.f32.mrf.mxu0
    %v3960 = vadd.f32 %v3677, %v3959
    %v3961 = vpop.f32.mrf.mxu0
    %v3962 = vpop.f32.mrf.mxu0
    %3963 = vdwg.mxu0
    %v3964 = vtanh.pop %v3958
    %v3965 = vtanh.pop %v3960
    %v3966 = vpack.c.bf16 %v3964, %v3964
    %v3967 = vpack.c.bf16 %v3965, %v3965
    %3968 = vmatprep.subr.bf16.mxu0 %v3188
    %3969 = vmatpush1.bf16.msra.mxu0 %v3187
    %3970 = vmatprep.subr.bf16.mxu0 %v3186
    %3971 = vmatpush1.bf16.msra.mxu0 %v3185
    %3972 = vmatprep.subr.bf16.mxu0 %v3184
    %3973 = vmatpush1.bf16.msra.mxu0 %v3183
    %3974 = vmatprep.subr.bf16.mxu0 %v3182
    %3975 = vmatpush1.bf16.msra.mxu0 %v3181
    %3976 = vmatprep.subr.bf16.mxu0 %v3180
    %3977 = vmatpush1.bf16.msra.mxu0 %v3179
    %3978 = vmatprep.subr.bf16.mxu0 %v3178
    %3979 = vmatpush1.bf16.msra.mxu0 %v3177
    %3980 = vmatprep.subr.bf16.mxu0 %v3176
    %3981 = vmatpush1.bf16.msra.mxu0 %v3175
    %3982 = vmatprep.subr.bf16.mxu0 %v3174
    %3983 = vmatpush1.bf16.msra.mxu0 %v3173
    %3984 = vmatprep.subr.bf16.mxu0 %v3204
    %3985 = vmatpush2.bf16.msra.mxu0 %v3203
    %3986 = vmatprep.subr.bf16.mxu0 %v3202
    %3987 = vmatpush2.bf16.msra.mxu0 %v3201
    %3988 = vmatprep.subr.bf16.mxu0 %v3200
    %3989 = vmatpush2.bf16.msra.mxu0 %v3199
    %3990 = vmatprep.subr.bf16.mxu0 %v3198
    %3991 = vmatpush2.bf16.msra.mxu0 %v3197
    %3992 = vmatprep.subr.bf16.mxu0 %v3196
    %3993 = vmatpush2.bf16.msra.mxu0 %v3195
    %3994 = vmatprep.subr.bf16.mxu0 %v3194
    %3995 = vmatpush2.bf16.msra.mxu0 %v3193
    %3996 = vmatprep.subr.bf16.mxu0 %v3192
    %3997 = vmatpush2.bf16.msra.mxu0 %v3191
    %3998 = vmatprep.subr.bf16.mxu0 %v3190
    %3999 = vmatpush2.bf16.msra.mxu0 %v3189
    %4000 = vmatprep.mubr.bf16.mxu0 %v3967
    %4001 = vmatmul.mubr.bf16.gmra.mxu0 %v3966
    %v4002 = vpop.f32.mrf.mxu0
    %v4003 = vadd.f32 0.0, %v4002
    %v4004 = vpop.f32.mrf.mxu0
    %v4005 = vadd.f32 0.0, %v4004
    %v4006 = vpop.f32.mrf.mxu0
    %v4007 = vpop.f32.mrf.mxu0
    %4008 = vdwg.mxu0
    %v4009 = vmul.f32 %v3915, 0.9045105
    %v4010 = vmul.f32 %v3916, 0.9045105
    %v4011 = vmul.f32 %v4003, 0.15450689
    %v4012 = vmul.f32 %v4005, 0.15450689
    %v4013 = vadd.f32 %v4009, %v4011
    %v4014 = vadd.f32 %v4010, %v4012
    %v4015 = vmax.f32 %v4013, -1.0
    %v4016 = vmax.f32 %v4014, -1.0
    %v4017 = vmin.f32 %v4015, 1.0
    %v4018 = vmin.f32 %v4016, 1.0
    %v4019 = vsub.f32 %v3915, %v4017
    %v4020 = vsub.f32 %v3916, %v4018
    %v4021 = vmul.f32 %v4019, 6.155438
    %v4022 = vmul.f32 %v4020, 6.155438
    %v4023 = vmul.f32 %v4021, -0.08122591
    %v4024 = vmul.f32 %v4022, -0.08122591
    %v4025 = vadd.f32 %v3915, %v4023
    %v4026 = vadd.f32 %v3916, %v4024
    %v4027 = vmul.f32 %v4025, 1.9741167
    %v4028 = vmul.f32 %v4026, 1.9741167
    %v4029 = vpack.c.bf16 %v4027, %v4027
    %v4030 = vpack.c.bf16 %v4028, %v4028
    %4031 = vmatprep.subr.bf16.mxu0 %v2951
    %4032 = vmatpush1.bf16.msra.mxu0 %v2950
    %4033 = vmatprep.subr.bf16.mxu0 %v2949
    %4034 = vmatpush1.bf16.msra.mxu0 %v2948
    %4035 = vmatprep.subr.bf16.mxu0 %v2947
    %4036 = vmatpush1.bf16.msra.mxu0 %v2946
    %4037 = vmatprep.subr.bf16.mxu0 %v2945
    %4038 = vmatpush1.bf16.msra.mxu0 %v2944
    %4039 = vmatprep.subr.bf16.mxu0 %v2943
    %4040 = vmatpush1.bf16.msra.mxu0 %v2942
    %4041 = vmatprep.subr.bf16.mxu0 %v2941
    %4042 = vmatpush1.bf16.msra.mxu0 %v2940
    %4043 = vmatprep.subr.bf16.mxu0 %v2939
    %4044 = vmatpush1.bf16.msra.mxu0 %v2938
    %4045 = vmatprep.subr.bf16.mxu0 %v2937
    %4046 = vmatpush1.bf16.msra.mxu0 %v2936
    %4047 = vmatprep.subr.bf16.mxu0 %v2967
    %4048 = vmatpush2.bf16.msra.mxu0 %v2966
    %4049 = vmatprep.subr.bf16.mxu0 %v2965
    %4050 = vmatpush2.bf16.msra.mxu0 %v2964
    %4051 = vmatprep.subr.bf16.mxu0 %v2963
    %4052 = vmatpush2.bf16.msra.mxu0 %v2962
    %4053 = vmatprep.subr.bf16.mxu0 %v2961
    %4054 = vmatpush2.bf16.msra.mxu0 %v2960
    %4055 = vmatprep.subr.bf16.mxu0 %v2959
    %4056 = vmatpush2.bf16.msra.mxu0 %v2958
    %4057 = vmatprep.subr.bf16.mxu0 %v2957
    %4058 = vmatpush2.bf16.msra.mxu0 %v2956
    %4059 = vmatprep.subr.bf16.mxu0 %v2955
    %4060 = vmatpush2.bf16.msra.mxu0 %v2954
    %4061 = vmatprep.subr.bf16.mxu0 %v2953
    %4062 = vmatpush2.bf16.msra.mxu0 %v2952
    %4063 = vmatprep.mubr.bf16.mxu0 %v4030
    %4064 = vmatmul.mubr.bf16.gmra.mxu0 %v4029
    %v4065 = vpop.f32.mrf.mxu0
    %v4066 = vadd.f32 %v3793, %v4065
    %v4067 = vpop.f32.mrf.mxu0
    %v4068 = vadd.f32 %v3797, %v4067
    %v4069 = vpop.f32.mrf.mxu0
    %v4070 = vpop.f32.mrf.mxu0
    %4071 = vdwg.mxu0
    %v4072 = vtanh.pop %v4066
    %v4073 = vtanh.pop %v4068
    %v4074 = vpack.c.bf16 %v4072, %v4072
    %v4075 = vpack.c.bf16 %v4073, %v4073
    %4076 = vmatprep.subr.bf16.mxu0 %v3188
    %4077 = vmatpush1.bf16.msra.mxu0 %v3187
    %4078 = vmatprep.subr.bf16.mxu0 %v3186
    %4079 = vmatpush1.bf16.msra.mxu0 %v3185
    %4080 = vmatprep.subr.bf16.mxu0 %v3184
    %4081 = vmatpush1.bf16.msra.mxu0 %v3183
    %4082 = vmatprep.subr.bf16.mxu0 %v3182
    %4083 = vmatpush1.bf16.msra.mxu0 %v3181
    %4084 = vmatprep.subr.bf16.mxu0 %v3180
    %4085 = vmatpush1.bf16.msra.mxu0 %v3179
    %4086 = vmatprep.subr.bf16.mxu0 %v3178
    %4087 = vmatpush1.bf16.msra.mxu0 %v3177
    %4088 = vmatprep.subr.bf16.mxu0 %v3176
    %4089 = vmatpush1.bf16.msra.mxu0 %v3175
    %4090 = vmatprep.subr.bf16.mxu0 %v3174
    %4091 = vmatpush1.bf16.msra.mxu0 %v3173
    %4092 = vmatprep.subr.bf16.mxu0 %v3204
    %4093 = vmatpush2.bf16.msra.mxu0 %v3203
    %4094 = vmatprep.subr.bf16.mxu0 %v3202
    %4095 = vmatpush2.bf16.msra.mxu0 %v3201
    %4096 = vmatprep.subr.bf16.mxu0 %v3200
    %4097 = vmatpush2.bf16.msra.mxu0 %v3199
    %4098 = vmatprep.subr.bf16.mxu0 %v3198
    %4099 = vmatpush2.bf16.msra.mxu0 %v3197
    %4100 = vmatprep.subr.bf16.mxu0 %v3196
    %4101 = vmatpush2.bf16.msra.mxu0 %v3195
    %4102 = vmatprep.subr.bf16.mxu0 %v3194
    %4103 = vmatpush2.bf16.msra.mxu0 %v3193
    %4104 = vmatprep.subr.bf16.mxu0 %v3192
    %4105 = vmatpush2.bf16.msra.mxu0 %v3191
    %4106 = vmatprep.subr.bf16.mxu0 %v3190
    %4107 = vmatpush2.bf16.msra.mxu0 %v3189
    %4108 = vmatprep.mubr.bf16.mxu0 %v4075
    %4109 = vmatmul.mubr.bf16.gmra.mxu0 %v4074
    %v4110 = vpop.f32.mrf.mxu0
    %v4111 = vpop.f32.mrf.mxu0
    %v4112 = vadd.f32 0.0, %v4111
    %v4113 = vpop.f32.mrf.mxu0
    %v4114 = vpop.f32.mrf.mxu0
    %4115 = vdwg.mxu0
    %v4116 = vmul.f32 %v4026, 0.9742842
    %v4117 = vmul.f32 %v4112, 0.08018079
    %v4118 = vadd.f32 %v4116, %v4117
    %v4119 = vmax.f32 %v4118, -1.0
    %v4120 = vmin.f32 %v4119, 1.0
    %v4121 = vsub.f32 %v4026, %v4120
    %v4122 = vmul.f32 %v4121, 12.31041
    %v4123 = vmul.f32 %v4122, -0.16245182
    %v4124 = vadd.f32 %v3916, %v4123
    %v4125 = vmul.f32 %v3918, 0.0009999811
    %v4126 = vadd.f32 %v4124, %v4125
    %4127 = vst [vmem:[%s5 + $0x10] sm:$0xff] %v4126
    // Predicated region
    $region34: #{span_by_span_composer.1} parent=1 // pred_check
      _
    $region35: #{span_by_span_composer.1} parent=1 // pred_check_branch
      %4129 = sbr.rel (0) target = $region37
    $region36: #{span_by_span_composer.1} parent=1 // pred_region
      _
    $region37: #{span_by_span_composer.1} parent=1 // pred_fallthru
      _
    // Predicated region
    $region38: #{span_by_span_composer.1} parent=1 // pred_check
      _
    $region39: #{span_by_span_composer.1} parent=1 // pred_check_branch
      %4131 = sbr.rel (0) target = $region41
    $region40: #{span_by_span_composer.1} parent=1 // pred_region
      _
    $region41: #{span_by_span_composer.1} parent=1 // pred_fallthru
      _
    %4132 = vsyncpa [#allocation3], 1
    %4133 = vsyncpa [#allocation5], 1

</llo_original>
